<compile_context>
chip_gen: v7x
topology: tpu7x:2x2x1
jax: 0.10.0
libtpu: 0.0.40
codegen_flags: <defaults>
</compile_context>

<pallas_src>
import functools

import jax
import jax.numpy as jnp
from jax.experimental import pallas as pl
from jax.experimental.pallas import tpu as pltpu

LANE = 128      # TPU lane width
SUBLANE = 8


def _round_up(x, m):
    return (x + m - 1) // m * m


# ---------------------------------------------------------------------------
# Kernel 1: conv as a single im2col-in-VMEM matmul + per-channel sum / sum-sq
# (the sums feed the training-mode BatchNorm batch statistics).
# ---------------------------------------------------------------------------
def _conv_stats_kernel(a_ref, halo_ref, mask_ref, w_ref,
                       y_ref, psum_ref, psq_ref,
                       xwin_ref, col_ref, *, k, wp):
    i = pl.program_id(1)
    tile_m = a_ref.shape[0]
    c1p = a_ref.shape[1]
    halo_pad = halo_ref.shape[0]

    @pl.when(i == 0)
    def _init():
        psum_ref[...] = jnp.zeros_like(psum_ref)
        psq_ref[...] = jnp.zeros_like(psq_ref)

    # Stage current tile + halo rows of the flattened NHWC input in f32
    # (32-bit sublane layout keeps the unaligned tap slices below cheap/safe).
    xwin_ref[0:tile_m, :] = a_ref[...].astype(jnp.float32)
    xwin_ref[tile_m:tile_m + halo_pad, :] = halo_ref[...].astype(jnp.float32)

    # Build the (tile_m, k*k*c1p) im2col LHS in VMEM: one lane band per tap,
    # each band a statically shifted slice of the staged window.
    for di in range(k):
        for dj in range(k):
            off = di * wp + dj                       # static row offset
            t = di * k + dj
            col_ref[:, t * c1p:(t + 1) * c1p] = xwin_ref[off:off + tile_m, :]

    # ONE MXU matmul over the fused contraction K = k*k*c1p
    # (bf16 inputs, f32 accumulation).
    y = jnp.dot(col_ref[...].astype(jnp.bfloat16), w_ref[...],
                preferred_element_type=jnp.float32)

    yb = y.astype(y_ref.dtype)                       # bf16-rounded conv output
    y_ref[...] = yb

    # BatchNorm batch statistics, computed from the bf16-rounded y (the tensor
    # kernel 2 actually normalizes).  Padded / stride-skipped rows are masked.
    y32 = yb.astype(jnp.float32)
    m = mask_ref[...]                                # (tile_m, 1) of 0.0 / 1.0
    ym = y32 * m
    psum_ref[...] += jnp.sum(ym, axis=0, keepdims=True)[None]
    psq_ref[...] += jnp.sum(ym * y32, axis=0, keepdims=True)[None]


# ---------------------------------------------------------------------------
# Kernel 2: folded BatchNorm (y*scale + shift) + SiLU, purely memory-bound.
# ---------------------------------------------------------------------------
def _bn_silu_kernel(y_ref, scale_ref, shift_ref, o_ref):
    xn = y_ref[...].astype(jnp.float32) * scale_ref[...] + shift_ref[...]
    o_ref[...] = xn * jax.nn.sigmoid(xn)             # SiLU


# ---------------------------------------------------------------------------
# Wrapper: layout prep (NHWC flatten + pads + halo gather), stats
# finalization, NCHW return.
# ---------------------------------------------------------------------------
def my_conv_forward(x, weight, gamma, beta, *, stride=1, padding=None,
                    eps=1e-5, tile_m=512):
    """x: (N, C1, H, W) f32;  weight: (C2, C1, k, k);  gamma/beta: (C2,)."""
    n, c1, h, w = x.shape
    c2, c1_w, kh, kw = weight.shape
    assert c1 == c1_w and kh == kw, "square kernel, groups=1 only"
    k = kh
    s = stride
    p = k // 2 if padding is None else padding       # autopad
    ho = (h + 2 * p - k) // s + 1
    wo = (w + 2 * p - k) // s + 1
    hp, wp = h + 2 * p, w + 2 * p

    c1p = _round_up(c1, SUBLANE)                     # per-tap contracting dim
    # Compact channel width when C2 is small (avoids 128/c2 write amp);
    # lane-dense 128-multiple when C2 is large.
    c2s = _round_up(c2, SUBLANE) if c2 < LANE else _round_up(c2, LANE)
    kk = k * k * c1p                                 # fused contraction depth

    # Halo rows needed beyond each tile; tile must cover the halo itself.
    halo = (k - 1) * wp + (k - 1)
    halo_pad = max(_round_up(halo, SUBLANE), SUBLANE)
    tile_m = _round_up(max(tile_m, halo), 16)

    # Stride-1 "full grid": one (garbage-tolerant) output row per padded input
    # position; valid rows are selected by a mask / final slice.
    m_full = n * hp * wp
    m_pad = _round_up(m_full, 2 * tile_m)            # 2 halves x whole tiles
    m_tiles = m_pad // tile_m
    half = m_tiles // 2

    # ---- flattened padded NHWC input, channels padded, bf16 ----------------
    xh = jnp.transpose(x, (0, 2, 3, 1))                              # NHWC
    xp = jnp.pad(xh, ((0, 0), (p, p), (p, p), (0, c1p - c1)))
    xf = xp.reshape(m_full, c1p).astype(jnp.bfloat16)
    xf_ext = jnp.pad(xf, ((0, m_pad + tile_m - m_full), (0, 0)))
    xf_main = xf_ext[:m_pad]                                         # each tile fetched once
    # Per-tile halo rows: halo_arr[j] = xf_ext[(j+1)*tile_m : +halo_pad]
    halo_arr = (xf_ext[tile_m:tile_m + m_pad]
                .reshape(m_tiles, tile_m, c1p)[:, :halo_pad, :]
                .reshape(m_tiles * halo_pad, c1p))

    # ---- weights: (k, k, C1, C2) -> (k*k*c1p, c2s), bf16 -------------------
    wt4 = jnp.transpose(weight, (2, 3, 1, 0))
    wt4 = jnp.pad(wt4, ((0, 0), (0, 0), (0, c1p - c1), (0, c2s - c2)))
    wmat = wt4.reshape(kk, c2s).astype(jnp.bfloat16)

    # ---- validity mask over the stride-1 full grid (also masks tile pad) ---
    mm = jnp.arange(m_pad, dtype=jnp.int32)
    col = mm % wp
    row = (mm // wp) % hp
    valid = ((mm < m_full)
             & (col % s == 0) & (col < wo * s)
             & (row % s == 0) & (row < ho * s))
    row_mask = valid.astype(jnp.float32).reshape(m_pad, 1)

    kern1 = functools.partial(_conv_stats_kernel, k=k, wp=wp)

    # ---- Pallas call 1: conv + per-half channel sums ------------------------
    y, psum, psq = pl.pallas_call(
        kern1,
        out_shape=(
            jax.ShapeDtypeStruct((m_pad, c2s), jnp.bfloat16),
            jax.ShapeDtypeStruct((2, 1, c2s), jnp.float32),
            jax.ShapeDtypeStruct((2, 1, c2s), jnp.float32),
        ),
        grid_spec=pltpu.PrefetchScalarGridSpec(
            num_scalar_prefetch=0,
            grid=(2, half),
            in_specs=[
                pl.BlockSpec((tile_m, c1p), lambda hh, i: (hh * half + i, 0)),
                pl.BlockSpec((halo_pad, c1p), lambda hh, i: (hh * half + i, 0)),
                pl.BlockSpec((tile_m, 1), lambda hh, i: (hh * half + i, 0)),
                pl.BlockSpec((kk, c2s), lambda hh, i: (0, 0)),
            ],
            out_specs=[
                pl.BlockSpec((tile_m, c2s), lambda hh, i: (hh * half + i, 0)),
                pl.BlockSpec((1, 1, c2s), lambda hh, i: (hh, 0, 0)),
                pl.BlockSpec((1, 1, c2s), lambda hh, i: (hh, 0, 0)),
            ],
            scratch_shapes=[
                pltpu.VMEM((tile_m + halo_pad, c1p), jnp.float32),  # staging window
                pltpu.VMEM((tile_m, kk), jnp.float32),              # im2col LHS
            ],
        ),
        compiler_params=pltpu.CompilerParams(
            dimension_semantics=("parallel", "arbitrary"),
            # 32 MiB is plenty for these tiles and safe on v5e/v6e/v7x; raise
            # on v5e/v6e for production widths.
            vmem_limit_bytes=32 * 1024 * 1024),
    )(xf_main, halo_arr, row_mask, wmat)

    # ---- BatchNorm2d training-mode batch statistics (biased variance) ------
    m_valid = float(n * ho * wo)
    col_sum = (psum[0, 0] + psum[1, 0]).reshape(1, c2s)
    col_sq = (psq[0, 0] + psq[1, 0]).reshape(1, c2s)
    mean = col_sum / m_valid
    var = jnp.maximum(col_sq / m_valid - mean * mean, 0.0)   # clamp cancellation

    gamma_p = jnp.pad(gamma.reshape(1, c2), ((0, 0), (0, c2s - c2)))
    beta_p = jnp.pad(beta.reshape(1, c2), ((0, 0), (0, c2s - c2)))
    scale = gamma_p * jax.lax.rsqrt(var + eps)
    shift = beta_p - mean * scale

    # ---- Pallas call 2: y*scale + shift, SiLU -------------------------------
    tile_m2 = 2 * tile_m                              # bigger block, HBM-bound pass
    if tile_m2 * c2s * 12 > 8 * 1024 * 1024:          # keep VMEM modest for wide C2
        tile_m2 = tile_m
    m_tiles2 = m_pad // tile_m2

    out_full = pl.pallas_call(
        _bn_silu_kernel,
        out_shape=jax.ShapeDtypeStruct((m_pad, c2s), jnp.float32),
        grid_spec=pltpu.PrefetchScalarGridSpec(
            num_scalar_prefetch=0,
            grid=(m_tiles2,),
            in_specs=[
                pl.BlockSpec((tile_m2, c2s), lambda i: (i, 0)),
                pl.BlockSpec((1, c2s), lambda i: (0, 0)),
                pl.BlockSpec((1, c2s), lambda i: (0, 0)),
            ],
            out_specs=pl.BlockSpec((tile_m2, c2s), lambda i: (i, 0)),
        ),
        compiler_params=pltpu.CompilerParams(
            dimension_semantics=("parallel",),
            vmem_limit_bytes=32 * 1024 * 1024),
    )(y, scale, shift)

    # Drop channel padding / invalid rows, return NCHW.
    out = out_full[:m_full].reshape(n, hp, wp, c2s)
    out = out[:, 0:ho * s:s, 0:wo * s:s, :c2]
    # TODO(synk): keep NHWC end-to-end if the downstream consumer accepts it;
    # the PyTorch module boundary is NCHW, so we transpose back here.
    return jnp.transpose(out, (0, 3, 1, 2))


# ---------------------------------------------------------------------------
# Pure-JAX reference for correctness checking.
# ---------------------------------------------------------------------------
def _reference(x, weight, gamma, beta, *, stride=1, padding=None, eps=1e-5):
    k = weight.shape[-1]
    p = k // 2 if padding is None else padding
    y = jax.lax.conv_general_dilated(
        x, weight, window_strides=(stride, stride),
        padding=((p, p), (p, p)),
        dimension_numbers=("NCHW", "OIHW", "NCHW"))
    mean = jnp.mean(y, axis=(0, 2, 3), keepdims=True)
    var = jnp.mean((y - mean) ** 2, axis=(0, 2, 3), keepdims=True)
    xn = (y - mean) * jax.lax.rsqrt(var + eps)
    xn = xn * gamma.reshape(1, -1, 1, 1) + beta.reshape(1, -1, 1, 1)
    return xn * jax.nn.sigmoid(xn)


if __name__ == "__main__":
    # myConv(c1=4, c2=8, k=3, s=1) -> autopad gives p=1
    c1, c2, k = 4, 8, 3
    n, h, w = 2, 16, 16

    key = jax.random.PRNGKey(0)
    kx, kw_ = jax.random.split(key)
    x = jax.random.normal(kx, (n, c1, h, w), dtype=jnp.float32)
    weight = jax.random.normal(kw_, (c2, c1, k, k), dtype=jnp.float32) * 0.1
    gamma = jnp.ones((c2,), dtype=jnp.float32)   # BatchNorm2d weight init
    beta = jnp.zeros((c2,), dtype=jnp.float32)   # BatchNorm2d bias init

    out = my_conv_forward(x, weight, gamma, beta)
    out = jax.block_until_ready(out)

    ref = _reference(x, weight, gamma, beta)
    assert out.shape == ref.shape == (n, c2, h, w)
    err = float(jnp.max(jnp.abs(out - ref)))
    assert err < 6e-2, f"mismatch vs reference: max abs err {err}"  # bf16 MXU path

    print("KERNEL_OK")
</pallas_src>

<mosaic_0001>
module attributes {stable_mosaic.version = 11 : i64} {
  func.func @_conv_stats_kernel(%arg0: i32, %arg1: i32, %arg2: memref<512x8xbf16, #tpu.memory_space<vmem>>, %arg3: memref<40x8xbf16, #tpu.memory_space<vmem>>, %arg4: memref<512x1xf32, #tpu.memory_space<vmem>>, %arg5: memref<72x8xbf16, #tpu.memory_space<vmem>>, %arg6: memref<512x8xbf16, #tpu.memory_space<vmem>>, %arg7: memref<1x1x8xf32, #tpu.memory_space<vmem>>, %arg8: memref<1x1x8xf32, #tpu.memory_space<vmem>>, %arg9: memref<552x8xf32, #tpu.memory_space<vmem>>, %arg10: memref<512x72xf32, #tpu.memory_space<vmem>>) attributes {dimension_semantics = [#tpu.dimension_semantics<parallel>, #tpu.dimension_semantics<arbitrary>], iteration_bounds = array<i64: 2, 1>, scalar_prefetch = 0 : i64, scratch_operands = 2 : i64, tpu.core_type = #tpu.core_type<tc>, window_params = [{transform_indices = @transform_0, window_bounds = array<i64: 512, 8>}, {transform_indices = @transform_1, window_bounds = array<i64: 40, 8>}, {transform_indices = @transform_2, window_bounds = array<i64: 512, 1>}, {pipeline_mode = #tpu.pipeline_mode<synchronous>, transform_indices = @transform_3, window_bounds = array<i64: 72, 8>}, {transform_indices = @transform_4, window_bounds = array<i64: 512, 8>}, {transform_indices = @transform_5, window_bounds = array<i64: 1, 1, 8>}, {transform_indices = @transform_6, window_bounds = array<i64: 1, 1, 8>}]} {
    %c0_i32 = arith.constant 0 : i32
    %0 = arith.cmpi eq, %arg1, %c0_i32 : i32
    %1 = arith.extui %0 : i1 to i32
    %c0_i32_0 = arith.constant 0 : i32
    %2 = arith.cmpi ne, %1, %c0_i32_0 : i32
    scf.if %2 {
      %cst_49 = arith.constant 0.000000e+00 : f32
      %50 = vector.broadcast %cst_49 : f32 to vector<1x1x8xf32>
      %c0_50 = arith.constant 0 : index
      %c0_51 = arith.constant 0 : index
      %c0_52 = arith.constant 0 : index
      %51 = vector.load %arg7[%c0_50, %c0_51, %c0_52] : memref<1x1x8xf32, #tpu.memory_space<vmem>>, vector<1x1x8xf32>
      tpu.vector_store %arg7[%c0_50, %c0_51, %c0_52], %50 {strides = array<i32>} : memref<1x1x8xf32, #tpu.memory_space<vmem>>, vector<1x1x8xf32>,
      %cst_53 = arith.constant 0.000000e+00 : f32
      %52 = vector.broadcast %cst_53 : f32 to vector<1x1x8xf32>
      %c0_54 = arith.constant 0 : index
      %c0_55 = arith.constant 0 : index
      %c0_56 = arith.constant 0 : index
      %53 = vector.load %arg8[%c0_54, %c0_55, %c0_56] : memref<1x1x8xf32, #tpu.memory_space<vmem>>, vector<1x1x8xf32>
      tpu.vector_store %arg8[%c0_54, %c0_55, %c0_56], %52 {strides = array<i32>} : memref<1x1x8xf32, #tpu.memory_space<vmem>>, vector<1x1x8xf32>,
    } else {
    }
    %c0 = arith.constant 0 : index
    %c0_1 = arith.constant 0 : index
    %3 = vector.load %arg2[%c0, %c0_1] : memref<512x8xbf16, #tpu.memory_space<vmem>>, vector<512x8xbf16>
    %4 = arith.extf %3 : vector<512x8xbf16> to vector<512x8xf32>
    %c0_2 = arith.constant 0 : index
    %c0_3 = arith.constant 0 : index
    %5 = vector.load %arg9[%c0_2, %c0_3] : memref<552x8xf32, #tpu.memory_space<vmem>>, vector<512x8xf32>
    tpu.vector_store %arg9[%c0_2, %c0_3], %4 {strides = array<i32>} : memref<552x8xf32, #tpu.memory_space<vmem>>, vector<512x8xf32>,
    %c0_4 = arith.constant 0 : index
    %c0_5 = arith.constant 0 : index
    %6 = vector.load %arg3[%c0_4, %c0_5] : memref<40x8xbf16, #tpu.memory_space<vmem>>, vector<40x8xbf16>
    %7 = arith.extf %6 : vector<40x8xbf16> to vector<40x8xf32>
    %c512 = arith.constant 512 : index
    %c0_6 = arith.constant 0 : index
    %8 = vector.load %arg9[%c512, %c0_6] : memref<552x8xf32, #tpu.memory_space<vmem>>, vector<40x8xf32>
    tpu.vector_store %arg9[%c512, %c0_6], %7 {strides = array<i32>} : memref<552x8xf32, #tpu.memory_space<vmem>>, vector<40x8xf32>,
    %c0_7 = arith.constant 0 : index
    %c0_8 = arith.constant 0 : index
    %9 = vector.load %arg9[%c0_7, %c0_8] : memref<552x8xf32, #tpu.memory_space<vmem>>, vector<512x8xf32>
    %c0_9 = arith.constant 0 : index
    %c0_10 = arith.constant 0 : index
    %10 = vector.load %arg10[%c0_9, %c0_10] : memref<512x72xf32, #tpu.memory_space<vmem>>, vector<512x8xf32>
    tpu.vector_store %arg10[%c0_9, %c0_10], %9 {strides = array<i32>} : memref<512x72xf32, #tpu.memory_space<vmem>>, vector<512x8xf32>,
    %c1 = arith.constant 1 : index
    %c0_11 = arith.constant 0 : index
    %11 = vector.load %arg9[%c1, %c0_11] : memref<552x8xf32, #tpu.memory_space<vmem>>, vector<512x8xf32>
    %c0_12 = arith.constant 0 : index
    %c8 = arith.constant 8 : index
    %12 = vector.load %arg10[%c0_12, %c8] : memref<512x72xf32, #tpu.memory_space<vmem>>, vector<512x8xf32>
    tpu.vector_store %arg10[%c0_12, %c8], %11 {strides = array<i32>} : memref<512x72xf32, #tpu.memory_space<vmem>>, vector<512x8xf32>,
    %c2 = arith.constant 2 : index
    %c0_13 = arith.constant 0 : index
    %13 = vector.load %arg9[%c2, %c0_13] : memref<552x8xf32, #tpu.memory_space<vmem>>, vector<512x8xf32>
    %c0_14 = arith.constant 0 : index
    %c16 = arith.constant 16 : index
    %14 = vector.load %arg10[%c0_14, %c16] : memref<512x72xf32, #tpu.memory_space<vmem>>, vector<512x8xf32>
    tpu.vector_store %arg10[%c0_14, %c16], %13 {strides = array<i32>} : memref<512x72xf32, #tpu.memory_space<vmem>>, vector<512x8xf32>,
    %c18 = arith.constant 18 : index
    %c0_15 = arith.constant 0 : index
    %15 = vector.load %arg9[%c18, %c0_15] : memref<552x8xf32, #tpu.memory_space<vmem>>, vector<512x8xf32>
    %c0_16 = arith.constant 0 : index
    %c24 = arith.constant 24 : index
    %16 = vector.load %arg10[%c0_16, %c24] : memref<512x72xf32, #tpu.memory_space<vmem>>, vector<512x8xf32>
    tpu.vector_store %arg10[%c0_16, %c24], %15 {strides = array<i32>} : memref<512x72xf32, #tpu.memory_space<vmem>>, vector<512x8xf32>,
    %c19 = arith.constant 19 : index
    %c0_17 = arith.constant 0 : index
    %17 = vector.load %arg9[%c19, %c0_17] : memref<552x8xf32, #tpu.memory_space<vmem>>, vector<512x8xf32>
    %c0_18 = arith.constant 0 : index
    %c32 = arith.constant 32 : index
    %18 = vector.load %arg10[%c0_18, %c32] : memref<512x72xf32, #tpu.memory_space<vmem>>, vector<512x8xf32>
    tpu.vector_store %arg10[%c0_18, %c32], %17 {strides = array<i32>} : memref<512x72xf32, #tpu.memory_space<vmem>>, vector<512x8xf32>,
    %c20 = arith.constant 20 : index
    %c0_19 = arith.constant 0 : index
    %19 = vector.load %arg9[%c20, %c0_19] : memref<552x8xf32, #tpu.memory_space<vmem>>, vector<512x8xf32>
    %c0_20 = arith.constant 0 : index
    %c40 = arith.constant 40 : index
    %20 = vector.load %arg10[%c0_20, %c40] : memref<512x72xf32, #tpu.memory_space<vmem>>, vector<512x8xf32>
    tpu.vector_store %arg10[%c0_20, %c40], %19 {strides = array<i32>} : memref<512x72xf32, #tpu.memory_space<vmem>>, vector<512x8xf32>,
    %c36 = arith.constant 36 : index
    %c0_21 = arith.constant 0 : index
    %21 = vector.load %arg9[%c36, %c0_21] : memref<552x8xf32, #tpu.memory_space<vmem>>, vector<512x8xf32>
    %c0_22 = arith.constant 0 : index
    %c48 = arith.constant 48 : index
    %22 = vector.load %arg10[%c0_22, %c48] : memref<512x72xf32, #tpu.memory_space<vmem>>, vector<512x8xf32>
    tpu.vector_store %arg10[%c0_22, %c48], %21 {strides = array<i32>} : memref<512x72xf32, #tpu.memory_space<vmem>>, vector<512x8xf32>,
    %c37 = arith.constant 37 : index
    %c0_23 = arith.constant 0 : index
    %23 = vector.load %arg9[%c37, %c0_23] : memref<552x8xf32, #tpu.memory_space<vmem>>, vector<512x8xf32>
    %c0_24 = arith.constant 0 : index
    %c56 = arith.constant 56 : index
    %24 = vector.load %arg10[%c0_24, %c56] : memref<512x72xf32, #tpu.memory_space<vmem>>, vector<512x8xf32>
    tpu.vector_store %arg10[%c0_24, %c56], %23 {strides = array<i32>} : memref<512x72xf32, #tpu.memory_space<vmem>>, vector<512x8xf32>,
    %c38 = arith.constant 38 : index
    %c0_25 = arith.constant 0 : index
    %25 = vector.load %arg9[%c38, %c0_25] : memref<552x8xf32, #tpu.memory_space<vmem>>, vector<512x8xf32>
    %c0_26 = arith.constant 0 : index
    %c64 = arith.constant 64 : index
    %26 = vector.load %arg10[%c0_26, %c64] : memref<512x72xf32, #tpu.memory_space<vmem>>, vector<512x8xf32>
    tpu.vector_store %arg10[%c0_26, %c64], %25 {strides = array<i32>} : memref<512x72xf32, #tpu.memory_space<vmem>>, vector<512x8xf32>,
    %c0_27 = arith.constant 0 : index
    %c0_28 = arith.constant 0 : index
    %27 = vector.load %arg10[%c0_27, %c0_28] : memref<512x72xf32, #tpu.memory_space<vmem>>, vector<512x72xf32>
    %28 = arith.truncf %27 : vector<512x72xf32> to vector<512x72xbf16>
    %c0_29 = arith.constant 0 : index
    %c0_30 = arith.constant 0 : index
    %29 = vector.load %arg5[%c0_29, %c0_30] : memref<72x8xbf16, #tpu.memory_space<vmem>>, vector<72x8xbf16>
    %cst = arith.constant dense<0.000000e+00> : vector<512x8xf32>
    %30 = tpu.matmul %28, %29, %cst {dimension_numbers = #tpu.dot_dimension_numbers<[1], [0], [0], [1], [0, 0, 1, 1], [], []>} : vector<512x72xbf16>, vector<72x8xbf16>, vector<512x8xf32> -> vector<512x8xf32>
    %31 = arith.truncf %30 : vector<512x8xf32> to vector<512x8xbf16>
    %c0_31 = arith.constant 0 : index
    %c0_32 = arith.constant 0 : index
    %32 = vector.load %arg6[%c0_31, %c0_32] : memref<512x8xbf16, #tpu.memory_space<vmem>>, vector<512x8xbf16>
    tpu.vector_store %arg6[%c0_31, %c0_32], %31 {strides = array<i32>} : memref<512x8xbf16, #tpu.memory_space<vmem>>, vector<512x8xbf16>,
    %33 = arith.extf %31 : vector<512x8xbf16> to vector<512x8xf32>
    %c0_33 = arith.constant 0 : index
    %c0_34 = arith.constant 0 : index
    %34 = vector.load %arg4[%c0_33, %c0_34] : memref<512x1xf32, #tpu.memory_space<vmem>>, vector<512x1xf32>
    %35 = vector.broadcast %34 : vector<512x1xf32> to vector<512x8xf32>
    %36 = arith.mulf %33, %35 : vector<512x8xf32>
    %c0_35 = arith.constant 0 : index
    %c0_36 = arith.constant 0 : index
    %c0_37 = arith.constant 0 : index
    %37 = vector.load %arg7[%c0_35, %c0_36, %c0_37] : memref<1x1x8xf32, #tpu.memory_space<vmem>>, vector<1x1x8xf32>
    %cst_38 = arith.constant dense<0.000000e+00> : vector<8xf32>
    %38 = vector.multi_reduction <add>, %36, %cst_38 [0] : vector<512x8xf32> to vector<8xf32>
    %39 = vector.shape_cast %38 : vector<8xf32> to vector<1x8xf32>
    %40 = vector.shape_cast %39 : vector<1x8xf32> to vector<1x1x8xf32>
    %41 = arith.addf %37, %40 : vector<1x1x8xf32>
    %c0_39 = arith.constant 0 : index
    %c0_40 = arith.constant 0 : index
    %c0_41 = arith.constant 0 : index
    %42 = vector.load %arg7[%c0_39, %c0_40, %c0_41] : memref<1x1x8xf32, #tpu.memory_space<vmem>>, vector<1x1x8xf32>
    tpu.vector_store %arg7[%c0_39, %c0_40, %c0_41], %41 {strides = array<i32>} : memref<1x1x8xf32, #tpu.memory_space<vmem>>, vector<1x1x8xf32>,
    %c0_42 = arith.constant 0 : index
    %c0_43 = arith.constant 0 : index
    %c0_44 = arith.constant 0 : index
    %43 = vector.load %arg8[%c0_42, %c0_43, %c0_44] : memref<1x1x8xf32, #tpu.memory_space<vmem>>, vector<1x1x8xf32>
    %44 = arith.mulf %36, %33 : vector<512x8xf32>
    %cst_45 = arith.constant dense<0.000000e+00> : vector<8xf32>
    %45 = vector.multi_reduction <add>, %44, %cst_45 [0] : vector<512x8xf32> to vector<8xf32>
    %46 = vector.shape_cast %45 : vector<8xf32> to vector<1x8xf32>
    %47 = vector.shape_cast %46 : vector<1x8xf32> to vector<1x1x8xf32>
    %48 = arith.addf %43, %47 : vector<1x1x8xf32>
    %c0_46 = arith.constant 0 : index
    %c0_47 = arith.constant 0 : index
    %c0_48 = arith.constant 0 : index
    %49 = vector.load %arg8[%c0_46, %c0_47, %c0_48] : memref<1x1x8xf32, #tpu.memory_space<vmem>>, vector<1x1x8xf32>
    tpu.vector_store %arg8[%c0_46, %c0_47, %c0_48], %48 {strides = array<i32>} : memref<1x1x8xf32, #tpu.memory_space<vmem>>, vector<1x1x8xf32>,
    return
  }
  func.func @transform_0(%arg0: i32, %arg1: i32) -> (i32, i32) {
    %c1_i32 = arith.constant 1 : i32
    %0 = arith.muli %arg0, %c1_i32 : i32
    %1 = arith.addi %0, %arg1 : i32
    %c0_i32 = arith.constant 0 : i32
    %c0_i32_0 = arith.constant 0 : i32
    return %1, %c0_i32 : i32, i32
  }
  func.func @transform_1(%arg0: i32, %arg1: i32) -> (i32, i32) {
    %c1_i32 = arith.constant 1 : i32
    %0 = arith.muli %arg0, %c1_i32 : i32
    %1 = arith.addi %0, %arg1 : i32
    %c0_i32 = arith.constant 0 : i32
    %c0_i32_0 = arith.constant 0 : i32
    return %1, %c0_i32 : i32, i32
  }
  func.func @transform_2(%arg0: i32, %arg1: i32) -> (i32, i32) {
    %c1_i32 = arith.constant 1 : i32
    %0 = arith.muli %arg0, %c1_i32 : i32
    %1 = arith.addi %0, %arg1 : i32
    %c0_i32 = arith.constant 0 : i32
    %c0_i32_0 = arith.constant 0 : i32
    return %1, %c0_i32 : i32, i32
  }
  func.func @transform_3(%arg0: i32, %arg1: i32) -> (i32, i32) {
    %c0_i32 = arith.constant 0 : i32
    %c0_i32_0 = arith.constant 0 : i32
    %c0_i32_1 = arith.constant 0 : i32
    return %c0_i32, %c0_i32_0 : i32, i32
  }
  func.func @transform_4(%arg0: i32, %arg1: i32) -> (i32, i32) {
    %c1_i32 = arith.constant 1 : i32
    %0 = arith.muli %arg0, %c1_i32 : i32
    %1 = arith.addi %0, %arg1 : i32
    %c0_i32 = arith.constant 0 : i32
    %c0_i32_0 = arith.constant 0 : i32
    return %1, %c0_i32 : i32, i32
  }
  func.func @transform_5(%arg0: i32, %arg1: i32) -> (i32, i32, i32) {
    %c0_i32 = arith.constant 0 : i32
    %c0_i32_0 = arith.constant 0 : i32
    %c0_i32_1 = arith.constant 0 : i32
    return %arg0, %c0_i32, %c0_i32_0 : i32, i32, i32
  }
  func.func @transform_6(%arg0: i32, %arg1: i32) -> (i32, i32, i32) {
    %c0_i32 = arith.constant 0 : i32
    %c0_i32_0 = arith.constant 0 : i32
    %c0_i32_1 = arith.constant 0 : i32
    return %arg0, %c0_i32, %c0_i32_0 : i32, i32, i32
  }
}

</mosaic_0001>

<llo_original>
// kernel: tpu_custom_call.1
$region0: #{tpu_custom_call.1}
  #allocation0 [shape = 'u32[]', space=smem, size = 0x4, offset = 0x4, fixed_abs, tag = 'smem constant byte address 0x4 - core index']
  #allocation1 [shape = 'u32[144,128]{1,0:T(1,128)}', space=vmem, size = 0x12000, scoped, tag = 'internal scratch']
  #allocation2 [shape = 'f32[552,8]{1,0:T(8,128)}', space=vmem, size = 0x45000, scoped, tag = 'scratch operand']
  #allocation3 [shape = 'f32[512,72]{1,0:T(8,128)}', space=vmem, size = 0x40000, scoped, tag = 'scratch operand']
  %s0 = inlined_call_operand.vmem [shape: bf16[1024,8], index: 0, kind: input, shape index: {}]
  %s1 = inlined_call_operand.vmem [shape: bf16[80,8], index: 1, kind: input, shape index: {}]
  %s2 = inlined_call_operand.vmem [shape: f32[1024,1], index: 2, kind: input, shape index: {}]
  %s3 = inlined_call_operand.vmem [shape: bf16[72,8], index: 3, kind: input, shape index: {}]
  %s4 = inlined_call_operand.vmem [shape: bf16[1024,8], index: 4, kind: output, shape index: {0}]
  %s5 = inlined_call_operand.hbm [shape: f32[2,1,8], index: 5, kind: output, shape index: {1}]
  %s6 = inlined_call_operand.hbm [shape: f32[2,1,8], index: 6, kind: output, shape index: {2}]
  %7 = xla_tuple %s4, %s5, %s6
  %s8 = sld [smem:[#allocation0]]
  $region69: #{tpu_custom_call.1} parent=0
    _
  %s10 = ssub.s32 1, %s8
  %s11 = scalar_select 0, %s10, %s8
  $region1: #{tpu_custom_call.1} parent=0
    #allocation4 [shape = 'u8[1024]{0}', space=vmem, size = 0x400, scoped, tag = 'output window, operand 1']
    #allocation5 [shape = 's32[2]{0}', space=sflag, size = 0x8, scoped, tag = 'scoped memory for tpu_custom_call.1']
    #allocation6 [shape = 'u8[1024]{0}', space=vmem, size = 0x400, scoped, tag = 'output window, operand 2']
    #allocation7 [shape = 's32[2]{0}', space=sflag, size = 0x8, scoped, tag = 'scoped memory for tpu_custom_call.1']
    %12 = vsyncpa [#allocation5], 0
    %s13 = scalar_lea.sflag [#allocation5], 1
    %14 = vsyncpa %s13, 0
    %15 = vsyncpa [#allocation7], 0
    %s16 = scalar_lea.sflag [#allocation7], 1
    %17 = vsyncpa %s16, 0
    loop: start=0, step=1, limit=4
    $region2: #{tpu_custom_call.1} parent=1 // loop_pre_header
      _
    $region3: #{tpu_custom_call.1} parent=1 // loop_header
      %s19 = sphi 0, %s23
      %p20 = scmp.ge.s32.totalorder %s19, 4
      %s26 = sphi 0, %s38
      %s27 = sphi 0, %s34
      %s28 = sphi 0, %s26
      %s29 = sphi 0, %s27
      %s30 = sphi 0, %s28
      %s31 = sphi 0, %s29
      %s43 = sphi 0, %s45
      %s46 = sphi 0, %s43
      %s47 = sphi 0, %s46
      %s63 = sphi 0, %s47
      %s71 = sphi 0, %s73
      %s74 = sphi 0, %s71
      %s75 = sphi 0, %s74
      %s91 = sphi 0, %s75
      %s99 = sphi 0, %s101
      %s102 = sphi 0, %s99
      %s103 = sphi 0, %s102
      %s119 = sphi 0, %s103
      %s123 = sphi 0, %s123
      %s125 = sphi 0, %s123
      %s126 = sphi 0, %s125
      %s140 = sphi 0, %s126
      %s148 = sphi 0, %s150
      %s151 = sphi 0, %s148
      %s152 = sphi 0, %s151
      %s168 = sphi 0, %s152
      %s174 = sphi 0, %s176
      %s177 = sphi 0, %s174
      %s178 = sphi 0, %s177
      %s194 = sphi 0, %s178
      %s200 = sphi 0, %s202
      %s203 = sphi 0, %s200
      %s204 = sphi 0, %s203
      %s220 = sphi 0, %s204
    $region4: #{tpu_custom_call.1} parent=1 // loop_header_branch
      %22 = sbr.rel (%p20) target = $region8
    $region5: #{tpu_custom_call.1} parent=1 // loop_body
      %s24 = ssub.s32 %s19, 1
      %s25 = ssub.s32 %s19, 2
      %s32 = sadd.s32 1, %s27
      %p33 = scmp.ge.s32.totalorder %s32, 1
      %s34 = scalar_select %p33, 0, %s32
      %s35 = sadd.s32 1, %s26
      %s36 = scalar_select %p33, %s35, %s26
      %p37 = scmp.ge.s32.totalorder %s36, 2
      %s38 = scalar_select %p37, 0, %s36
      %s39 = sadd.s32 %s26, %s27
      %s40 = sadd.s32 %s38, %s34
      %s41 = ssub.s32 %s39, %s40
      %p42 = scmp.eq.s32.totalorder %s41, 0
      %s44 = sadd.s32 %s43, 1
      %s45 = scalar_select %p42, %s43, %s44
      %p48 = pneg %p42
      %p49 = scmp.eq.s32.totalorder %s19, 1
      %p50 = por %p48, %p49
      %p51 = scmp.ne.s32.totalorder %s43, %s46
      %p52 = scmp.eq.s32.totalorder %s19, 0
      %p53 = por %p51, %p52
      %p54 = scmp.ne.s32.totalorder %s43, %s46
      %p55 = scmp.eq.s32.totalorder %s24, 1
      %p56 = por %p54, %p55
      %p57 = scmp.ne.s32.totalorder %s46, %s47
      %p58 = scmp.eq.s32.totalorder %s24, 0
      %p59 = por %p57, %p58
      %p60 = scmp.ne.s32.totalorder %s46, %s47
      %p61 = scmp.eq.s32.totalorder %s25, 1
      %p62 = por %p60, %p61
      %p64 = scmp.ne.s32.totalorder %s47, %s63
      %p65 = scmp.eq.s32.totalorder %s25, 0
      %p66 = por %p64, %p65
      %s67 = sadd.s32 %s26, %s27
      %s68 = sadd.s32 %s38, %s34
      %s69 = ssub.s32 %s67, %s68
      %p70 = scmp.eq.s32.totalorder %s69, 0
      %s72 = sadd.s32 %s71, 1
      %s73 = scalar_select %p70, %s71, %s72
      %p76 = pneg %p70
      %p77 = scmp.eq.s32.totalorder %s19, 1
      %p78 = por %p76, %p77
      %p79 = scmp.ne.s32.totalorder %s71, %s74
      %p80 = scmp.eq.s32.totalorder %s19, 0
      %p81 = por %p79, %p80
      %p82 = scmp.ne.s32.totalorder %s71, %s74
      %p83 = scmp.eq.s32.totalorder %s24, 1
      %p84 = por %p82, %p83
      %p85 = scmp.ne.s32.totalorder %s74, %s75
      %p86 = scmp.eq.s32.totalorder %s24, 0
      %p87 = por %p85, %p86
      %p88 = scmp.ne.s32.totalorder %s74, %s75
      %p89 = scmp.eq.s32.totalorder %s25, 1
      %p90 = por %p88, %p89
      %p92 = scmp.ne.s32.totalorder %s75, %s91
      %p93 = scmp.eq.s32.totalorder %s25, 0
      %p94 = por %p92, %p93
      %s95 = sadd.s32 %s26, %s27
      %s96 = sadd.s32 %s38, %s34
      %s97 = ssub.s32 %s95, %s96
      %p98 = scmp.eq.s32.totalorder %s97, 0
      %s100 = sadd.s32 %s99, 1
      %s101 = scalar_select %p98, %s99, %s100
      %p104 = pneg %p98
      %p105 = scmp.eq.s32.totalorder %s19, 1
      %p106 = por %p104, %p105
      %p107 = scmp.ne.s32.totalorder %s99, %s102
      %p108 = scmp.eq.s32.totalorder %s19, 0
      %p109 = por %p107, %p108
      %p110 = scmp.ne.s32.totalorder %s99, %s102
      %p111 = scmp.eq.s32.totalorder %s24, 1
      %p112 = por %p110, %p111
      %p113 = scmp.ne.s32.totalorder %s102, %s103
      %p114 = scmp.eq.s32.totalorder %s24, 0
      %p115 = por %p113, %p114
      %p116 = scmp.ne.s32.totalorder %s102, %s103
      %p117 = scmp.eq.s32.totalorder %s25, 1
      %p118 = por %p116, %p117
      %p120 = scmp.ne.s32.totalorder %s103, %s119
      %p121 = scmp.eq.s32.totalorder %s25, 0
      %p122 = por %p120, %p121
      %s124 = sadd.s32 %s123, 1
      %p127 = scmp.eq.s32.totalorder %s19, 1
      %p128 = scmp.ne.s32.totalorder %s123, %s125
      %p129 = scmp.eq.s32.totalorder %s19, 0
      %p130 = por %p128, %p129
      %p131 = scmp.ne.s32.totalorder %s123, %s125
      %p132 = scmp.eq.s32.totalorder %s24, 1
      %p133 = por %p131, %p132
      %p134 = scmp.ne.s32.totalorder %s125, %s126
      %p135 = scmp.eq.s32.totalorder %s24, 0
      %p136 = por %p134, %p135
      %p137 = scmp.ne.s32.totalorder %s125, %s126
      %p138 = scmp.eq.s32.totalorder %s25, 1
      %p139 = por %p137, %p138
      %p141 = scmp.ne.s32.totalorder %s126, %s140
      %p142 = scmp.eq.s32.totalorder %s25, 0
      %p143 = por %p141, %p142
      %s144 = sadd.s32 %s26, %s27
      %s145 = sadd.s32 %s38, %s34
      %s146 = ssub.s32 %s144, %s145
      %p147 = scmp.eq.s32.totalorder %s146, 0
      %s149 = sadd.s32 %s148, 1
      %s150 = scalar_select %p147, %s148, %s149
      %p153 = pneg %p147
      %p154 = scmp.eq.s32.totalorder %s19, 1
      %p155 = por %p153, %p154
      %p156 = scmp.ne.s32.totalorder %s148, %s151
      %p157 = scmp.eq.s32.totalorder %s19, 0
      %p158 = por %p156, %p157
      %p159 = scmp.ne.s32.totalorder %s148, %s151
      %p160 = scmp.eq.s32.totalorder %s24, 1
      %p161 = por %p159, %p160
      %p162 = scmp.ne.s32.totalorder %s151, %s152
      %p163 = scmp.eq.s32.totalorder %s24, 0
      %p164 = por %p162, %p163
      %p165 = scmp.ne.s32.totalorder %s151, %s152
      %p166 = scmp.eq.s32.totalorder %s25, 1
      %p167 = por %p165, %p166
      %p169 = scmp.ne.s32.totalorder %s152, %s168
      %p170 = scmp.eq.s32.totalorder %s25, 0
      %p171 = por %p169, %p170
      %s172 = ssub.s32 %s26, %s38
      %p173 = scmp.eq.s32.totalorder %s172, 0
      %s175 = sadd.s32 %s174, 1
      %s176 = scalar_select %p173, %s174, %s175
      %p179 = pneg %p173
      %p180 = scmp.eq.s32.totalorder %s19, 1
      %p181 = por %p179, %p180
      %p182 = scmp.ne.s32.totalorder %s174, %s177
      %p183 = scmp.eq.s32.totalorder %s19, 0
      %p184 = por %p182, %p183
      %p185 = scmp.ne.s32.totalorder %s174, %s177
      %p186 = scmp.eq.s32.totalorder %s24, 1
      %p187 = por %p185, %p186
      %p188 = scmp.ne.s32.totalorder %s177, %s178
      %p189 = scmp.eq.s32.totalorder %s24, 0
      %p190 = por %p188, %p189
      %p191 = scmp.ne.s32.totalorder %s177, %s178
      %p192 = scmp.eq.s32.totalorder %s25, 1
      %p193 = por %p191, %p192
      %p195 = scmp.ne.s32.totalorder %s178, %s194
      %p196 = scmp.eq.s32.totalorder %s25, 0
      %p197 = por %p195, %p196
      %s198 = ssub.s32 %s26, %s38
      %p199 = scmp.eq.s32.totalorder %s198, 0
      %s201 = sadd.s32 %s200, 1
      %s202 = scalar_select %p199, %s200, %s201
      %p205 = pneg %p199
      %p206 = scmp.eq.s32.totalorder %s19, 1
      %p207 = por %p205, %p206
      %p208 = scmp.ne.s32.totalorder %s200, %s203
      %p209 = scmp.eq.s32.totalorder %s19, 0
      %p210 = por %p208, %p209
      %p211 = scmp.ne.s32.totalorder %s200, %s203
      %p212 = scmp.eq.s32.totalorder %s24, 1
      %p213 = por %p211, %p212
      %p214 = scmp.ne.s32.totalorder %s203, %s204
      %p215 = scmp.eq.s32.totalorder %s24, 0
      %p216 = por %p214, %p215
      %p217 = scmp.ne.s32.totalorder %s203, %s204
      %p218 = scmp.eq.s32.totalorder %s25, 1
      %p219 = por %p217, %p218
      %p221 = scmp.ne.s32.totalorder %s204, %s220
      %p222 = scmp.eq.s32.totalorder %s25, 0
      %p223 = por %p221, %p222
      %p224 = scmp.le.s32.totalorder 1, %s19
      %p225 = scmp.lt.s32.totalorder %s19, 3
      %p226 = pnand %p224, %p225
      %p227 = pneg %p226
      // Predicated region
      $region9: #{tpu_custom_call.1} parent=5 // pred_check
        _
      $region10: #{tpu_custom_call.1} parent=5 // pred_check_branch
        %229 = sbr.rel (%p226) target = $region12
      $region11: #{tpu_custom_call.1} parent=5 // pred_region
        %s230 = ssub.s32 %s19, 1
        // Predicated region
        $region13: #{tpu_custom_call.1} parent=11 // pred_check
          %p231 = pneg %p136
        $region14: #{tpu_custom_call.1} parent=11 // pred_check_branch
          %233 = sbr.rel (%p231) target = $region16
        $region15: #{tpu_custom_call.1} parent=11 // pred_region
          _
        $region16: #{tpu_custom_call.1} parent=11 // pred_fallthru
          _
      $region12: #{tpu_custom_call.1} parent=5 // pred_fallthru
        _
      %p234 = scmp.lt.s32.totalorder %s19, 2
      // Predicated region
      $region17: #{tpu_custom_call.1} parent=5 // pred_check
        %p235 = pneg %p234
      $region18: #{tpu_custom_call.1} parent=5 // pred_check_branch
        %237 = sbr.rel (%p235) target = $region20
      $region19: #{tpu_custom_call.1} parent=5 // pred_region
        // Predicated region
        $region21: #{tpu_custom_call.1} parent=19 // pred_check
          %p238 = pneg %p53
        $region22: #{tpu_custom_call.1} parent=19 // pred_check_branch
          %240 = sbr.rel (%p238) target = $region24
        $region23: #{tpu_custom_call.1} parent=19 // pred_region
          %s241 = sadd.s32 %s26, %s27
          %s242 = smul.u32 64, %s241
          %p243 = scmp.lt.s32.totalorder %s242, 127
          %s244 = scalar_select %p243, %s242, 127
          %s245 = smul.addr %s244, 4
          %s246 = scalar_lea.vmem %s0, %s245
          %s247 = sadd.s32 %s26, %s27
          %s248 = smul.u32 64, %s247
        $region24: #{tpu_custom_call.1} parent=19 // pred_fallthru
          _
        // Predicated region
        $region25: #{tpu_custom_call.1} parent=19 // pred_check
          %p249 = pneg %p81
        $region26: #{tpu_custom_call.1} parent=19 // pred_check_branch
          %251 = sbr.rel (%p249) target = $region28
        $region27: #{tpu_custom_call.1} parent=19 // pred_region
          %s252 = sadd.s32 %s26, %s27
          %s253 = smul.u32 5, %s252
          %p254 = scmp.lt.s32.totalorder %s253, 9
          %s255 = scalar_select %p254, %s253, 9
          %s256 = smul.addr %s255, 4
          %s257 = scalar_lea.vmem %s1, %s256
          %s258 = sadd.s32 %s26, %s27
          %s259 = smul.u32 5, %s258
        $region28: #{tpu_custom_call.1} parent=19 // pred_fallthru
          _
        // Predicated region
        $region29: #{tpu_custom_call.1} parent=19 // pred_check
          %p260 = pneg %p109
        $region30: #{tpu_custom_call.1} parent=19 // pred_check_branch
          %262 = sbr.rel (%p260) target = $region32
        $region31: #{tpu_custom_call.1} parent=19 // pred_region
          %s263 = sadd.s32 %s26, %s27
          %s264 = smul.u32 64, %s263
          %p265 = scmp.lt.s32.totalorder %s264, 127
          %s266 = scalar_select %p265, %s264, 127
          %s267 = smul.addr %s266, 8
          %s268 = scalar_lea.vmem %s2, %s267
          %s269 = sadd.s32 %s26, %s27
          %s270 = smul.u32 64, %s269
        $region32: #{tpu_custom_call.1} parent=19 // pred_fallthru
          _
      $region20: #{tpu_custom_call.1} parent=5 // pred_fallthru
        _
      %p271 = scmp.le.s32.totalorder 1, %s19
      %p272 = scmp.lt.s32.totalorder %s19, 3
      %p273 = pnand %p271, %p272
      %p274 = pneg %p273
      // Predicated region
      $region33: #{tpu_custom_call.1} parent=5 // pred_check
        _
      $region34: #{tpu_custom_call.1} parent=5 // pred_check_branch
        %276 = sbr.rel (%p273) target = $region36
      $region35: #{tpu_custom_call.1} parent=5 // pred_region
        %s277 = ssub.s32 %s19, 1
        %s278 = sadd.s32 %s28, %s29
        %s279 = smul.u32 64, %s278
        %p280 = scmp.lt.s32.totalorder %s279, 127
        %s281 = scalar_select %p280, %s279, 127
        %s282 = smul.addr %s281, 4
        %s283 = scalar_lea.vmem %s0, %s282
        %p284 = pneg %p59
        %p285 = pneg %p56
        %s286 = sadd.s32 %s28, %s29
        %s287 = smul.u32 5, %s286
        %p288 = scmp.lt.s32.totalorder %s287, 9
        %s289 = scalar_select %p288, %s287, 9
        %s290 = smul.addr %s289, 4
        %s291 = scalar_lea.vmem %s1, %s290
        %p292 = pneg %p87
        %p293 = pneg %p84
        %s294 = sadd.s32 %s28, %s29
        %s295 = smul.u32 64, %s294
        %p296 = scmp.lt.s32.totalorder %s295, 127
        %s297 = scalar_select %p296, %s295, 127
        %s298 = smul.addr %s297, 8
        %s299 = scalar_lea.vmem %s2, %s298
        %p300 = pneg %p115
        %p301 = pneg %p112
        %p302 = pneg %p136
        %p303 = pneg %p133
        %p304 = pneg %p164
        %p305 = pneg %p161
        %s306 = sadd.s32 %s28, %s29
        %s307 = smul.u32 64, %s306
        %p308 = scmp.lt.s32.totalorder %s307, 127
        %s309 = scalar_select %p308, %s307, 127
        %s310 = smul.addr %s309, 4
        %s311 = scalar_lea.vmem %s4, %s310
        %p312 = pneg %p190
        %p313 = pneg %p187
        %s314 = sand.u32 %s177, 1
        %s315 = scalar_lea.sflag [#allocation5], %s314
        %s316 = sand.u32 %s177, 1
        %s317 = scalar_lea.vmem [#allocation4], %s316
        %p318 = pneg %p216
        %p319 = pneg %p213
        %s320 = sand.u32 %s203, 1
        %s321 = scalar_lea.sflag [#allocation7], %s320
        %s322 = sand.u32 %s203, 1
        %s323 = scalar_lea.vmem [#allocation6], %s322
        %s324 = sadd.s32 %s28, %s29
        %s325 = smul.u32 64, %s324
        %p326 = scmp.lt.s32.totalorder %s325, 127
        %s327 = scalar_select %p326, %s325, 127
        %s328 = smul.addr %s327, 4
        %s329 = scalar_lea.vmem %s0, %s328
        %s330 = sadd.s32 %s28, %s29
        %s331 = smul.u32 64, %s330
        %s332 = sadd.s32 %s28, %s29
        %s333 = smul.u32 5, %s332
        %p334 = scmp.lt.s32.totalorder %s333, 9
        %s335 = scalar_select %p334, %s333, 9
        %s336 = smul.addr %s335, 4
        %s337 = scalar_lea.vmem %s1, %s336
        %s338 = sadd.s32 %s28, %s29
        %s339 = smul.u32 5, %s338
        %s340 = sadd.s32 %s28, %s29
        %s341 = smul.u32 64, %s340
        %p342 = scmp.lt.s32.totalorder %s341, 127
        %s343 = scalar_select %p342, %s341, 127
        %s344 = smul.addr %s343, 8
        %s345 = scalar_lea.vmem %s2, %s344
        %s346 = sadd.s32 %s28, %s29
        %s347 = smul.u32 64, %s346
        %s348 = sadd.s32 %s28, %s29
        %s349 = smul.u32 64, %s348
        %p350 = scmp.lt.s32.totalorder %s349, 127
        %s351 = scalar_select %p350, %s349, 127
        %s352 = smul.addr %s351, 4
        %s353 = scalar_lea.vmem %s4, %s352
        %s354 = sadd.s32 %s28, %s29
        %s355 = smul.u32 64, %s354
        %p357 = scmp.eq.s32.totalorder %s29, 0
        // Predicated region
        $region37: #{tpu_custom_call.1} parent=35 // pred_check
          %p358 = pneg %p357
        $region38: #{tpu_custom_call.1} parent=35 // pred_check_branch
          %360 = sbr.rel (%p358) target = $region40
        $region39: #{tpu_custom_call.1} parent=35 // pred_region
          %vm361 = vcmask 57344
          %362 = vst.msk [vmem:[%s317] sm:$0x1] %vm361, 0.0
          %363 = vst.msk [vmem:[%s323] sm:$0x1] %vm361, 0.0
        $region40: #{tpu_custom_call.1} parent=35 // pred_fallthru
          _
        %v364 = vld [vmem:[%s329] sm:$0xf]
        %v365 = vld [vmem:[%s329 + $0x4] sm:$0xf]
        %v366 = vld [vmem:[%s329 + $0x8] sm:$0xf]
        %v367 = vld [vmem:[%s329 + $0xc] sm:$0xf]
        %v368 = vld [vmem:[%s329 + $0x10] sm:$0xf]
        %v369 = vld [vmem:[%s329 + $0x14] sm:$0xf]
        %v370 = vld [vmem:[%s329 + $0x18] sm:$0xf]
        %v371 = vld [vmem:[%s329 + $0x1c] sm:$0xf]
        %v372 = vld [vmem:[%s329 + $0x20] sm:$0xf]
        %v373 = vld [vmem:[%s329 + $0x24] sm:$0xf]
        %v374 = vld [vmem:[%s329 + $0x28] sm:$0xf]
        %v375 = vld [vmem:[%s329 + $0x2c] sm:$0xf]
        %v376 = vld [vmem:[%s329 + $0x30] sm:$0xf]
        %v377 = vld [vmem:[%s329 + $0x34] sm:$0xf]
        %v378 = vld [vmem:[%s329 + $0x38] sm:$0xf]
        %v379 = vld [vmem:[%s329 + $0x3c] sm:$0xf]
        %v380 = vld [vmem:[%s329 + $0x40] sm:$0xf]
        %v381 = vld [vmem:[%s329 + $0x44] sm:$0xf]
        %v382 = vld [vmem:[%s329 + $0x48] sm:$0xf]
        %v383 = vld [vmem:[%s329 + $0x4c] sm:$0xf]
        %v384 = vld [vmem:[%s329 + $0x50] sm:$0xf]
        %v385 = vld [vmem:[%s329 + $0x54] sm:$0xf]
        %v386 = vld [vmem:[%s329 + $0x58] sm:$0xf]
        %v387 = vld [vmem:[%s329 + $0x5c] sm:$0xf]
        %v388 = vld [vmem:[%s329 + $0x60] sm:$0xf]
        %v389 = vld [vmem:[%s329 + $0x64] sm:$0xf]
        %v390 = vld [vmem:[%s329 + $0x68] sm:$0xf]
        %v391 = vld [vmem:[%s329 + $0x6c] sm:$0xf]
        %v392 = vld [vmem:[%s329 + $0x70] sm:$0xf]
        %v393 = vld [vmem:[%s329 + $0x74] sm:$0xf]
        %v394 = vld [vmem:[%s329 + $0x78] sm:$0xf]
        %v395 = vld [vmem:[%s329 + $0x7c] sm:$0xf]
        %v396 = vld [vmem:[%s329 + $0x80] sm:$0xf]
        %v397 = vld [vmem:[%s329 + $0x84] sm:$0xf]
        %v398 = vld [vmem:[%s329 + $0x88] sm:$0xf]
        %v399 = vld [vmem:[%s329 + $0x8c] sm:$0xf]
        %v400 = vld [vmem:[%s329 + $0x90] sm:$0xf]
        %v401 = vld [vmem:[%s329 + $0x94] sm:$0xf]
        %v402 = vld [vmem:[%s329 + $0x98] sm:$0xf]
        %v403 = vld [vmem:[%s329 + $0x9c] sm:$0xf]
        %v404 = vld [vmem:[%s329 + $0xa0] sm:$0xf]
        %v405 = vld [vmem:[%s329 + $0xa4] sm:$0xf]
        %v406 = vld [vmem:[%s329 + $0xa8] sm:$0xf]
        %v407 = vld [vmem:[%s329 + $0xac] sm:$0xf]
        %v408 = vld [vmem:[%s329 + $0xb0] sm:$0xf]
        %v409 = vld [vmem:[%s329 + $0xb4] sm:$0xf]
        %v410 = vld [vmem:[%s329 + $0xb8] sm:$0xf]
        %v411 = vld [vmem:[%s329 + $0xbc] sm:$0xf]
        %v412 = vld [vmem:[%s329 + $0xc0] sm:$0xf]
        %v413 = vld [vmem:[%s329 + $0xc4] sm:$0xf]
        %v414 = vld [vmem:[%s329 + $0xc8] sm:$0xf]
        %v415 = vld [vmem:[%s329 + $0xcc] sm:$0xf]
        %v416 = vld [vmem:[%s329 + $0xd0] sm:$0xf]
        %v417 = vld [vmem:[%s329 + $0xd4] sm:$0xf]
        %v418 = vld [vmem:[%s329 + $0xd8] sm:$0xf]
        %v419 = vld [vmem:[%s329 + $0xdc] sm:$0xf]
        %v420 = vld [vmem:[%s329 + $0xe0] sm:$0xf]
        %v421 = vld [vmem:[%s329 + $0xe4] sm:$0xf]
        %v422 = vld [vmem:[%s329 + $0xe8] sm:$0xf]
        %v423 = vld [vmem:[%s329 + $0xec] sm:$0xf]
        %v424 = vld [vmem:[%s329 + $0xf0] sm:$0xf]
        %v425 = vld [vmem:[%s329 + $0xf4] sm:$0xf]
        %v426 = vld [vmem:[%s329 + $0xf8] sm:$0xf]
        %v427 = vld [vmem:[%s329 + $0xfc] sm:$0xf]
        %v428 = vunpack.c.l.bf16 %v364
        %v429 = vunpack.c.l.bf16 %v365
        %v430 = vunpack.c.l.bf16 %v366
        %v431 = vunpack.c.l.bf16 %v367
        %v432 = vunpack.c.l.bf16 %v368
        %v433 = vunpack.c.l.bf16 %v369
        %v434 = vunpack.c.l.bf16 %v370
        %v435 = vunpack.c.l.bf16 %v371
        %v436 = vunpack.c.l.bf16 %v372
        %v437 = vunpack.c.l.bf16 %v373
        %v438 = vunpack.c.l.bf16 %v374
        %v439 = vunpack.c.l.bf16 %v375
        %v440 = vunpack.c.l.bf16 %v376
        %v441 = vunpack.c.l.bf16 %v377
        %v442 = vunpack.c.l.bf16 %v378
        %v443 = vunpack.c.l.bf16 %v379
        %v444 = vunpack.c.l.bf16 %v380
        %v445 = vunpack.c.l.bf16 %v381
        %v446 = vunpack.c.l.bf16 %v382
        %v447 = vunpack.c.l.bf16 %v383
        %v448 = vunpack.c.l.bf16 %v384
        %v449 = vunpack.c.l.bf16 %v385
        %v450 = vunpack.c.l.bf16 %v386
        %v451 = vunpack.c.l.bf16 %v387
        %v452 = vunpack.c.l.bf16 %v388
        %v453 = vunpack.c.l.bf16 %v389
        %v454 = vunpack.c.l.bf16 %v390
        %v455 = vunpack.c.l.bf16 %v391
        %v456 = vunpack.c.l.bf16 %v392
        %v457 = vunpack.c.l.bf16 %v393
        %v458 = vunpack.c.l.bf16 %v394
        %v459 = vunpack.c.l.bf16 %v395
        %v460 = vunpack.c.l.bf16 %v396
        %v461 = vunpack.c.l.bf16 %v397
        %v462 = vunpack.c.l.bf16 %v398
        %v463 = vunpack.c.l.bf16 %v399
        %v464 = vunpack.c.l.bf16 %v400
        %v465 = vunpack.c.l.bf16 %v401
        %v466 = vunpack.c.l.bf16 %v402
        %v467 = vunpack.c.l.bf16 %v403
        %v468 = vunpack.c.l.bf16 %v404
        %v469 = vunpack.c.l.bf16 %v405
        %v470 = vunpack.c.l.bf16 %v406
        %v471 = vunpack.c.l.bf16 %v407
        %v472 = vunpack.c.l.bf16 %v408
        %v473 = vunpack.c.l.bf16 %v409
        %v474 = vunpack.c.l.bf16 %v410
        %v475 = vunpack.c.l.bf16 %v411
        %v476 = vunpack.c.l.bf16 %v412
        %v477 = vunpack.c.l.bf16 %v413
        %v478 = vunpack.c.l.bf16 %v414
        %v479 = vunpack.c.l.bf16 %v415
        %v480 = vunpack.c.l.bf16 %v416
        %v481 = vunpack.c.l.bf16 %v417
        %v482 = vunpack.c.l.bf16 %v418
        %v483 = vunpack.c.l.bf16 %v419
        %v484 = vunpack.c.l.bf16 %v420
        %v485 = vunpack.c.l.bf16 %v421
        %v486 = vunpack.c.l.bf16 %v422
        %v487 = vunpack.c.l.bf16 %v423
        %v488 = vunpack.c.l.bf16 %v424
        %v489 = vunpack.c.l.bf16 %v425
        %v490 = vunpack.c.l.bf16 %v426
        %v491 = vunpack.c.l.bf16 %v427
        %vm492 = vcmask 64512
        %493 = vst.msk [vmem:[#allocation2] sm:$0xff] %vm492, %v428
        %494 = vst.msk [vmem:[#allocation2 + $0x8] sm:$0xff] %vm492, %v429
        %495 = vst.msk [vmem:[#allocation2 + $0x10] sm:$0xff] %vm492, %v430
        %496 = vst.msk [vmem:[#allocation2 + $0x18] sm:$0xff] %vm492, %v431
        %497 = vst.msk [vmem:[#allocation2 + $0x20] sm:$0xff] %vm492, %v432
        %498 = vst.msk [vmem:[#allocation2 + $0x28] sm:$0xff] %vm492, %v433
        %499 = vst.msk [vmem:[#allocation2 + $0x30] sm:$0xff] %vm492, %v434
        %500 = vst.msk [vmem:[#allocation2 + $0x38] sm:$0xff] %vm492, %v435
        %501 = vst.msk [vmem:[#allocation2 + $0x40] sm:$0xff] %vm492, %v436
        %502 = vst.msk [vmem:[#allocation2 + $0x48] sm:$0xff] %vm492, %v437
        %503 = vst.msk [vmem:[#allocation2 + $0x50] sm:$0xff] %vm492, %v438
        %504 = vst.msk [vmem:[#allocation2 + $0x58] sm:$0xff] %vm492, %v439
        %505 = vst.msk [vmem:[#allocation2 + $0x60] sm:$0xff] %vm492, %v440
        %506 = vst.msk [vmem:[#allocation2 + $0x68] sm:$0xff] %vm492, %v441
        %507 = vst.msk [vmem:[#allocation2 + $0x70] sm:$0xff] %vm492, %v442
        %508 = vst.msk [vmem:[#allocation2 + $0x78] sm:$0xff] %vm492, %v443
        %509 = vst.msk [vmem:[#allocation2 + $0x80] sm:$0xff] %vm492, %v444
        %510 = vst.msk [vmem:[#allocation2 + $0x88] sm:$0xff] %vm492, %v445
        %511 = vst.msk [vmem:[#allocation2 + $0x90] sm:$0xff] %vm492, %v446
        %512 = vst.msk [vmem:[#allocation2 + $0x98] sm:$0xff] %vm492, %v447
        %513 = vst.msk [vmem:[#allocation2 + $0xa0] sm:$0xff] %vm492, %v448
        %514 = vst.msk [vmem:[#allocation2 + $0xa8] sm:$0xff] %vm492, %v449
        %515 = vst.msk [vmem:[#allocation2 + $0xb0] sm:$0xff] %vm492, %v450
        %516 = vst.msk [vmem:[#allocation2 + $0xb8] sm:$0xff] %vm492, %v451
        %517 = vst.msk [vmem:[#allocation2 + $0xc0] sm:$0xff] %vm492, %v452
        %518 = vst.msk [vmem:[#allocation2 + $0xc8] sm:$0xff] %vm492, %v453
        %519 = vst.msk [vmem:[#allocation2 + $0xd0] sm:$0xff] %vm492, %v454
        %520 = vst.msk [vmem:[#allocation2 + $0xd8] sm:$0xff] %vm492, %v455
        %521 = vst.msk [vmem:[#allocation2 + $0xe0] sm:$0xff] %vm492, %v456
        %522 = vst.msk [vmem:[#allocation2 + $0xe8] sm:$0xff] %vm492, %v457
        %523 = vst.msk [vmem:[#allocation2 + $0xf0] sm:$0xff] %vm492, %v458
        %524 = vst.msk [vmem:[#allocation2 + $0xf8] sm:$0xff] %vm492, %v459
        %525 = vst.msk [vmem:[#allocation2 + $0x100] sm:$0xff] %vm492, %v460
        %526 = vst.msk [vmem:[#allocation2 + $0x108] sm:$0xff] %vm492, %v461
        %527 = vst.msk [vmem:[#allocation2 + $0x110] sm:$0xff] %vm492, %v462
        %528 = vst.msk [vmem:[#allocation2 + $0x118] sm:$0xff] %vm492, %v463
        %529 = vst.msk [vmem:[#allocation2 + $0x120] sm:$0xff] %vm492, %v464
        %530 = vst.msk [vmem:[#allocation2 + $0x128] sm:$0xff] %vm492, %v465
        %531 = vst.msk [vmem:[#allocation2 + $0x130] sm:$0xff] %vm492, %v466
        %532 = vst.msk [vmem:[#allocation2 + $0x138] sm:$0xff] %vm492, %v467
        %533 = vst.msk [vmem:[#allocation2 + $0x140] sm:$0xff] %vm492, %v468
        %534 = vst.msk [vmem:[#allocation2 + $0x148] sm:$0xff] %vm492, %v469
        %535 = vst.msk [vmem:[#allocation2 + $0x150] sm:$0xff] %vm492, %v470
        %536 = vst.msk [vmem:[#allocation2 + $0x158] sm:$0xff] %vm492, %v471
        %537 = vst.msk [vmem:[#allocation2 + $0x160] sm:$0xff] %vm492, %v472
        %538 = vst.msk [vmem:[#allocation2 + $0x168] sm:$0xff] %vm492, %v473
        %539 = vst.msk [vmem:[#allocation2 + $0x170] sm:$0xff] %vm492, %v474
        %540 = vst.msk [vmem:[#allocation2 + $0x178] sm:$0xff] %vm492, %v475
        %541 = vst.msk [vmem:[#allocation2 + $0x180] sm:$0xff] %vm492, %v476
        %542 = vst.msk [vmem:[#allocation2 + $0x188] sm:$0xff] %vm492, %v477
        %543 = vst.msk [vmem:[#allocation2 + $0x190] sm:$0xff] %vm492, %v478
        %544 = vst.msk [vmem:[#allocation2 + $0x198] sm:$0xff] %vm492, %v479
        %545 = vst.msk [vmem:[#allocation2 + $0x1a0] sm:$0xff] %vm492, %v480
        %546 = vst.msk [vmem:[#allocation2 + $0x1a8] sm:$0xff] %vm492, %v481
        %547 = vst.msk [vmem:[#allocation2 + $0x1b0] sm:$0xff] %vm492, %v482
        %548 = vst.msk [vmem:[#allocation2 + $0x1b8] sm:$0xff] %vm492, %v483
        %549 = vst.msk [vmem:[#allocation2 + $0x1c0] sm:$0xff] %vm492, %v484
        %550 = vst.msk [vmem:[#allocation2 + $0x1c8] sm:$0xff] %vm492, %v485
        %551 = vst.msk [vmem:[#allocation2 + $0x1d0] sm:$0xff] %vm492, %v486
        %552 = vst.msk [vmem:[#allocation2 + $0x1d8] sm:$0xff] %vm492, %v487
        %553 = vst.msk [vmem:[#allocation2 + $0x1e0] sm:$0xff] %vm492, %v488
        %554 = vst.msk [vmem:[#allocation2 + $0x1e8] sm:$0xff] %vm492, %v489
        %555 = vst.msk [vmem:[#allocation2 + $0x1f0] sm:$0xff] %vm492, %v490
        %556 = vst.msk [vmem:[#allocation2 + $0x1f8] sm:$0xff] %vm492, %v491
        %v557 = vld [vmem:[%s337] sm:$0xf]
        %v558 = vld [vmem:[%s337 + $0x4] sm:$0xf]
        %v559 = vld [vmem:[%s337 + $0x8] sm:$0xf]
        %v560 = vld [vmem:[%s337 + $0xc] sm:$0xf]
        %v561 = vld [vmem:[%s337 + $0x10] sm:$0xf]
        %v562 = vunpack.c.l.bf16 %v557
        %v563 = vunpack.c.l.bf16 %v558
        %v564 = vunpack.c.l.bf16 %v559
        %v565 = vunpack.c.l.bf16 %v560
        %v566 = vunpack.c.l.bf16 %v561
        %567 = vst.msk [vmem:[#allocation2 + $0x200] sm:$0xff] %vm492, %v562
        %568 = vst.msk [vmem:[#allocation2 + $0x208] sm:$0xff] %vm492, %v563
        %569 = vst.msk [vmem:[#allocation2 + $0x210] sm:$0xff] %vm492, %v564
        %570 = vst.msk [vmem:[#allocation2 + $0x218] sm:$0xff] %vm492, %v565
        %571 = vst.msk [vmem:[#allocation2 + $0x220] sm:$0xff] %vm492, %v566
        %v572 = vld [vmem:[#allocation2] sm:$0xff]
        %v573 = vld [vmem:[#allocation2 + $0x8] sm:$0xff]
        %v574 = vld [vmem:[#allocation2 + $0x10] sm:$0xff]
        %v575 = vld [vmem:[#allocation2 + $0x18] sm:$0xff]
        %v576 = vld [vmem:[#allocation2 + $0x20] sm:$0xff]
        %v577 = vld [vmem:[#allocation2 + $0x28] sm:$0xff]
        %v578 = vld [vmem:[#allocation2 + $0x30] sm:$0xff]
        %v579 = vld [vmem:[#allocation2 + $0x38] sm:$0xff]
        %v580 = vld [vmem:[#allocation2 + $0x40] sm:$0xff]
        %v581 = vld [vmem:[#allocation2 + $0x48] sm:$0xff]
        %v582 = vld [vmem:[#allocation2 + $0x50] sm:$0xff]
        %v583 = vld [vmem:[#allocation2 + $0x58] sm:$0xff]
        %v584 = vld [vmem:[#allocation2 + $0x60] sm:$0xff]
        %v585 = vld [vmem:[#allocation2 + $0x68] sm:$0xff]
        %v586 = vld [vmem:[#allocation2 + $0x70] sm:$0xff]
        %v587 = vld [vmem:[#allocation2 + $0x78] sm:$0xff]
        %v588 = vld [vmem:[#allocation2 + $0x80] sm:$0xff]
        %v589 = vld [vmem:[#allocation2 + $0x88] sm:$0xff]
        %v590 = vld [vmem:[#allocation2 + $0x90] sm:$0xff]
        %v591 = vld [vmem:[#allocation2 + $0x98] sm:$0xff]
        %v592 = vld [vmem:[#allocation2 + $0xa0] sm:$0xff]
        %v593 = vld [vmem:[#allocation2 + $0xa8] sm:$0xff]
        %v594 = vld [vmem:[#allocation2 + $0xb0] sm:$0xff]
        %v595 = vld [vmem:[#allocation2 + $0xb8] sm:$0xff]
        %v596 = vld [vmem:[#allocation2 + $0xc0] sm:$0xff]
        %v597 = vld [vmem:[#allocation2 + $0xc8] sm:$0xff]
        %v598 = vld [vmem:[#allocation2 + $0xd0] sm:$0xff]
        %v599 = vld [vmem:[#allocation2 + $0xd8] sm:$0xff]
        %v600 = vld [vmem:[#allocation2 + $0xe0] sm:$0xff]
        %v601 = vld [vmem:[#allocation2 + $0xe8] sm:$0xff]
        %v602 = vld [vmem:[#allocation2 + $0xf0] sm:$0xff]
        %v603 = vld [vmem:[#allocation2 + $0xf8] sm:$0xff]
        %v604 = vld [vmem:[#allocation2 + $0x100] sm:$0xff]
        %v605 = vld [vmem:[#allocation2 + $0x108] sm:$0xff]
        %v606 = vld [vmem:[#allocation2 + $0x110] sm:$0xff]
        %v607 = vld [vmem:[#allocation2 + $0x118] sm:$0xff]
        %v608 = vld [vmem:[#allocation2 + $0x120] sm:$0xff]
        %v609 = vld [vmem:[#allocation2 + $0x128] sm:$0xff]
        %v610 = vld [vmem:[#allocation2 + $0x130] sm:$0xff]
        %v611 = vld [vmem:[#allocation2 + $0x138] sm:$0xff]
        %v612 = vld [vmem:[#allocation2 + $0x140] sm:$0xff]
        %v613 = vld [vmem:[#allocation2 + $0x148] sm:$0xff]
        %v614 = vld [vmem:[#allocation2 + $0x150] sm:$0xff]
        %v615 = vld [vmem:[#allocation2 + $0x158] sm:$0xff]
        %v616 = vld [vmem:[#allocation2 + $0x160] sm:$0xff]
        %v617 = vld [vmem:[#allocation2 + $0x168] sm:$0xff]
        %v618 = vld [vmem:[#allocation2 + $0x170] sm:$0xff]
        %v619 = vld [vmem:[#allocation2 + $0x178] sm:$0xff]
        %v620 = vld [vmem:[#allocation2 + $0x180] sm:$0xff]
        %v621 = vld [vmem:[#allocation2 + $0x188] sm:$0xff]
        %v622 = vld [vmem:[#allocation2 + $0x190] sm:$0xff]
        %v623 = vld [vmem:[#allocation2 + $0x198] sm:$0xff]
        %v624 = vld [vmem:[#allocation2 + $0x1a0] sm:$0xff]
        %v625 = vld [vmem:[#allocation2 + $0x1a8] sm:$0xff]
        %v626 = vld [vmem:[#allocation2 + $0x1b0] sm:$0xff]
        %v627 = vld [vmem:[#allocation2 + $0x1b8] sm:$0xff]
        %v628 = vld [vmem:[#allocation2 + $0x1c0] sm:$0xff]
        %v629 = vld [vmem:[#allocation2 + $0x1c8] sm:$0xff]
        %v630 = vld [vmem:[#allocation2 + $0x1d0] sm:$0xff]
        %v631 = vld [vmem:[#allocation2 + $0x1d8] sm:$0xff]
        %v632 = vld [vmem:[#allocation2 + $0x1e0] sm:$0xff]
        %v633 = vld [vmem:[#allocation2 + $0x1e8] sm:$0xff]
        %v634 = vld [vmem:[#allocation2 + $0x1f0] sm:$0xff]
        %v635 = vld [vmem:[#allocation2 + $0x1f8] sm:$0xff]
        %636 = vst.msk [vmem:[#allocation3] sm:$0xff] %vm492, %v572
        %637 = vst.msk [vmem:[#allocation3 + $0x8] sm:$0xff] %vm492, %v573
        %638 = vst.msk [vmem:[#allocation3 + $0x10] sm:$0xff] %vm492, %v574
        %639 = vst.msk [vmem:[#allocation3 + $0x18] sm:$0xff] %vm492, %v575
        %640 = vst.msk [vmem:[#allocation3 + $0x20] sm:$0xff] %vm492, %v576
        %641 = vst.msk [vmem:[#allocation3 + $0x28] sm:$0xff] %vm492, %v577
        %642 = vst.msk [vmem:[#allocation3 + $0x30] sm:$0xff] %vm492, %v578
        %643 = vst.msk [vmem:[#allocation3 + $0x38] sm:$0xff] %vm492, %v579
        %644 = vst.msk [vmem:[#allocation3 + $0x40] sm:$0xff] %vm492, %v580
        %645 = vst.msk [vmem:[#allocation3 + $0x48] sm:$0xff] %vm492, %v581
        %646 = vst.msk [vmem:[#allocation3 + $0x50] sm:$0xff] %vm492, %v582
        %647 = vst.msk [vmem:[#allocation3 + $0x58] sm:$0xff] %vm492, %v583
        %648 = vst.msk [vmem:[#allocation3 + $0x60] sm:$0xff] %vm492, %v584
        %649 = vst.msk [vmem:[#allocation3 + $0x68] sm:$0xff] %vm492, %v585
        %650 = vst.msk [vmem:[#allocation3 + $0x70] sm:$0xff] %vm492, %v586
        %651 = vst.msk [vmem:[#allocation3 + $0x78] sm:$0xff] %vm492, %v587
        %652 = vst.msk [vmem:[#allocation3 + $0x80] sm:$0xff] %vm492, %v588
        %653 = vst.msk [vmem:[#allocation3 + $0x88] sm:$0xff] %vm492, %v589
        %654 = vst.msk [vmem:[#allocation3 + $0x90] sm:$0xff] %vm492, %v590
        %655 = vst.msk [vmem:[#allocation3 + $0x98] sm:$0xff] %vm492, %v591
        %656 = vst.msk [vmem:[#allocation3 + $0xa0] sm:$0xff] %vm492, %v592
        %657 = vst.msk [vmem:[#allocation3 + $0xa8] sm:$0xff] %vm492, %v593
        %658 = vst.msk [vmem:[#allocation3 + $0xb0] sm:$0xff] %vm492, %v594
        %659 = vst.msk [vmem:[#allocation3 + $0xb8] sm:$0xff] %vm492, %v595
        %660 = vst.msk [vmem:[#allocation3 + $0xc0] sm:$0xff] %vm492, %v596
        %661 = vst.msk [vmem:[#allocation3 + $0xc8] sm:$0xff] %vm492, %v597
        %662 = vst.msk [vmem:[#allocation3 + $0xd0] sm:$0xff] %vm492, %v598
        %663 = vst.msk [vmem:[#allocation3 + $0xd8] sm:$0xff] %vm492, %v599
        %664 = vst.msk [vmem:[#allocation3 + $0xe0] sm:$0xff] %vm492, %v600
        %665 = vst.msk [vmem:[#allocation3 + $0xe8] sm:$0xff] %vm492, %v601
        %666 = vst.msk [vmem:[#allocation3 + $0xf0] sm:$0xff] %vm492, %v602
        %667 = vst.msk [vmem:[#allocation3 + $0xf8] sm:$0xff] %vm492, %v603
        %668 = vst.msk [vmem:[#allocation3 + $0x100] sm:$0xff] %vm492, %v604
        %669 = vst.msk [vmem:[#allocation3 + $0x108] sm:$0xff] %vm492, %v605
        %670 = vst.msk [vmem:[#allocation3 + $0x110] sm:$0xff] %vm492, %v606
        %671 = vst.msk [vmem:[#allocation3 + $0x118] sm:$0xff] %vm492, %v607
        %672 = vst.msk [vmem:[#allocation3 + $0x120] sm:$0xff] %vm492, %v608
        %673 = vst.msk [vmem:[#allocation3 + $0x128] sm:$0xff] %vm492, %v609
        %674 = vst.msk [vmem:[#allocation3 + $0x130] sm:$0xff] %vm492, %v610
        %675 = vst.msk [vmem:[#allocation3 + $0x138] sm:$0xff] %vm492, %v611
        %676 = vst.msk [vmem:[#allocation3 + $0x140] sm:$0xff] %vm492, %v612
        %677 = vst.msk [vmem:[#allocation3 + $0x148] sm:$0xff] %vm492, %v613
        %678 = vst.msk [vmem:[#allocation3 + $0x150] sm:$0xff] %vm492, %v614
        %679 = vst.msk [vmem:[#allocation3 + $0x158] sm:$0xff] %vm492, %v615
        %680 = vst.msk [vmem:[#allocation3 + $0x160] sm:$0xff] %vm492, %v616
        %681 = vst.msk [vmem:[#allocation3 + $0x168] sm:$0xff] %vm492, %v617
        %682 = vst.msk [vmem:[#allocation3 + $0x170] sm:$0xff] %vm492, %v618
        %683 = vst.msk [vmem:[#allocation3 + $0x178] sm:$0xff] %vm492, %v619
        %684 = vst.msk [vmem:[#allocation3 + $0x180] sm:$0xff] %vm492, %v620
        %685 = vst.msk [vmem:[#allocation3 + $0x188] sm:$0xff] %vm492, %v621
        %686 = vst.msk [vmem:[#allocation3 + $0x190] sm:$0xff] %vm492, %v622
        %687 = vst.msk [vmem:[#allocation3 + $0x198] sm:$0xff] %vm492, %v623
        %688 = vst.msk [vmem:[#allocation3 + $0x1a0] sm:$0xff] %vm492, %v624
        %689 = vst.msk [vmem:[#allocation3 + $0x1a8] sm:$0xff] %vm492, %v625
        %690 = vst.msk [vmem:[#allocation3 + $0x1b0] sm:$0xff] %vm492, %v626
        %691 = vst.msk [vmem:[#allocation3 + $0x1b8] sm:$0xff] %vm492, %v627
        %692 = vst.msk [vmem:[#allocation3 + $0x1c0] sm:$0xff] %vm492, %v628
        %693 = vst.msk [vmem:[#allocation3 + $0x1c8] sm:$0xff] %vm492, %v629
        %694 = vst.msk [vmem:[#allocation3 + $0x1d0] sm:$0xff] %vm492, %v630
        %695 = vst.msk [vmem:[#allocation3 + $0x1d8] sm:$0xff] %vm492, %v631
        %696 = vst.msk [vmem:[#allocation3 + $0x1e0] sm:$0xff] %vm492, %v632
        %697 = vst.msk [vmem:[#allocation3 + $0x1e8] sm:$0xff] %vm492, %v633
        %698 = vst.msk [vmem:[#allocation3 + $0x1f0] sm:$0xff] %vm492, %v634
        %699 = vst.msk [vmem:[#allocation3 + $0x1f8] sm:$0xff] %vm492, %v635
        %v700 = vld [vmem:[#allocation2 + $0x1] sm:$0xff]
        %v701 = vld [vmem:[#allocation2 + $0x9] sm:$0xff]
        %v702 = vld [vmem:[#allocation2 + $0x11] sm:$0xff]
        %v703 = vld [vmem:[#allocation2 + $0x19] sm:$0xff]
        %v704 = vld [vmem:[#allocation2 + $0x21] sm:$0xff]
        %v705 = vld [vmem:[#allocation2 + $0x29] sm:$0xff]
        %v706 = vld [vmem:[#allocation2 + $0x31] sm:$0xff]
        %v707 = vld [vmem:[#allocation2 + $0x39] sm:$0xff]
        %v708 = vld [vmem:[#allocation2 + $0x41] sm:$0xff]
        %v709 = vld [vmem:[#allocation2 + $0x49] sm:$0xff]
        %v710 = vld [vmem:[#allocation2 + $0x51] sm:$0xff]
        %v711 = vld [vmem:[#allocation2 + $0x59] sm:$0xff]
        %v712 = vld [vmem:[#allocation2 + $0x61] sm:$0xff]
        %v713 = vld [vmem:[#allocation2 + $0x69] sm:$0xff]
        %v714 = vld [vmem:[#allocation2 + $0x71] sm:$0xff]
        %v715 = vld [vmem:[#allocation2 + $0x79] sm:$0xff]
        %v716 = vld [vmem:[#allocation2 + $0x81] sm:$0xff]
        %v717 = vld [vmem:[#allocation2 + $0x89] sm:$0xff]
        %v718 = vld [vmem:[#allocation2 + $0x91] sm:$0xff]
        %v719 = vld [vmem:[#allocation2 + $0x99] sm:$0xff]
        %v720 = vld [vmem:[#allocation2 + $0xa1] sm:$0xff]
        %v721 = vld [vmem:[#allocation2 + $0xa9] sm:$0xff]
        %v722 = vld [vmem:[#allocation2 + $0xb1] sm:$0xff]
        %v723 = vld [vmem:[#allocation2 + $0xb9] sm:$0xff]
        %v724 = vld [vmem:[#allocation2 + $0xc1] sm:$0xff]
        %v725 = vld [vmem:[#allocation2 + $0xc9] sm:$0xff]
        %v726 = vld [vmem:[#allocation2 + $0xd1] sm:$0xff]
        %v727 = vld [vmem:[#allocation2 + $0xd9] sm:$0xff]
        %v728 = vld [vmem:[#allocation2 + $0xe1] sm:$0xff]
        %v729 = vld [vmem:[#allocation2 + $0xe9] sm:$0xff]
        %v730 = vld [vmem:[#allocation2 + $0xf1] sm:$0xff]
        %v731 = vld [vmem:[#allocation2 + $0xf9] sm:$0xff]
        %v732 = vld [vmem:[#allocation2 + $0x101] sm:$0xff]
        %v733 = vld [vmem:[#allocation2 + $0x109] sm:$0xff]
        %v734 = vld [vmem:[#allocation2 + $0x111] sm:$0xff]
        %v735 = vld [vmem:[#allocation2 + $0x119] sm:$0xff]
        %v736 = vld [vmem:[#allocation2 + $0x121] sm:$0xff]
        %v737 = vld [vmem:[#allocation2 + $0x129] sm:$0xff]
        %v738 = vld [vmem:[#allocation2 + $0x131] sm:$0xff]
        %v739 = vld [vmem:[#allocation2 + $0x139] sm:$0xff]
        %v740 = vld [vmem:[#allocation2 + $0x141] sm:$0xff]
        %v741 = vld [vmem:[#allocation2 + $0x149] sm:$0xff]
        %v742 = vld [vmem:[#allocation2 + $0x151] sm:$0xff]
        %v743 = vld [vmem:[#allocation2 + $0x159] sm:$0xff]
        %v744 = vld [vmem:[#allocation2 + $0x161] sm:$0xff]
        %v745 = vld [vmem:[#allocation2 + $0x169] sm:$0xff]
        %v746 = vld [vmem:[#allocation2 + $0x171] sm:$0xff]
        %v747 = vld [vmem:[#allocation2 + $0x179] sm:$0xff]
        %v748 = vld [vmem:[#allocation2 + $0x181] sm:$0xff]
        %v749 = vld [vmem:[#allocation2 + $0x189] sm:$0xff]
        %v750 = vld [vmem:[#allocation2 + $0x191] sm:$0xff]
        %v751 = vld [vmem:[#allocation2 + $0x199] sm:$0xff]
        %v752 = vld [vmem:[#allocation2 + $0x1a1] sm:$0xff]
        %v753 = vld [vmem:[#allocation2 + $0x1a9] sm:$0xff]
        %v754 = vld [vmem:[#allocation2 + $0x1b1] sm:$0xff]
        %v755 = vld [vmem:[#allocation2 + $0x1b9] sm:$0xff]
        %v756 = vld [vmem:[#allocation2 + $0x1c1] sm:$0xff]
        %v757 = vld [vmem:[#allocation2 + $0x1c9] sm:$0xff]
        %v758 = vld [vmem:[#allocation2 + $0x1d1] sm:$0xff]
        %v759 = vld [vmem:[#allocation2 + $0x1d9] sm:$0xff]
        %v760 = vld [vmem:[#allocation2 + $0x1e1] sm:$0xff]
        %v761 = vld [vmem:[#allocation2 + $0x1e9] sm:$0xff]
        %v762 = vld [vmem:[#allocation2 + $0x1f1] sm:$0xff]
        %v763 = vld [vmem:[#allocation2 + $0x1f9] sm:$0xff]
        %828 = vrot.lane.b32.xlu0 %v700, 8
        %v829 = vpop.permute.xlu0 %828
        %830 = vrot.lane.b32.xlu0 %v701, 8
        %v831 = vpop.permute.xlu0 %830
        %832 = vrot.lane.b32.xlu0 %v702, 8
        %v833 = vpop.permute.xlu0 %832
        %834 = vrot.lane.b32.xlu0 %v703, 8
        %v835 = vpop.permute.xlu0 %834
        %836 = vrot.lane.b32.xlu0 %v704, 8
        %v837 = vpop.permute.xlu0 %836
        %838 = vrot.lane.b32.xlu0 %v705, 8
        %v839 = vpop.permute.xlu0 %838
        %840 = vrot.lane.b32.xlu0 %v706, 8
        %v841 = vpop.permute.xlu0 %840
        %842 = vrot.lane.b32.xlu0 %v707, 8
        %v843 = vpop.permute.xlu0 %842
        %844 = vrot.lane.b32.xlu0 %v708, 8
        %v845 = vpop.permute.xlu0 %844
        %846 = vrot.lane.b32.xlu0 %v709, 8
        %v847 = vpop.permute.xlu0 %846
        %848 = vrot.lane.b32.xlu0 %v710, 8
        %v849 = vpop.permute.xlu0 %848
        %850 = vrot.lane.b32.xlu0 %v711, 8
        %v851 = vpop.permute.xlu0 %850
        %852 = vrot.lane.b32.xlu0 %v712, 8
        %v853 = vpop.permute.xlu0 %852
        %854 = vrot.lane.b32.xlu0 %v713, 8
        %v855 = vpop.permute.xlu0 %854
        %856 = vrot.lane.b32.xlu0 %v714, 8
        %v857 = vpop.permute.xlu0 %856
        %858 = vrot.lane.b32.xlu0 %v715, 8
        %v859 = vpop.permute.xlu0 %858
        %860 = vrot.lane.b32.xlu0 %v716, 8
        %v861 = vpop.permute.xlu0 %860
        %862 = vrot.lane.b32.xlu0 %v717, 8
        %v863 = vpop.permute.xlu0 %862
        %864 = vrot.lane.b32.xlu0 %v718, 8
        %v865 = vpop.permute.xlu0 %864
        %866 = vrot.lane.b32.xlu0 %v719, 8
        %v867 = vpop.permute.xlu0 %866
        %868 = vrot.lane.b32.xlu0 %v720, 8
        %v869 = vpop.permute.xlu0 %868
        %870 = vrot.lane.b32.xlu0 %v721, 8
        %v871 = vpop.permute.xlu0 %870
        %872 = vrot.lane.b32.xlu0 %v722, 8
        %v873 = vpop.permute.xlu0 %872
        %874 = vrot.lane.b32.xlu0 %v723, 8
        %v875 = vpop.permute.xlu0 %874
        %876 = vrot.lane.b32.xlu0 %v724, 8
        %v877 = vpop.permute.xlu0 %876
        %878 = vrot.lane.b32.xlu0 %v725, 8
        %v879 = vpop.permute.xlu0 %878
        %880 = vrot.lane.b32.xlu0 %v726, 8
        %v881 = vpop.permute.xlu0 %880
        %882 = vrot.lane.b32.xlu0 %v727, 8
        %v883 = vpop.permute.xlu0 %882
        %884 = vrot.lane.b32.xlu0 %v728, 8
        %v885 = vpop.permute.xlu0 %884
        %886 = vrot.lane.b32.xlu0 %v729, 8
        %v887 = vpop.permute.xlu0 %886
        %888 = vrot.lane.b32.xlu0 %v730, 8
        %v889 = vpop.permute.xlu0 %888
        %890 = vrot.lane.b32.xlu0 %v731, 8
        %v891 = vpop.permute.xlu0 %890
        %892 = vrot.lane.b32.xlu0 %v732, 8
        %v893 = vpop.permute.xlu0 %892
        %894 = vrot.lane.b32.xlu0 %v733, 8
        %v895 = vpop.permute.xlu0 %894
        %896 = vrot.lane.b32.xlu0 %v734, 8
        %v897 = vpop.permute.xlu0 %896
        %898 = vrot.lane.b32.xlu0 %v735, 8
        %v899 = vpop.permute.xlu0 %898
        %900 = vrot.lane.b32.xlu0 %v736, 8
        %v901 = vpop.permute.xlu0 %900
        %902 = vrot.lane.b32.xlu0 %v737, 8
        %v903 = vpop.permute.xlu0 %902
        %904 = vrot.lane.b32.xlu0 %v738, 8
        %v905 = vpop.permute.xlu0 %904
        %906 = vrot.lane.b32.xlu0 %v739, 8
        %v907 = vpop.permute.xlu0 %906
        %908 = vrot.lane.b32.xlu0 %v740, 8
        %v909 = vpop.permute.xlu0 %908
        %910 = vrot.lane.b32.xlu0 %v741, 8
        %v911 = vpop.permute.xlu0 %910
        %912 = vrot.lane.b32.xlu0 %v742, 8
        %v913 = vpop.permute.xlu0 %912
        %914 = vrot.lane.b32.xlu0 %v743, 8
        %v915 = vpop.permute.xlu0 %914
        %916 = vrot.lane.b32.xlu0 %v744, 8
        %v917 = vpop.permute.xlu0 %916
        %918 = vrot.lane.b32.xlu0 %v745, 8
        %v919 = vpop.permute.xlu0 %918
        %920 = vrot.lane.b32.xlu0 %v746, 8
        %v921 = vpop.permute.xlu0 %920
        %922 = vrot.lane.b32.xlu0 %v747, 8
        %v923 = vpop.permute.xlu0 %922
        %924 = vrot.lane.b32.xlu0 %v748, 8
        %v925 = vpop.permute.xlu0 %924
        %926 = vrot.lane.b32.xlu0 %v749, 8
        %v927 = vpop.permute.xlu0 %926
        %928 = vrot.lane.b32.xlu0 %v750, 8
        %v929 = vpop.permute.xlu0 %928
        %930 = vrot.lane.b32.xlu0 %v751, 8
        %v931 = vpop.permute.xlu0 %930
        %932 = vrot.lane.b32.xlu0 %v752, 8
        %v933 = vpop.permute.xlu0 %932
        %934 = vrot.lane.b32.xlu0 %v753, 8
        %v935 = vpop.permute.xlu0 %934
        %936 = vrot.lane.b32.xlu0 %v754, 8
        %v937 = vpop.permute.xlu0 %936
        %938 = vrot.lane.b32.xlu0 %v755, 8
        %v939 = vpop.permute.xlu0 %938
        %940 = vrot.lane.b32.xlu0 %v756, 8
        %v941 = vpop.permute.xlu0 %940
        %942 = vrot.lane.b32.xlu0 %v757, 8
        %v943 = vpop.permute.xlu0 %942
        %944 = vrot.lane.b32.xlu0 %v758, 8
        %v945 = vpop.permute.xlu0 %944
        %946 = vrot.lane.b32.xlu0 %v759, 8
        %v947 = vpop.permute.xlu0 %946
        %948 = vrot.lane.b32.xlu0 %v760, 8
        %v949 = vpop.permute.xlu0 %948
        %950 = vrot.lane.b32.xlu0 %v761, 8
        %v951 = vpop.permute.xlu0 %950
        %952 = vrot.lane.b32.xlu0 %v762, 8
        %v953 = vpop.permute.xlu0 %952
        %954 = vrot.lane.b32.xlu0 %v763, 8
        %v955 = vpop.permute.xlu0 %954
        %vm1020 = vcmask 130112
        %1021 = vst.msk [vmem:[#allocation3] sm:$0xff] %vm1020, %v829
        %1022 = vst.msk [vmem:[#allocation3 + $0x8] sm:$0xff] %vm1020, %v831
        %1023 = vst.msk [vmem:[#allocation3 + $0x10] sm:$0xff] %vm1020, %v833
        %1024 = vst.msk [vmem:[#allocation3 + $0x18] sm:$0xff] %vm1020, %v835
        %1025 = vst.msk [vmem:[#allocation3 + $0x20] sm:$0xff] %vm1020, %v837
        %1026 = vst.msk [vmem:[#allocation3 + $0x28] sm:$0xff] %vm1020, %v839
        %1027 = vst.msk [vmem:[#allocation3 + $0x30] sm:$0xff] %vm1020, %v841
        %1028 = vst.msk [vmem:[#allocation3 + $0x38] sm:$0xff] %vm1020, %v843
        %1029 = vst.msk [vmem:[#allocation3 + $0x40] sm:$0xff] %vm1020, %v845
        %1030 = vst.msk [vmem:[#allocation3 + $0x48] sm:$0xff] %vm1020, %v847
        %1031 = vst.msk [vmem:[#allocation3 + $0x50] sm:$0xff] %vm1020, %v849
        %1032 = vst.msk [vmem:[#allocation3 + $0x58] sm:$0xff] %vm1020, %v851
        %1033 = vst.msk [vmem:[#allocation3 + $0x60] sm:$0xff] %vm1020, %v853
        %1034 = vst.msk [vmem:[#allocation3 + $0x68] sm:$0xff] %vm1020, %v855
        %1035 = vst.msk [vmem:[#allocation3 + $0x70] sm:$0xff] %vm1020, %v857
        %1036 = vst.msk [vmem:[#allocation3 + $0x78] sm:$0xff] %vm1020, %v859
        %1037 = vst.msk [vmem:[#allocation3 + $0x80] sm:$0xff] %vm1020, %v861
        %1038 = vst.msk [vmem:[#allocation3 + $0x88] sm:$0xff] %vm1020, %v863
        %1039 = vst.msk [vmem:[#allocation3 + $0x90] sm:$0xff] %vm1020, %v865
        %1040 = vst.msk [vmem:[#allocation3 + $0x98] sm:$0xff] %vm1020, %v867
        %1041 = vst.msk [vmem:[#allocation3 + $0xa0] sm:$0xff] %vm1020, %v869
        %1042 = vst.msk [vmem:[#allocation3 + $0xa8] sm:$0xff] %vm1020, %v871
        %1043 = vst.msk [vmem:[#allocation3 + $0xb0] sm:$0xff] %vm1020, %v873
        %1044 = vst.msk [vmem:[#allocation3 + $0xb8] sm:$0xff] %vm1020, %v875
        %1045 = vst.msk [vmem:[#allocation3 + $0xc0] sm:$0xff] %vm1020, %v877
        %1046 = vst.msk [vmem:[#allocation3 + $0xc8] sm:$0xff] %vm1020, %v879
        %1047 = vst.msk [vmem:[#allocation3 + $0xd0] sm:$0xff] %vm1020, %v881
        %1048 = vst.msk [vmem:[#allocation3 + $0xd8] sm:$0xff] %vm1020, %v883
        %1049 = vst.msk [vmem:[#allocation3 + $0xe0] sm:$0xff] %vm1020, %v885
        %1050 = vst.msk [vmem:[#allocation3 + $0xe8] sm:$0xff] %vm1020, %v887
        %1051 = vst.msk [vmem:[#allocation3 + $0xf0] sm:$0xff] %vm1020, %v889
        %1052 = vst.msk [vmem:[#allocation3 + $0xf8] sm:$0xff] %vm1020, %v891
        %1053 = vst.msk [vmem:[#allocation3 + $0x100] sm:$0xff] %vm1020, %v893
        %1054 = vst.msk [vmem:[#allocation3 + $0x108] sm:$0xff] %vm1020, %v895
        %1055 = vst.msk [vmem:[#allocation3 + $0x110] sm:$0xff] %vm1020, %v897
        %1056 = vst.msk [vmem:[#allocation3 + $0x118] sm:$0xff] %vm1020, %v899
        %1057 = vst.msk [vmem:[#allocation3 + $0x120] sm:$0xff] %vm1020, %v901
        %1058 = vst.msk [vmem:[#allocation3 + $0x128] sm:$0xff] %vm1020, %v903
        %1059 = vst.msk [vmem:[#allocation3 + $0x130] sm:$0xff] %vm1020, %v905
        %1060 = vst.msk [vmem:[#allocation3 + $0x138] sm:$0xff] %vm1020, %v907
        %1061 = vst.msk [vmem:[#allocation3 + $0x140] sm:$0xff] %vm1020, %v909
        %1062 = vst.msk [vmem:[#allocation3 + $0x148] sm:$0xff] %vm1020, %v911
        %1063 = vst.msk [vmem:[#allocation3 + $0x150] sm:$0xff] %vm1020, %v913
        %1064 = vst.msk [vmem:[#allocation3 + $0x158] sm:$0xff] %vm1020, %v915
        %1065 = vst.msk [vmem:[#allocation3 + $0x160] sm:$0xff] %vm1020, %v917
        %1066 = vst.msk [vmem:[#allocation3 + $0x168] sm:$0xff] %vm1020, %v919
        %1067 = vst.msk [vmem:[#allocation3 + $0x170] sm:$0xff] %vm1020, %v921
        %1068 = vst.msk [vmem:[#allocation3 + $0x178] sm:$0xff] %vm1020, %v923
        %1069 = vst.msk [vmem:[#allocation3 + $0x180] sm:$0xff] %vm1020, %v925
        %1070 = vst.msk [vmem:[#allocation3 + $0x188] sm:$0xff] %vm1020, %v927
        %1071 = vst.msk [vmem:[#allocation3 + $0x190] sm:$0xff] %vm1020, %v929
        %1072 = vst.msk [vmem:[#allocation3 + $0x198] sm:$0xff] %vm1020, %v931
        %1073 = vst.msk [vmem:[#allocation3 + $0x1a0] sm:$0xff] %vm1020, %v933
        %1074 = vst.msk [vmem:[#allocation3 + $0x1a8] sm:$0xff] %vm1020, %v935
        %1075 = vst.msk [vmem:[#allocation3 + $0x1b0] sm:$0xff] %vm1020, %v937
        %1076 = vst.msk [vmem:[#allocation3 + $0x1b8] sm:$0xff] %vm1020, %v939
        %1077 = vst.msk [vmem:[#allocation3 + $0x1c0] sm:$0xff] %vm1020, %v941
        %1078 = vst.msk [vmem:[#allocation3 + $0x1c8] sm:$0xff] %vm1020, %v943
        %1079 = vst.msk [vmem:[#allocation3 + $0x1d0] sm:$0xff] %vm1020, %v945
        %1080 = vst.msk [vmem:[#allocation3 + $0x1d8] sm:$0xff] %vm1020, %v947
        %1081 = vst.msk [vmem:[#allocation3 + $0x1e0] sm:$0xff] %vm1020, %v949
        %1082 = vst.msk [vmem:[#allocation3 + $0x1e8] sm:$0xff] %vm1020, %v951
        %1083 = vst.msk [vmem:[#allocation3 + $0x1f0] sm:$0xff] %vm1020, %v953
        %1084 = vst.msk [vmem:[#allocation3 + $0x1f8] sm:$0xff] %vm1020, %v955
        %v1085 = vld [vmem:[#allocation2 + $0x2] sm:$0xff]
        %v1086 = vld [vmem:[#allocation2 + $0xa] sm:$0xff]
        %v1087 = vld [vmem:[#allocation2 + $0x12] sm:$0xff]
        %v1088 = vld [vmem:[#allocation2 + $0x1a] sm:$0xff]
        %v1089 = vld [vmem:[#allocation2 + $0x22] sm:$0xff]
        %v1090 = vld [vmem:[#allocation2 + $0x2a] sm:$0xff]
        %v1091 = vld [vmem:[#allocation2 + $0x32] sm:$0xff]
        %v1092 = vld [vmem:[#allocation2 + $0x3a] sm:$0xff]
        %v1093 = vld [vmem:[#allocation2 + $0x42] sm:$0xff]
        %v1094 = vld [vmem:[#allocation2 + $0x4a] sm:$0xff]
        %v1095 = vld [vmem:[#allocation2 + $0x52] sm:$0xff]
        %v1096 = vld [vmem:[#allocation2 + $0x5a] sm:$0xff]
        %v1097 = vld [vmem:[#allocation2 + $0x62] sm:$0xff]
        %v1098 = vld [vmem:[#allocation2 + $0x6a] sm:$0xff]
        %v1099 = vld [vmem:[#allocation2 + $0x72] sm:$0xff]
        %v1100 = vld [vmem:[#allocation2 + $0x7a] sm:$0xff]
        %v1101 = vld [vmem:[#allocation2 + $0x82] sm:$0xff]
        %v1102 = vld [vmem:[#allocation2 + $0x8a] sm:$0xff]
        %v1103 = vld [vmem:[#allocation2 + $0x92] sm:$0xff]
        %v1104 = vld [vmem:[#allocation2 + $0x9a] sm:$0xff]
        %v1105 = vld [vmem:[#allocation2 + $0xa2] sm:$0xff]
        %v1106 = vld [vmem:[#allocation2 + $0xaa] sm:$0xff]
        %v1107 = vld [vmem:[#allocation2 + $0xb2] sm:$0xff]
        %v1108 = vld [vmem:[#allocation2 + $0xba] sm:$0xff]
        %v1109 = vld [vmem:[#allocation2 + $0xc2] sm:$0xff]
        %v1110 = vld [vmem:[#allocation2 + $0xca] sm:$0xff]
        %v1111 = vld [vmem:[#allocation2 + $0xd2] sm:$0xff]
        %v1112 = vld [vmem:[#allocation2 + $0xda] sm:$0xff]
        %v1113 = vld [vmem:[#allocation2 + $0xe2] sm:$0xff]
        %v1114 = vld [vmem:[#allocation2 + $0xea] sm:$0xff]
        %v1115 = vld [vmem:[#allocation2 + $0xf2] sm:$0xff]
        %v1116 = vld [vmem:[#allocation2 + $0xfa] sm:$0xff]
        %v1117 = vld [vmem:[#allocation2 + $0x102] sm:$0xff]
        %v1118 = vld [vmem:[#allocation2 + $0x10a] sm:$0xff]
        %v1119 = vld [vmem:[#allocation2 + $0x112] sm:$0xff]
        %v1120 = vld [vmem:[#allocation2 + $0x11a] sm:$0xff]
        %v1121 = vld [vmem:[#allocation2 + $0x122] sm:$0xff]
        %v1122 = vld [vmem:[#allocation2 + $0x12a] sm:$0xff]
        %v1123 = vld [vmem:[#allocation2 + $0x132] sm:$0xff]
        %v1124 = vld [vmem:[#allocation2 + $0x13a] sm:$0xff]
        %v1125 = vld [vmem:[#allocation2 + $0x142] sm:$0xff]
        %v1126 = vld [vmem:[#allocation2 + $0x14a] sm:$0xff]
        %v1127 = vld [vmem:[#allocation2 + $0x152] sm:$0xff]
        %v1128 = vld [vmem:[#allocation2 + $0x15a] sm:$0xff]
        %v1129 = vld [vmem:[#allocation2 + $0x162] sm:$0xff]
        %v1130 = vld [vmem:[#allocation2 + $0x16a] sm:$0xff]
        %v1131 = vld [vmem:[#allocation2 + $0x172] sm:$0xff]
        %v1132 = vld [vmem:[#allocation2 + $0x17a] sm:$0xff]
        %v1133 = vld [vmem:[#allocation2 + $0x182] sm:$0xff]
        %v1134 = vld [vmem:[#allocation2 + $0x18a] sm:$0xff]
        %v1135 = vld [vmem:[#allocation2 + $0x192] sm:$0xff]
        %v1136 = vld [vmem:[#allocation2 + $0x19a] sm:$0xff]
        %v1137 = vld [vmem:[#allocation2 + $0x1a2] sm:$0xff]
        %v1138 = vld [vmem:[#allocation2 + $0x1aa] sm:$0xff]
        %v1139 = vld [vmem:[#allocation2 + $0x1b2] sm:$0xff]
        %v1140 = vld [vmem:[#allocation2 + $0x1ba] sm:$0xff]
        %v1141 = vld [vmem:[#allocation2 + $0x1c2] sm:$0xff]
        %v1142 = vld [vmem:[#allocation2 + $0x1ca] sm:$0xff]
        %v1143 = vld [vmem:[#allocation2 + $0x1d2] sm:$0xff]
        %v1144 = vld [vmem:[#allocation2 + $0x1da] sm:$0xff]
        %v1145 = vld [vmem:[#allocation2 + $0x1e2] sm:$0xff]
        %v1146 = vld [vmem:[#allocation2 + $0x1ea] sm:$0xff]
        %v1147 = vld [vmem:[#allocation2 + $0x1f2] sm:$0xff]
        %v1148 = vld [vmem:[#allocation2 + $0x1fa] sm:$0xff]
        %1213 = vrot.lane.b32.xlu0 %v1085, 16
        %v1214 = vpop.permute.xlu0 %1213
        %1215 = vrot.lane.b32.xlu0 %v1086, 16
        %v1216 = vpop.permute.xlu0 %1215
        %1217 = vrot.lane.b32.xlu0 %v1087, 16
        %v1218 = vpop.permute.xlu0 %1217
        %1219 = vrot.lane.b32.xlu0 %v1088, 16
        %v1220 = vpop.permute.xlu0 %1219
        %1221 = vrot.lane.b32.xlu0 %v1089, 16
        %v1222 = vpop.permute.xlu0 %1221
        %1223 = vrot.lane.b32.xlu0 %v1090, 16
        %v1224 = vpop.permute.xlu0 %1223
        %1225 = vrot.lane.b32.xlu0 %v1091, 16
        %v1226 = vpop.permute.xlu0 %1225
        %1227 = vrot.lane.b32.xlu0 %v1092, 16
        %v1228 = vpop.permute.xlu0 %1227
        %1229 = vrot.lane.b32.xlu0 %v1093, 16
        %v1230 = vpop.permute.xlu0 %1229
        %1231 = vrot.lane.b32.xlu0 %v1094, 16
        %v1232 = vpop.permute.xlu0 %1231
        %1233 = vrot.lane.b32.xlu0 %v1095, 16
        %v1234 = vpop.permute.xlu0 %1233
        %1235 = vrot.lane.b32.xlu0 %v1096, 16
        %v1236 = vpop.permute.xlu0 %1235
        %1237 = vrot.lane.b32.xlu0 %v1097, 16
        %v1238 = vpop.permute.xlu0 %1237
        %1239 = vrot.lane.b32.xlu0 %v1098, 16
        %v1240 = vpop.permute.xlu0 %1239
        %1241 = vrot.lane.b32.xlu0 %v1099, 16
        %v1242 = vpop.permute.xlu0 %1241
        %1243 = vrot.lane.b32.xlu0 %v1100, 16
        %v1244 = vpop.permute.xlu0 %1243
        %1245 = vrot.lane.b32.xlu0 %v1101, 16
        %v1246 = vpop.permute.xlu0 %1245
        %1247 = vrot.lane.b32.xlu0 %v1102, 16
        %v1248 = vpop.permute.xlu0 %1247
        %1249 = vrot.lane.b32.xlu0 %v1103, 16
        %v1250 = vpop.permute.xlu0 %1249
        %1251 = vrot.lane.b32.xlu0 %v1104, 16
        %v1252 = vpop.permute.xlu0 %1251
        %1253 = vrot.lane.b32.xlu0 %v1105, 16
        %v1254 = vpop.permute.xlu0 %1253
        %1255 = vrot.lane.b32.xlu0 %v1106, 16
        %v1256 = vpop.permute.xlu0 %1255
        %1257 = vrot.lane.b32.xlu0 %v1107, 16
        %v1258 = vpop.permute.xlu0 %1257
        %1259 = vrot.lane.b32.xlu0 %v1108, 16
        %v1260 = vpop.permute.xlu0 %1259
        %1261 = vrot.lane.b32.xlu0 %v1109, 16
        %v1262 = vpop.permute.xlu0 %1261
        %1263 = vrot.lane.b32.xlu0 %v1110, 16
        %v1264 = vpop.permute.xlu0 %1263
        %1265 = vrot.lane.b32.xlu0 %v1111, 16
        %v1266 = vpop.permute.xlu0 %1265
        %1267 = vrot.lane.b32.xlu0 %v1112, 16
        %v1268 = vpop.permute.xlu0 %1267
        %1269 = vrot.lane.b32.xlu0 %v1113, 16
        %v1270 = vpop.permute.xlu0 %1269
        %1271 = vrot.lane.b32.xlu0 %v1114, 16
        %v1272 = vpop.permute.xlu0 %1271
        %1273 = vrot.lane.b32.xlu0 %v1115, 16
        %v1274 = vpop.permute.xlu0 %1273
        %1275 = vrot.lane.b32.xlu0 %v1116, 16
        %v1276 = vpop.permute.xlu0 %1275
        %1277 = vrot.lane.b32.xlu0 %v1117, 16
        %v1278 = vpop.permute.xlu0 %1277
        %1279 = vrot.lane.b32.xlu0 %v1118, 16
        %v1280 = vpop.permute.xlu0 %1279
        %1281 = vrot.lane.b32.xlu0 %v1119, 16
        %v1282 = vpop.permute.xlu0 %1281
        %1283 = vrot.lane.b32.xlu0 %v1120, 16
        %v1284 = vpop.permute.xlu0 %1283
        %1285 = vrot.lane.b32.xlu0 %v1121, 16
        %v1286 = vpop.permute.xlu0 %1285
        %1287 = vrot.lane.b32.xlu0 %v1122, 16
        %v1288 = vpop.permute.xlu0 %1287
        %1289 = vrot.lane.b32.xlu0 %v1123, 16
        %v1290 = vpop.permute.xlu0 %1289
        %1291 = vrot.lane.b32.xlu0 %v1124, 16
        %v1292 = vpop.permute.xlu0 %1291
        %1293 = vrot.lane.b32.xlu0 %v1125, 16
        %v1294 = vpop.permute.xlu0 %1293
        %1295 = vrot.lane.b32.xlu0 %v1126, 16
        %v1296 = vpop.permute.xlu0 %1295
        %1297 = vrot.lane.b32.xlu0 %v1127, 16
        %v1298 = vpop.permute.xlu0 %1297
        %1299 = vrot.lane.b32.xlu0 %v1128, 16
        %v1300 = vpop.permute.xlu0 %1299
        %1301 = vrot.lane.b32.xlu0 %v1129, 16
        %v1302 = vpop.permute.xlu0 %1301
        %1303 = vrot.lane.b32.xlu0 %v1130, 16
        %v1304 = vpop.permute.xlu0 %1303
        %1305 = vrot.lane.b32.xlu0 %v1131, 16
        %v1306 = vpop.permute.xlu0 %1305
        %1307 = vrot.lane.b32.xlu0 %v1132, 16
        %v1308 = vpop.permute.xlu0 %1307
        %1309 = vrot.lane.b32.xlu0 %v1133, 16
        %v1310 = vpop.permute.xlu0 %1309
        %1311 = vrot.lane.b32.xlu0 %v1134, 16
        %v1312 = vpop.permute.xlu0 %1311
        %1313 = vrot.lane.b32.xlu0 %v1135, 16
        %v1314 = vpop.permute.xlu0 %1313
        %1315 = vrot.lane.b32.xlu0 %v1136, 16
        %v1316 = vpop.permute.xlu0 %1315
        %1317 = vrot.lane.b32.xlu0 %v1137, 16
        %v1318 = vpop.permute.xlu0 %1317
        %1319 = vrot.lane.b32.xlu0 %v1138, 16
        %v1320 = vpop.permute.xlu0 %1319
        %1321 = vrot.lane.b32.xlu0 %v1139, 16
        %v1322 = vpop.permute.xlu0 %1321
        %1323 = vrot.lane.b32.xlu0 %v1140, 16
        %v1324 = vpop.permute.xlu0 %1323
        %1325 = vrot.lane.b32.xlu0 %v1141, 16
        %v1326 = vpop.permute.xlu0 %1325
        %1327 = vrot.lane.b32.xlu0 %v1142, 16
        %v1328 = vpop.permute.xlu0 %1327
        %1329 = vrot.lane.b32.xlu0 %v1143, 16
        %v1330 = vpop.permute.xlu0 %1329
        %1331 = vrot.lane.b32.xlu0 %v1144, 16
        %v1332 = vpop.permute.xlu0 %1331
        %1333 = vrot.lane.b32.xlu0 %v1145, 16
        %v1334 = vpop.permute.xlu0 %1333
        %1335 = vrot.lane.b32.xlu0 %v1146, 16
        %v1336 = vpop.permute.xlu0 %1335
        %1337 = vrot.lane.b32.xlu0 %v1147, 16
        %v1338 = vpop.permute.xlu0 %1337
        %1339 = vrot.lane.b32.xlu0 %v1148, 16
        %v1340 = vpop.permute.xlu0 %1339
        %vm1405 = vcmask 195712
        %1406 = vst.msk [vmem:[#allocation3] sm:$0xff] %vm1405, %v1214
        %1407 = vst.msk [vmem:[#allocation3 + $0x8] sm:$0xff] %vm1405, %v1216
        %1408 = vst.msk [vmem:[#allocation3 + $0x10] sm:$0xff] %vm1405, %v1218
        %1409 = vst.msk [vmem:[#allocation3 + $0x18] sm:$0xff] %vm1405, %v1220
        %1410 = vst.msk [vmem:[#allocation3 + $0x20] sm:$0xff] %vm1405, %v1222
        %1411 = vst.msk [vmem:[#allocation3 + $0x28] sm:$0xff] %vm1405, %v1224
        %1412 = vst.msk [vmem:[#allocation3 + $0x30] sm:$0xff] %vm1405, %v1226
        %1413 = vst.msk [vmem:[#allocation3 + $0x38] sm:$0xff] %vm1405, %v1228
        %1414 = vst.msk [vmem:[#allocation3 + $0x40] sm:$0xff] %vm1405, %v1230
        %1415 = vst.msk [vmem:[#allocation3 + $0x48] sm:$0xff] %vm1405, %v1232
        %1416 = vst.msk [vmem:[#allocation3 + $0x50] sm:$0xff] %vm1405, %v1234
        %1417 = vst.msk [vmem:[#allocation3 + $0x58] sm:$0xff] %vm1405, %v1236
        %1418 = vst.msk [vmem:[#allocation3 + $0x60] sm:$0xff] %vm1405, %v1238
        %1419 = vst.msk [vmem:[#allocation3 + $0x68] sm:$0xff] %vm1405, %v1240
        %1420 = vst.msk [vmem:[#allocation3 + $0x70] sm:$0xff] %vm1405, %v1242
        %1421 = vst.msk [vmem:[#allocation3 + $0x78] sm:$0xff] %vm1405, %v1244
        %1422 = vst.msk [vmem:[#allocation3 + $0x80] sm:$0xff] %vm1405, %v1246
        %1423 = vst.msk [vmem:[#allocation3 + $0x88] sm:$0xff] %vm1405, %v1248
        %1424 = vst.msk [vmem:[#allocation3 + $0x90] sm:$0xff] %vm1405, %v1250
        %1425 = vst.msk [vmem:[#allocation3 + $0x98] sm:$0xff] %vm1405, %v1252
        %1426 = vst.msk [vmem:[#allocation3 + $0xa0] sm:$0xff] %vm1405, %v1254
        %1427 = vst.msk [vmem:[#allocation3 + $0xa8] sm:$0xff] %vm1405, %v1256
        %1428 = vst.msk [vmem:[#allocation3 + $0xb0] sm:$0xff] %vm1405, %v1258
        %1429 = vst.msk [vmem:[#allocation3 + $0xb8] sm:$0xff] %vm1405, %v1260
        %1430 = vst.msk [vmem:[#allocation3 + $0xc0] sm:$0xff] %vm1405, %v1262
        %1431 = vst.msk [vmem:[#allocation3 + $0xc8] sm:$0xff] %vm1405, %v1264
        %1432 = vst.msk [vmem:[#allocation3 + $0xd0] sm:$0xff] %vm1405, %v1266
        %1433 = vst.msk [vmem:[#allocation3 + $0xd8] sm:$0xff] %vm1405, %v1268
        %1434 = vst.msk [vmem:[#allocation3 + $0xe0] sm:$0xff] %vm1405, %v1270
        %1435 = vst.msk [vmem:[#allocation3 + $0xe8] sm:$0xff] %vm1405, %v1272
        %1436 = vst.msk [vmem:[#allocation3 + $0xf0] sm:$0xff] %vm1405, %v1274
        %1437 = vst.msk [vmem:[#allocation3 + $0xf8] sm:$0xff] %vm1405, %v1276
        %1438 = vst.msk [vmem:[#allocation3 + $0x100] sm:$0xff] %vm1405, %v1278
        %1439 = vst.msk [vmem:[#allocation3 + $0x108] sm:$0xff] %vm1405, %v1280
        %1440 = vst.msk [vmem:[#allocation3 + $0x110] sm:$0xff] %vm1405, %v1282
        %1441 = vst.msk [vmem:[#allocation3 + $0x118] sm:$0xff] %vm1405, %v1284
        %1442 = vst.msk [vmem:[#allocation3 + $0x120] sm:$0xff] %vm1405, %v1286
        %1443 = vst.msk [vmem:[#allocation3 + $0x128] sm:$0xff] %vm1405, %v1288
        %1444 = vst.msk [vmem:[#allocation3 + $0x130] sm:$0xff] %vm1405, %v1290
        %1445 = vst.msk [vmem:[#allocation3 + $0x138] sm:$0xff] %vm1405, %v1292
        %1446 = vst.msk [vmem:[#allocation3 + $0x140] sm:$0xff] %vm1405, %v1294
        %1447 = vst.msk [vmem:[#allocation3 + $0x148] sm:$0xff] %vm1405, %v1296
        %1448 = vst.msk [vmem:[#allocation3 + $0x150] sm:$0xff] %vm1405, %v1298
        %1449 = vst.msk [vmem:[#allocation3 + $0x158] sm:$0xff] %vm1405, %v1300
        %1450 = vst.msk [vmem:[#allocation3 + $0x160] sm:$0xff] %vm1405, %v1302
        %1451 = vst.msk [vmem:[#allocation3 + $0x168] sm:$0xff] %vm1405, %v1304
        %1452 = vst.msk [vmem:[#allocation3 + $0x170] sm:$0xff] %vm1405, %v1306
        %1453 = vst.msk [vmem:[#allocation3 + $0x178] sm:$0xff] %vm1405, %v1308
        %1454 = vst.msk [vmem:[#allocation3 + $0x180] sm:$0xff] %vm1405, %v1310
        %1455 = vst.msk [vmem:[#allocation3 + $0x188] sm:$0xff] %vm1405, %v1312
        %1456 = vst.msk [vmem:[#allocation3 + $0x190] sm:$0xff] %vm1405, %v1314
        %1457 = vst.msk [vmem:[#allocation3 + $0x198] sm:$0xff] %vm1405, %v1316
        %1458 = vst.msk [vmem:[#allocation3 + $0x1a0] sm:$0xff] %vm1405, %v1318
        %1459 = vst.msk [vmem:[#allocation3 + $0x1a8] sm:$0xff] %vm1405, %v1320
        %1460 = vst.msk [vmem:[#allocation3 + $0x1b0] sm:$0xff] %vm1405, %v1322
        %1461 = vst.msk [vmem:[#allocation3 + $0x1b8] sm:$0xff] %vm1405, %v1324
        %1462 = vst.msk [vmem:[#allocation3 + $0x1c0] sm:$0xff] %vm1405, %v1326
        %1463 = vst.msk [vmem:[#allocation3 + $0x1c8] sm:$0xff] %vm1405, %v1328
        %1464 = vst.msk [vmem:[#allocation3 + $0x1d0] sm:$0xff] %vm1405, %v1330
        %1465 = vst.msk [vmem:[#allocation3 + $0x1d8] sm:$0xff] %vm1405, %v1332
        %1466 = vst.msk [vmem:[#allocation3 + $0x1e0] sm:$0xff] %vm1405, %v1334
        %1467 = vst.msk [vmem:[#allocation3 + $0x1e8] sm:$0xff] %vm1405, %v1336
        %1468 = vst.msk [vmem:[#allocation3 + $0x1f0] sm:$0xff] %vm1405, %v1338
        %1469 = vst.msk [vmem:[#allocation3 + $0x1f8] sm:$0xff] %vm1405, %v1340
        %v1470 = vld [vmem:[#allocation2 + $0x12] sm:$0xff]
        %v1471 = vld [vmem:[#allocation2 + $0x1a] sm:$0xff]
        %v1472 = vld [vmem:[#allocation2 + $0x22] sm:$0xff]
        %v1473 = vld [vmem:[#allocation2 + $0x2a] sm:$0xff]
        %v1474 = vld [vmem:[#allocation2 + $0x32] sm:$0xff]
        %v1475 = vld [vmem:[#allocation2 + $0x3a] sm:$0xff]
        %v1476 = vld [vmem:[#allocation2 + $0x42] sm:$0xff]
        %v1477 = vld [vmem:[#allocation2 + $0x4a] sm:$0xff]
        %v1478 = vld [vmem:[#allocation2 + $0x52] sm:$0xff]
        %v1479 = vld [vmem:[#allocation2 + $0x5a] sm:$0xff]
        %v1480 = vld [vmem:[#allocation2 + $0x62] sm:$0xff]
        %v1481 = vld [vmem:[#allocation2 + $0x6a] sm:$0xff]
        %v1482 = vld [vmem:[#allocation2 + $0x72] sm:$0xff]
        %v1483 = vld [vmem:[#allocation2 + $0x7a] sm:$0xff]
        %v1484 = vld [vmem:[#allocation2 + $0x82] sm:$0xff]
        %v1485 = vld [vmem:[#allocation2 + $0x8a] sm:$0xff]
        %v1486 = vld [vmem:[#allocation2 + $0x92] sm:$0xff]
        %v1487 = vld [vmem:[#allocation2 + $0x9a] sm:$0xff]
        %v1488 = vld [vmem:[#allocation2 + $0xa2] sm:$0xff]
        %v1489 = vld [vmem:[#allocation2 + $0xaa] sm:$0xff]
        %v1490 = vld [vmem:[#allocation2 + $0xb2] sm:$0xff]
        %v1491 = vld [vmem:[#allocation2 + $0xba] sm:$0xff]
        %v1492 = vld [vmem:[#allocation2 + $0xc2] sm:$0xff]
        %v1493 = vld [vmem:[#allocation2 + $0xca] sm:$0xff]
        %v1494 = vld [vmem:[#allocation2 + $0xd2] sm:$0xff]
        %v1495 = vld [vmem:[#allocation2 + $0xda] sm:$0xff]
        %v1496 = vld [vmem:[#allocation2 + $0xe2] sm:$0xff]
        %v1497 = vld [vmem:[#allocation2 + $0xea] sm:$0xff]
        %v1498 = vld [vmem:[#allocation2 + $0xf2] sm:$0xff]
        %v1499 = vld [vmem:[#allocation2 + $0xfa] sm:$0xff]
        %v1500 = vld [vmem:[#allocation2 + $0x102] sm:$0xff]
        %v1501 = vld [vmem:[#allocation2 + $0x10a] sm:$0xff]
        %v1502 = vld [vmem:[#allocation2 + $0x112] sm:$0xff]
        %v1503 = vld [vmem:[#allocation2 + $0x11a] sm:$0xff]
        %v1504 = vld [vmem:[#allocation2 + $0x122] sm:$0xff]
        %v1505 = vld [vmem:[#allocation2 + $0x12a] sm:$0xff]
        %v1506 = vld [vmem:[#allocation2 + $0x132] sm:$0xff]
        %v1507 = vld [vmem:[#allocation2 + $0x13a] sm:$0xff]
        %v1508 = vld [vmem:[#allocation2 + $0x142] sm:$0xff]
        %v1509 = vld [vmem:[#allocation2 + $0x14a] sm:$0xff]
        %v1510 = vld [vmem:[#allocation2 + $0x152] sm:$0xff]
        %v1511 = vld [vmem:[#allocation2 + $0x15a] sm:$0xff]
        %v1512 = vld [vmem:[#allocation2 + $0x162] sm:$0xff]
        %v1513 = vld [vmem:[#allocation2 + $0x16a] sm:$0xff]
        %v1514 = vld [vmem:[#allocation2 + $0x172] sm:$0xff]
        %v1515 = vld [vmem:[#allocation2 + $0x17a] sm:$0xff]
        %v1516 = vld [vmem:[#allocation2 + $0x182] sm:$0xff]
        %v1517 = vld [vmem:[#allocation2 + $0x18a] sm:$0xff]
        %v1518 = vld [vmem:[#allocation2 + $0x192] sm:$0xff]
        %v1519 = vld [vmem:[#allocation2 + $0x19a] sm:$0xff]
        %v1520 = vld [vmem:[#allocation2 + $0x1a2] sm:$0xff]
        %v1521 = vld [vmem:[#allocation2 + $0x1aa] sm:$0xff]
        %v1522 = vld [vmem:[#allocation2 + $0x1b2] sm:$0xff]
        %v1523 = vld [vmem:[#allocation2 + $0x1ba] sm:$0xff]
        %v1524 = vld [vmem:[#allocation2 + $0x1c2] sm:$0xff]
        %v1525 = vld [vmem:[#allocation2 + $0x1ca] sm:$0xff]
        %v1526 = vld [vmem:[#allocation2 + $0x1d2] sm:$0xff]
        %v1527 = vld [vmem:[#allocation2 + $0x1da] sm:$0xff]
        %v1528 = vld [vmem:[#allocation2 + $0x1e2] sm:$0xff]
        %v1529 = vld [vmem:[#allocation2 + $0x1ea] sm:$0xff]
        %v1530 = vld [vmem:[#allocation2 + $0x1f2] sm:$0xff]
        %v1531 = vld [vmem:[#allocation2 + $0x1fa] sm:$0xff]
        %v1532 = vld [vmem:[#allocation2 + $0x202] sm:$0xff]
        %v1533 = vld [vmem:[#allocation2 + $0x20a] sm:$0xff]
        %1598 = vrot.lane.b32.xlu0 %v1470, 24
        %v1599 = vpop.permute.xlu0 %1598
        %1600 = vrot.lane.b32.xlu0 %v1471, 24
        %v1601 = vpop.permute.xlu0 %1600
        %1602 = vrot.lane.b32.xlu0 %v1472, 24
        %v1603 = vpop.permute.xlu0 %1602
        %1604 = vrot.lane.b32.xlu0 %v1473, 24
        %v1605 = vpop.permute.xlu0 %1604
        %1606 = vrot.lane.b32.xlu0 %v1474, 24
        %v1607 = vpop.permute.xlu0 %1606
        %1608 = vrot.lane.b32.xlu0 %v1475, 24
        %v1609 = vpop.permute.xlu0 %1608
        %1610 = vrot.lane.b32.xlu0 %v1476, 24
        %v1611 = vpop.permute.xlu0 %1610
        %1612 = vrot.lane.b32.xlu0 %v1477, 24
        %v1613 = vpop.permute.xlu0 %1612
        %1614 = vrot.lane.b32.xlu0 %v1478, 24
        %v1615 = vpop.permute.xlu0 %1614
        %1616 = vrot.lane.b32.xlu0 %v1479, 24
        %v1617 = vpop.permute.xlu0 %1616
        %1618 = vrot.lane.b32.xlu0 %v1480, 24
        %v1619 = vpop.permute.xlu0 %1618
        %1620 = vrot.lane.b32.xlu0 %v1481, 24
        %v1621 = vpop.permute.xlu0 %1620
        %1622 = vrot.lane.b32.xlu0 %v1482, 24
        %v1623 = vpop.permute.xlu0 %1622
        %1624 = vrot.lane.b32.xlu0 %v1483, 24
        %v1625 = vpop.permute.xlu0 %1624
        %1626 = vrot.lane.b32.xlu0 %v1484, 24
        %v1627 = vpop.permute.xlu0 %1626
        %1628 = vrot.lane.b32.xlu0 %v1485, 24
        %v1629 = vpop.permute.xlu0 %1628
        %1630 = vrot.lane.b32.xlu0 %v1486, 24
        %v1631 = vpop.permute.xlu0 %1630
        %1632 = vrot.lane.b32.xlu0 %v1487, 24
        %v1633 = vpop.permute.xlu0 %1632
        %1634 = vrot.lane.b32.xlu0 %v1488, 24
        %v1635 = vpop.permute.xlu0 %1634
        %1636 = vrot.lane.b32.xlu0 %v1489, 24
        %v1637 = vpop.permute.xlu0 %1636
        %1638 = vrot.lane.b32.xlu0 %v1490, 24
        %v1639 = vpop.permute.xlu0 %1638
        %1640 = vrot.lane.b32.xlu0 %v1491, 24
        %v1641 = vpop.permute.xlu0 %1640
        %1642 = vrot.lane.b32.xlu0 %v1492, 24
        %v1643 = vpop.permute.xlu0 %1642
        %1644 = vrot.lane.b32.xlu0 %v1493, 24
        %v1645 = vpop.permute.xlu0 %1644
        %1646 = vrot.lane.b32.xlu0 %v1494, 24
        %v1647 = vpop.permute.xlu0 %1646
        %1648 = vrot.lane.b32.xlu0 %v1495, 24
        %v1649 = vpop.permute.xlu0 %1648
        %1650 = vrot.lane.b32.xlu0 %v1496, 24
        %v1651 = vpop.permute.xlu0 %1650
        %1652 = vrot.lane.b32.xlu0 %v1497, 24
        %v1653 = vpop.permute.xlu0 %1652
        %1654 = vrot.lane.b32.xlu0 %v1498, 24
        %v1655 = vpop.permute.xlu0 %1654
        %1656 = vrot.lane.b32.xlu0 %v1499, 24
        %v1657 = vpop.permute.xlu0 %1656
        %1658 = vrot.lane.b32.xlu0 %v1500, 24
        %v1659 = vpop.permute.xlu0 %1658
        %1660 = vrot.lane.b32.xlu0 %v1501, 24
        %v1661 = vpop.permute.xlu0 %1660
        %1662 = vrot.lane.b32.xlu0 %v1502, 24
        %v1663 = vpop.permute.xlu0 %1662
        %1664 = vrot.lane.b32.xlu0 %v1503, 24
        %v1665 = vpop.permute.xlu0 %1664
        %1666 = vrot.lane.b32.xlu0 %v1504, 24
        %v1667 = vpop.permute.xlu0 %1666
        %1668 = vrot.lane.b32.xlu0 %v1505, 24
        %v1669 = vpop.permute.xlu0 %1668
        %1670 = vrot.lane.b32.xlu0 %v1506, 24
        %v1671 = vpop.permute.xlu0 %1670
        %1672 = vrot.lane.b32.xlu0 %v1507, 24
        %v1673 = vpop.permute.xlu0 %1672
        %1674 = vrot.lane.b32.xlu0 %v1508, 24
        %v1675 = vpop.permute.xlu0 %1674
        %1676 = vrot.lane.b32.xlu0 %v1509, 24
        %v1677 = vpop.permute.xlu0 %1676
        %1678 = vrot.lane.b32.xlu0 %v1510, 24
        %v1679 = vpop.permute.xlu0 %1678
        %1680 = vrot.lane.b32.xlu0 %v1511, 24
        %v1681 = vpop.permute.xlu0 %1680
        %1682 = vrot.lane.b32.xlu0 %v1512, 24
        %v1683 = vpop.permute.xlu0 %1682
        %1684 = vrot.lane.b32.xlu0 %v1513, 24
        %v1685 = vpop.permute.xlu0 %1684
        %1686 = vrot.lane.b32.xlu0 %v1514, 24
        %v1687 = vpop.permute.xlu0 %1686
        %1688 = vrot.lane.b32.xlu0 %v1515, 24
        %v1689 = vpop.permute.xlu0 %1688
        %1690 = vrot.lane.b32.xlu0 %v1516, 24
        %v1691 = vpop.permute.xlu0 %1690
        %1692 = vrot.lane.b32.xlu0 %v1517, 24
        %v1693 = vpop.permute.xlu0 %1692
        %1694 = vrot.lane.b32.xlu0 %v1518, 24
        %v1695 = vpop.permute.xlu0 %1694
        %1696 = vrot.lane.b32.xlu0 %v1519, 24
        %v1697 = vpop.permute.xlu0 %1696
        %1698 = vrot.lane.b32.xlu0 %v1520, 24
        %v1699 = vpop.permute.xlu0 %1698
        %1700 = vrot.lane.b32.xlu0 %v1521, 24
        %v1701 = vpop.permute.xlu0 %1700
        %1702 = vrot.lane.b32.xlu0 %v1522, 24
        %v1703 = vpop.permute.xlu0 %1702
        %1704 = vrot.lane.b32.xlu0 %v1523, 24
        %v1705 = vpop.permute.xlu0 %1704
        %1706 = vrot.lane.b32.xlu0 %v1524, 24
        %v1707 = vpop.permute.xlu0 %1706
        %1708 = vrot.lane.b32.xlu0 %v1525, 24
        %v1709 = vpop.permute.xlu0 %1708
        %1710 = vrot.lane.b32.xlu0 %v1526, 24
        %v1711 = vpop.permute.xlu0 %1710
        %1712 = vrot.lane.b32.xlu0 %v1527, 24
        %v1713 = vpop.permute.xlu0 %1712
        %1714 = vrot.lane.b32.xlu0 %v1528, 24
        %v1715 = vpop.permute.xlu0 %1714
        %1716 = vrot.lane.b32.xlu0 %v1529, 24
        %v1717 = vpop.permute.xlu0 %1716
        %1718 = vrot.lane.b32.xlu0 %v1530, 24
        %v1719 = vpop.permute.xlu0 %1718
        %1720 = vrot.lane.b32.xlu0 %v1531, 24
        %v1721 = vpop.permute.xlu0 %1720
        %1722 = vrot.lane.b32.xlu0 %v1532, 24
        %v1723 = vpop.permute.xlu0 %1722
        %1724 = vrot.lane.b32.xlu0 %v1533, 24
        %v1725 = vpop.permute.xlu0 %1724
        %vm1790 = vcmask 261312
        %1791 = vst.msk [vmem:[#allocation3] sm:$0xff] %vm1790, %v1599
        %1792 = vst.msk [vmem:[#allocation3 + $0x8] sm:$0xff] %vm1790, %v1601
        %1793 = vst.msk [vmem:[#allocation3 + $0x10] sm:$0xff] %vm1790, %v1603
        %1794 = vst.msk [vmem:[#allocation3 + $0x18] sm:$0xff] %vm1790, %v1605
        %1795 = vst.msk [vmem:[#allocation3 + $0x20] sm:$0xff] %vm1790, %v1607
        %1796 = vst.msk [vmem:[#allocation3 + $0x28] sm:$0xff] %vm1790, %v1609
        %1797 = vst.msk [vmem:[#allocation3 + $0x30] sm:$0xff] %vm1790, %v1611
        %1798 = vst.msk [vmem:[#allocation3 + $0x38] sm:$0xff] %vm1790, %v1613
        %1799 = vst.msk [vmem:[#allocation3 + $0x40] sm:$0xff] %vm1790, %v1615
        %1800 = vst.msk [vmem:[#allocation3 + $0x48] sm:$0xff] %vm1790, %v1617
        %1801 = vst.msk [vmem:[#allocation3 + $0x50] sm:$0xff] %vm1790, %v1619
        %1802 = vst.msk [vmem:[#allocation3 + $0x58] sm:$0xff] %vm1790, %v1621
        %1803 = vst.msk [vmem:[#allocation3 + $0x60] sm:$0xff] %vm1790, %v1623
        %1804 = vst.msk [vmem:[#allocation3 + $0x68] sm:$0xff] %vm1790, %v1625
        %1805 = vst.msk [vmem:[#allocation3 + $0x70] sm:$0xff] %vm1790, %v1627
        %1806 = vst.msk [vmem:[#allocation3 + $0x78] sm:$0xff] %vm1790, %v1629
        %1807 = vst.msk [vmem:[#allocation3 + $0x80] sm:$0xff] %vm1790, %v1631
        %1808 = vst.msk [vmem:[#allocation3 + $0x88] sm:$0xff] %vm1790, %v1633
        %1809 = vst.msk [vmem:[#allocation3 + $0x90] sm:$0xff] %vm1790, %v1635
        %1810 = vst.msk [vmem:[#allocation3 + $0x98] sm:$0xff] %vm1790, %v1637
        %1811 = vst.msk [vmem:[#allocation3 + $0xa0] sm:$0xff] %vm1790, %v1639
        %1812 = vst.msk [vmem:[#allocation3 + $0xa8] sm:$0xff] %vm1790, %v1641
        %1813 = vst.msk [vmem:[#allocation3 + $0xb0] sm:$0xff] %vm1790, %v1643
        %1814 = vst.msk [vmem:[#allocation3 + $0xb8] sm:$0xff] %vm1790, %v1645
        %1815 = vst.msk [vmem:[#allocation3 + $0xc0] sm:$0xff] %vm1790, %v1647
        %1816 = vst.msk [vmem:[#allocation3 + $0xc8] sm:$0xff] %vm1790, %v1649
        %1817 = vst.msk [vmem:[#allocation3 + $0xd0] sm:$0xff] %vm1790, %v1651
        %1818 = vst.msk [vmem:[#allocation3 + $0xd8] sm:$0xff] %vm1790, %v1653
        %1819 = vst.msk [vmem:[#allocation3 + $0xe0] sm:$0xff] %vm1790, %v1655
        %1820 = vst.msk [vmem:[#allocation3 + $0xe8] sm:$0xff] %vm1790, %v1657
        %1821 = vst.msk [vmem:[#allocation3 + $0xf0] sm:$0xff] %vm1790, %v1659
        %1822 = vst.msk [vmem:[#allocation3 + $0xf8] sm:$0xff] %vm1790, %v1661
        %1823 = vst.msk [vmem:[#allocation3 + $0x100] sm:$0xff] %vm1790, %v1663
        %1824 = vst.msk [vmem:[#allocation3 + $0x108] sm:$0xff] %vm1790, %v1665
        %1825 = vst.msk [vmem:[#allocation3 + $0x110] sm:$0xff] %vm1790, %v1667
        %1826 = vst.msk [vmem:[#allocation3 + $0x118] sm:$0xff] %vm1790, %v1669
        %1827 = vst.msk [vmem:[#allocation3 + $0x120] sm:$0xff] %vm1790, %v1671
        %1828 = vst.msk [vmem:[#allocation3 + $0x128] sm:$0xff] %vm1790, %v1673
        %1829 = vst.msk [vmem:[#allocation3 + $0x130] sm:$0xff] %vm1790, %v1675
        %1830 = vst.msk [vmem:[#allocation3 + $0x138] sm:$0xff] %vm1790, %v1677
        %1831 = vst.msk [vmem:[#allocation3 + $0x140] sm:$0xff] %vm1790, %v1679
        %1832 = vst.msk [vmem:[#allocation3 + $0x148] sm:$0xff] %vm1790, %v1681
        %1833 = vst.msk [vmem:[#allocation3 + $0x150] sm:$0xff] %vm1790, %v1683
        %1834 = vst.msk [vmem:[#allocation3 + $0x158] sm:$0xff] %vm1790, %v1685
        %1835 = vst.msk [vmem:[#allocation3 + $0x160] sm:$0xff] %vm1790, %v1687
        %1836 = vst.msk [vmem:[#allocation3 + $0x168] sm:$0xff] %vm1790, %v1689
        %1837 = vst.msk [vmem:[#allocation3 + $0x170] sm:$0xff] %vm1790, %v1691
        %1838 = vst.msk [vmem:[#allocation3 + $0x178] sm:$0xff] %vm1790, %v1693
        %1839 = vst.msk [vmem:[#allocation3 + $0x180] sm:$0xff] %vm1790, %v1695
        %1840 = vst.msk [vmem:[#allocation3 + $0x188] sm:$0xff] %vm1790, %v1697
        %1841 = vst.msk [vmem:[#allocation3 + $0x190] sm:$0xff] %vm1790, %v1699
        %1842 = vst.msk [vmem:[#allocation3 + $0x198] sm:$0xff] %vm1790, %v1701
        %1843 = vst.msk [vmem:[#allocation3 + $0x1a0] sm:$0xff] %vm1790, %v1703
        %1844 = vst.msk [vmem:[#allocation3 + $0x1a8] sm:$0xff] %vm1790, %v1705
        %1845 = vst.msk [vmem:[#allocation3 + $0x1b0] sm:$0xff] %vm1790, %v1707
        %1846 = vst.msk [vmem:[#allocation3 + $0x1b8] sm:$0xff] %vm1790, %v1709
        %1847 = vst.msk [vmem:[#allocation3 + $0x1c0] sm:$0xff] %vm1790, %v1711
        %1848 = vst.msk [vmem:[#allocation3 + $0x1c8] sm:$0xff] %vm1790, %v1713
        %1849 = vst.msk [vmem:[#allocation3 + $0x1d0] sm:$0xff] %vm1790, %v1715
        %1850 = vst.msk [vmem:[#allocation3 + $0x1d8] sm:$0xff] %vm1790, %v1717
        %1851 = vst.msk [vmem:[#allocation3 + $0x1e0] sm:$0xff] %vm1790, %v1719
        %1852 = vst.msk [vmem:[#allocation3 + $0x1e8] sm:$0xff] %vm1790, %v1721
        %1853 = vst.msk [vmem:[#allocation3 + $0x1f0] sm:$0xff] %vm1790, %v1723
        %1854 = vst.msk [vmem:[#allocation3 + $0x1f8] sm:$0xff] %vm1790, %v1725
        %v1855 = vld [vmem:[#allocation2 + $0x13] sm:$0xff]
        %v1856 = vld [vmem:[#allocation2 + $0x1b] sm:$0xff]
        %v1857 = vld [vmem:[#allocation2 + $0x23] sm:$0xff]
        %v1858 = vld [vmem:[#allocation2 + $0x2b] sm:$0xff]
        %v1859 = vld [vmem:[#allocation2 + $0x33] sm:$0xff]
        %v1860 = vld [vmem:[#allocation2 + $0x3b] sm:$0xff]
        %v1861 = vld [vmem:[#allocation2 + $0x43] sm:$0xff]
        %v1862 = vld [vmem:[#allocation2 + $0x4b] sm:$0xff]
        %v1863 = vld [vmem:[#allocation2 + $0x53] sm:$0xff]
        %v1864 = vld [vmem:[#allocation2 + $0x5b] sm:$0xff]
        %v1865 = vld [vmem:[#allocation2 + $0x63] sm:$0xff]
        %v1866 = vld [vmem:[#allocation2 + $0x6b] sm:$0xff]
        %v1867 = vld [vmem:[#allocation2 + $0x73] sm:$0xff]
        %v1868 = vld [vmem:[#allocation2 + $0x7b] sm:$0xff]
        %v1869 = vld [vmem:[#allocation2 + $0x83] sm:$0xff]
        %v1870 = vld [vmem:[#allocation2 + $0x8b] sm:$0xff]
        %v1871 = vld [vmem:[#allocation2 + $0x93] sm:$0xff]
        %v1872 = vld [vmem:[#allocation2 + $0x9b] sm:$0xff]
        %v1873 = vld [vmem:[#allocation2 + $0xa3] sm:$0xff]
        %v1874 = vld [vmem:[#allocation2 + $0xab] sm:$0xff]
        %v1875 = vld [vmem:[#allocation2 + $0xb3] sm:$0xff]
        %v1876 = vld [vmem:[#allocation2 + $0xbb] sm:$0xff]
        %v1877 = vld [vmem:[#allocation2 + $0xc3] sm:$0xff]
        %v1878 = vld [vmem:[#allocation2 + $0xcb] sm:$0xff]
        %v1879 = vld [vmem:[#allocation2 + $0xd3] sm:$0xff]
        %v1880 = vld [vmem:[#allocation2 + $0xdb] sm:$0xff]
        %v1881 = vld [vmem:[#allocation2 + $0xe3] sm:$0xff]
        %v1882 = vld [vmem:[#allocation2 + $0xeb] sm:$0xff]
        %v1883 = vld [vmem:[#allocation2 + $0xf3] sm:$0xff]
        %v1884 = vld [vmem:[#allocation2 + $0xfb] sm:$0xff]
        %v1885 = vld [vmem:[#allocation2 + $0x103] sm:$0xff]
        %v1886 = vld [vmem:[#allocation2 + $0x10b] sm:$0xff]
        %v1887 = vld [vmem:[#allocation2 + $0x113] sm:$0xff]
        %v1888 = vld [vmem:[#allocation2 + $0x11b] sm:$0xff]
        %v1889 = vld [vmem:[#allocation2 + $0x123] sm:$0xff]
        %v1890 = vld [vmem:[#allocation2 + $0x12b] sm:$0xff]
        %v1891 = vld [vmem:[#allocation2 + $0x133] sm:$0xff]
        %v1892 = vld [vmem:[#allocation2 + $0x13b] sm:$0xff]
        %v1893 = vld [vmem:[#allocation2 + $0x143] sm:$0xff]
        %v1894 = vld [vmem:[#allocation2 + $0x14b] sm:$0xff]
        %v1895 = vld [vmem:[#allocation2 + $0x153] sm:$0xff]
        %v1896 = vld [vmem:[#allocation2 + $0x15b] sm:$0xff]
        %v1897 = vld [vmem:[#allocation2 + $0x163] sm:$0xff]
        %v1898 = vld [vmem:[#allocation2 + $0x16b] sm:$0xff]
        %v1899 = vld [vmem:[#allocation2 + $0x173] sm:$0xff]
        %v1900 = vld [vmem:[#allocation2 + $0x17b] sm:$0xff]
        %v1901 = vld [vmem:[#allocation2 + $0x183] sm:$0xff]
        %v1902 = vld [vmem:[#allocation2 + $0x18b] sm:$0xff]
        %v1903 = vld [vmem:[#allocation2 + $0x193] sm:$0xff]
        %v1904 = vld [vmem:[#allocation2 + $0x19b] sm:$0xff]
        %v1905 = vld [vmem:[#allocation2 + $0x1a3] sm:$0xff]
        %v1906 = vld [vmem:[#allocation2 + $0x1ab] sm:$0xff]
        %v1907 = vld [vmem:[#allocation2 + $0x1b3] sm:$0xff]
        %v1908 = vld [vmem:[#allocation2 + $0x1bb] sm:$0xff]
        %v1909 = vld [vmem:[#allocation2 + $0x1c3] sm:$0xff]
        %v1910 = vld [vmem:[#allocation2 + $0x1cb] sm:$0xff]
        %v1911 = vld [vmem:[#allocation2 + $0x1d3] sm:$0xff]
        %v1912 = vld [vmem:[#allocation2 + $0x1db] sm:$0xff]
        %v1913 = vld [vmem:[#allocation2 + $0x1e3] sm:$0xff]
        %v1914 = vld [vmem:[#allocation2 + $0x1eb] sm:$0xff]
        %v1915 = vld [vmem:[#allocation2 + $0x1f3] sm:$0xff]
        %v1916 = vld [vmem:[#allocation2 + $0x1fb] sm:$0xff]
        %v1917 = vld [vmem:[#allocation2 + $0x203] sm:$0xff]
        %v1918 = vld [vmem:[#allocation2 + $0x20b] sm:$0xff]
        %1983 = vrot.lane.b32.xlu0 %v1855, 32
        %v1984 = vpop.permute.xlu0 %1983
        %1985 = vrot.lane.b32.xlu0 %v1856, 32
        %v1986 = vpop.permute.xlu0 %1985
        %1987 = vrot.lane.b32.xlu0 %v1857, 32
        %v1988 = vpop.permute.xlu0 %1987
        %1989 = vrot.lane.b32.xlu0 %v1858, 32
        %v1990 = vpop.permute.xlu0 %1989
        %1991 = vrot.lane.b32.xlu0 %v1859, 32
        %v1992 = vpop.permute.xlu0 %1991
        %1993 = vrot.lane.b32.xlu0 %v1860, 32
        %v1994 = vpop.permute.xlu0 %1993
        %1995 = vrot.lane.b32.xlu0 %v1861, 32
        %v1996 = vpop.permute.xlu0 %1995
        %1997 = vrot.lane.b32.xlu0 %v1862, 32
        %v1998 = vpop.permute.xlu0 %1997
        %1999 = vrot.lane.b32.xlu0 %v1863, 32
        %v2000 = vpop.permute.xlu0 %1999
        %2001 = vrot.lane.b32.xlu0 %v1864, 32
        %v2002 = vpop.permute.xlu0 %2001
        %2003 = vrot.lane.b32.xlu0 %v1865, 32
        %v2004 = vpop.permute.xlu0 %2003
        %2005 = vrot.lane.b32.xlu0 %v1866, 32
        %v2006 = vpop.permute.xlu0 %2005
        %2007 = vrot.lane.b32.xlu0 %v1867, 32
        %v2008 = vpop.permute.xlu0 %2007
        %2009 = vrot.lane.b32.xlu0 %v1868, 32
        %v2010 = vpop.permute.xlu0 %2009
        %2011 = vrot.lane.b32.xlu0 %v1869, 32
        %v2012 = vpop.permute.xlu0 %2011
        %2013 = vrot.lane.b32.xlu0 %v1870, 32
        %v2014 = vpop.permute.xlu0 %2013
        %2015 = vrot.lane.b32.xlu0 %v1871, 32
        %v2016 = vpop.permute.xlu0 %2015
        %2017 = vrot.lane.b32.xlu0 %v1872, 32
        %v2018 = vpop.permute.xlu0 %2017
        %2019 = vrot.lane.b32.xlu0 %v1873, 32
        %v2020 = vpop.permute.xlu0 %2019
        %2021 = vrot.lane.b32.xlu0 %v1874, 32
        %v2022 = vpop.permute.xlu0 %2021
        %2023 = vrot.lane.b32.xlu0 %v1875, 32
        %v2024 = vpop.permute.xlu0 %2023
        %2025 = vrot.lane.b32.xlu0 %v1876, 32
        %v2026 = vpop.permute.xlu0 %2025
        %2027 = vrot.lane.b32.xlu0 %v1877, 32
        %v2028 = vpop.permute.xlu0 %2027
        %2029 = vrot.lane.b32.xlu0 %v1878, 32
        %v2030 = vpop.permute.xlu0 %2029
        %2031 = vrot.lane.b32.xlu0 %v1879, 32
        %v2032 = vpop.permute.xlu0 %2031
        %2033 = vrot.lane.b32.xlu0 %v1880, 32
        %v2034 = vpop.permute.xlu0 %2033
        %2035 = vrot.lane.b32.xlu0 %v1881, 32
        %v2036 = vpop.permute.xlu0 %2035
        %2037 = vrot.lane.b32.xlu0 %v1882, 32
        %v2038 = vpop.permute.xlu0 %2037
        %2039 = vrot.lane.b32.xlu0 %v1883, 32
        %v2040 = vpop.permute.xlu0 %2039
        %2041 = vrot.lane.b32.xlu0 %v1884, 32
        %v2042 = vpop.permute.xlu0 %2041
        %2043 = vrot.lane.b32.xlu0 %v1885, 32
        %v2044 = vpop.permute.xlu0 %2043
        %2045 = vrot.lane.b32.xlu0 %v1886, 32
        %v2046 = vpop.permute.xlu0 %2045
        %2047 = vrot.lane.b32.xlu0 %v1887, 32
        %v2048 = vpop.permute.xlu0 %2047
        %2049 = vrot.lane.b32.xlu0 %v1888, 32
        %v2050 = vpop.permute.xlu0 %2049
        %2051 = vrot.lane.b32.xlu0 %v1889, 32
        %v2052 = vpop.permute.xlu0 %2051
        %2053 = vrot.lane.b32.xlu0 %v1890, 32
        %v2054 = vpop.permute.xlu0 %2053
        %2055 = vrot.lane.b32.xlu0 %v1891, 32
        %v2056 = vpop.permute.xlu0 %2055
        %2057 = vrot.lane.b32.xlu0 %v1892, 32
        %v2058 = vpop.permute.xlu0 %2057
        %2059 = vrot.lane.b32.xlu0 %v1893, 32
        %v2060 = vpop.permute.xlu0 %2059
        %2061 = vrot.lane.b32.xlu0 %v1894, 32
        %v2062 = vpop.permute.xlu0 %2061
        %2063 = vrot.lane.b32.xlu0 %v1895, 32
        %v2064 = vpop.permute.xlu0 %2063
        %2065 = vrot.lane.b32.xlu0 %v1896, 32
        %v2066 = vpop.permute.xlu0 %2065
        %2067 = vrot.lane.b32.xlu0 %v1897, 32
        %v2068 = vpop.permute.xlu0 %2067
        %2069 = vrot.lane.b32.xlu0 %v1898, 32
        %v2070 = vpop.permute.xlu0 %2069
        %2071 = vrot.lane.b32.xlu0 %v1899, 32
        %v2072 = vpop.permute.xlu0 %2071
        %2073 = vrot.lane.b32.xlu0 %v1900, 32
        %v2074 = vpop.permute.xlu0 %2073
        %2075 = vrot.lane.b32.xlu0 %v1901, 32
        %v2076 = vpop.permute.xlu0 %2075
        %2077 = vrot.lane.b32.xlu0 %v1902, 32
        %v2078 = vpop.permute.xlu0 %2077
        %2079 = vrot.lane.b32.xlu0 %v1903, 32
        %v2080 = vpop.permute.xlu0 %2079
        %2081 = vrot.lane.b32.xlu0 %v1904, 32
        %v2082 = vpop.permute.xlu0 %2081
        %2083 = vrot.lane.b32.xlu0 %v1905, 32
        %v2084 = vpop.permute.xlu0 %2083
        %2085 = vrot.lane.b32.xlu0 %v1906, 32
        %v2086 = vpop.permute.xlu0 %2085
        %2087 = vrot.lane.b32.xlu0 %v1907, 32
        %v2088 = vpop.permute.xlu0 %2087
        %2089 = vrot.lane.b32.xlu0 %v1908, 32
        %v2090 = vpop.permute.xlu0 %2089
        %2091 = vrot.lane.b32.xlu0 %v1909, 32
        %v2092 = vpop.permute.xlu0 %2091
        %2093 = vrot.lane.b32.xlu0 %v1910, 32
        %v2094 = vpop.permute.xlu0 %2093
        %2095 = vrot.lane.b32.xlu0 %v1911, 32
        %v2096 = vpop.permute.xlu0 %2095
        %2097 = vrot.lane.b32.xlu0 %v1912, 32
        %v2098 = vpop.permute.xlu0 %2097
        %2099 = vrot.lane.b32.xlu0 %v1913, 32
        %v2100 = vpop.permute.xlu0 %2099
        %2101 = vrot.lane.b32.xlu0 %v1914, 32
        %v2102 = vpop.permute.xlu0 %2101
        %2103 = vrot.lane.b32.xlu0 %v1915, 32
        %v2104 = vpop.permute.xlu0 %2103
        %2105 = vrot.lane.b32.xlu0 %v1916, 32
        %v2106 = vpop.permute.xlu0 %2105
        %2107 = vrot.lane.b32.xlu0 %v1917, 32
        %v2108 = vpop.permute.xlu0 %2107
        %2109 = vrot.lane.b32.xlu0 %v1918, 32
        %v2110 = vpop.permute.xlu0 %2109
        %vm2175 = vcmask 326912
        %2176 = vst.msk [vmem:[#allocation3] sm:$0xff] %vm2175, %v1984
        %2177 = vst.msk [vmem:[#allocation3 + $0x8] sm:$0xff] %vm2175, %v1986
        %2178 = vst.msk [vmem:[#allocation3 + $0x10] sm:$0xff] %vm2175, %v1988
        %2179 = vst.msk [vmem:[#allocation3 + $0x18] sm:$0xff] %vm2175, %v1990
        %2180 = vst.msk [vmem:[#allocation3 + $0x20] sm:$0xff] %vm2175, %v1992
        %2181 = vst.msk [vmem:[#allocation3 + $0x28] sm:$0xff] %vm2175, %v1994
        %2182 = vst.msk [vmem:[#allocation3 + $0x30] sm:$0xff] %vm2175, %v1996
        %2183 = vst.msk [vmem:[#allocation3 + $0x38] sm:$0xff] %vm2175, %v1998
        %2184 = vst.msk [vmem:[#allocation3 + $0x40] sm:$0xff] %vm2175, %v2000
        %2185 = vst.msk [vmem:[#allocation3 + $0x48] sm:$0xff] %vm2175, %v2002
        %2186 = vst.msk [vmem:[#allocation3 + $0x50] sm:$0xff] %vm2175, %v2004
        %2187 = vst.msk [vmem:[#allocation3 + $0x58] sm:$0xff] %vm2175, %v2006
        %2188 = vst.msk [vmem:[#allocation3 + $0x60] sm:$0xff] %vm2175, %v2008
        %2189 = vst.msk [vmem:[#allocation3 + $0x68] sm:$0xff] %vm2175, %v2010
        %2190 = vst.msk [vmem:[#allocation3 + $0x70] sm:$0xff] %vm2175, %v2012
        %2191 = vst.msk [vmem:[#allocation3 + $0x78] sm:$0xff] %vm2175, %v2014
        %2192 = vst.msk [vmem:[#allocation3 + $0x80] sm:$0xff] %vm2175, %v2016
        %2193 = vst.msk [vmem:[#allocation3 + $0x88] sm:$0xff] %vm2175, %v2018
        %2194 = vst.msk [vmem:[#allocation3 + $0x90] sm:$0xff] %vm2175, %v2020
        %2195 = vst.msk [vmem:[#allocation3 + $0x98] sm:$0xff] %vm2175, %v2022
        %2196 = vst.msk [vmem:[#allocation3 + $0xa0] sm:$0xff] %vm2175, %v2024
        %2197 = vst.msk [vmem:[#allocation3 + $0xa8] sm:$0xff] %vm2175, %v2026
        %2198 = vst.msk [vmem:[#allocation3 + $0xb0] sm:$0xff] %vm2175, %v2028
        %2199 = vst.msk [vmem:[#allocation3 + $0xb8] sm:$0xff] %vm2175, %v2030
        %2200 = vst.msk [vmem:[#allocation3 + $0xc0] sm:$0xff] %vm2175, %v2032
        %2201 = vst.msk [vmem:[#allocation3 + $0xc8] sm:$0xff] %vm2175, %v2034
        %2202 = vst.msk [vmem:[#allocation3 + $0xd0] sm:$0xff] %vm2175, %v2036
        %2203 = vst.msk [vmem:[#allocation3 + $0xd8] sm:$0xff] %vm2175, %v2038
        %2204 = vst.msk [vmem:[#allocation3 + $0xe0] sm:$0xff] %vm2175, %v2040
        %2205 = vst.msk [vmem:[#allocation3 + $0xe8] sm:$0xff] %vm2175, %v2042
        %2206 = vst.msk [vmem:[#allocation3 + $0xf0] sm:$0xff] %vm2175, %v2044
        %2207 = vst.msk [vmem:[#allocation3 + $0xf8] sm:$0xff] %vm2175, %v2046
        %2208 = vst.msk [vmem:[#allocation3 + $0x100] sm:$0xff] %vm2175, %v2048
        %2209 = vst.msk [vmem:[#allocation3 + $0x108] sm:$0xff] %vm2175, %v2050
        %2210 = vst.msk [vmem:[#allocation3 + $0x110] sm:$0xff] %vm2175, %v2052
        %2211 = vst.msk [vmem:[#allocation3 + $0x118] sm:$0xff] %vm2175, %v2054
        %2212 = vst.msk [vmem:[#allocation3 + $0x120] sm:$0xff] %vm2175, %v2056
        %2213 = vst.msk [vmem:[#allocation3 + $0x128] sm:$0xff] %vm2175, %v2058
        %2214 = vst.msk [vmem:[#allocation3 + $0x130] sm:$0xff] %vm2175, %v2060
        %2215 = vst.msk [vmem:[#allocation3 + $0x138] sm:$0xff] %vm2175, %v2062
        %2216 = vst.msk [vmem:[#allocation3 + $0x140] sm:$0xff] %vm2175, %v2064
        %2217 = vst.msk [vmem:[#allocation3 + $0x148] sm:$0xff] %vm2175, %v2066
        %2218 = vst.msk [vmem:[#allocation3 + $0x150] sm:$0xff] %vm2175, %v2068
        %2219 = vst.msk [vmem:[#allocation3 + $0x158] sm:$0xff] %vm2175, %v2070
        %2220 = vst.msk [vmem:[#allocation3 + $0x160] sm:$0xff] %vm2175, %v2072
        %2221 = vst.msk [vmem:[#allocation3 + $0x168] sm:$0xff] %vm2175, %v2074
        %2222 = vst.msk [vmem:[#allocation3 + $0x170] sm:$0xff] %vm2175, %v2076
        %2223 = vst.msk [vmem:[#allocation3 + $0x178] sm:$0xff] %vm2175, %v2078
        %2224 = vst.msk [vmem:[#allocation3 + $0x180] sm:$0xff] %vm2175, %v2080
        %2225 = vst.msk [vmem:[#allocation3 + $0x188] sm:$0xff] %vm2175, %v2082
        %2226 = vst.msk [vmem:[#allocation3 + $0x190] sm:$0xff] %vm2175, %v2084
        %2227 = vst.msk [vmem:[#allocation3 + $0x198] sm:$0xff] %vm2175, %v2086
        %2228 = vst.msk [vmem:[#allocation3 + $0x1a0] sm:$0xff] %vm2175, %v2088
        %2229 = vst.msk [vmem:[#allocation3 + $0x1a8] sm:$0xff] %vm2175, %v2090
        %2230 = vst.msk [vmem:[#allocation3 + $0x1b0] sm:$0xff] %vm2175, %v2092
        %2231 = vst.msk [vmem:[#allocation3 + $0x1b8] sm:$0xff] %vm2175, %v2094
        %2232 = vst.msk [vmem:[#allocation3 + $0x1c0] sm:$0xff] %vm2175, %v2096
        %2233 = vst.msk [vmem:[#allocation3 + $0x1c8] sm:$0xff] %vm2175, %v2098
        %2234 = vst.msk [vmem:[#allocation3 + $0x1d0] sm:$0xff] %vm2175, %v2100
        %2235 = vst.msk [vmem:[#allocation3 + $0x1d8] sm:$0xff] %vm2175, %v2102
        %2236 = vst.msk [vmem:[#allocation3 + $0x1e0] sm:$0xff] %vm2175, %v2104
        %2237 = vst.msk [vmem:[#allocation3 + $0x1e8] sm:$0xff] %vm2175, %v2106
        %2238 = vst.msk [vmem:[#allocation3 + $0x1f0] sm:$0xff] %vm2175, %v2108
        %2239 = vst.msk [vmem:[#allocation3 + $0x1f8] sm:$0xff] %vm2175, %v2110
        %v2240 = vld [vmem:[#allocation2 + $0x14] sm:$0xff]
        %v2241 = vld [vmem:[#allocation2 + $0x1c] sm:$0xff]
        %v2242 = vld [vmem:[#allocation2 + $0x24] sm:$0xff]
        %v2243 = vld [vmem:[#allocation2 + $0x2c] sm:$0xff]
        %v2244 = vld [vmem:[#allocation2 + $0x34] sm:$0xff]
        %v2245 = vld [vmem:[#allocation2 + $0x3c] sm:$0xff]
        %v2246 = vld [vmem:[#allocation2 + $0x44] sm:$0xff]
        %v2247 = vld [vmem:[#allocation2 + $0x4c] sm:$0xff]
        %v2248 = vld [vmem:[#allocation2 + $0x54] sm:$0xff]
        %v2249 = vld [vmem:[#allocation2 + $0x5c] sm:$0xff]
        %v2250 = vld [vmem:[#allocation2 + $0x64] sm:$0xff]
        %v2251 = vld [vmem:[#allocation2 + $0x6c] sm:$0xff]
        %v2252 = vld [vmem:[#allocation2 + $0x74] sm:$0xff]
        %v2253 = vld [vmem:[#allocation2 + $0x7c] sm:$0xff]
        %v2254 = vld [vmem:[#allocation2 + $0x84] sm:$0xff]
        %v2255 = vld [vmem:[#allocation2 + $0x8c] sm:$0xff]
        %v2256 = vld [vmem:[#allocation2 + $0x94] sm:$0xff]
        %v2257 = vld [vmem:[#allocation2 + $0x9c] sm:$0xff]
        %v2258 = vld [vmem:[#allocation2 + $0xa4] sm:$0xff]
        %v2259 = vld [vmem:[#allocation2 + $0xac] sm:$0xff]
        %v2260 = vld [vmem:[#allocation2 + $0xb4] sm:$0xff]
        %v2261 = vld [vmem:[#allocation2 + $0xbc] sm:$0xff]
        %v2262 = vld [vmem:[#allocation2 + $0xc4] sm:$0xff]
        %v2263 = vld [vmem:[#allocation2 + $0xcc] sm:$0xff]
        %v2264 = vld [vmem:[#allocation2 + $0xd4] sm:$0xff]
        %v2265 = vld [vmem:[#allocation2 + $0xdc] sm:$0xff]
        %v2266 = vld [vmem:[#allocation2 + $0xe4] sm:$0xff]
        %v2267 = vld [vmem:[#allocation2 + $0xec] sm:$0xff]
        %v2268 = vld [vmem:[#allocation2 + $0xf4] sm:$0xff]
        %v2269 = vld [vmem:[#allocation2 + $0xfc] sm:$0xff]
        %v2270 = vld [vmem:[#allocation2 + $0x104] sm:$0xff]
        %v2271 = vld [vmem:[#allocation2 + $0x10c] sm:$0xff]
        %v2272 = vld [vmem:[#allocation2 + $0x114] sm:$0xff]
        %v2273 = vld [vmem:[#allocation2 + $0x11c] sm:$0xff]
        %v2274 = vld [vmem:[#allocation2 + $0x124] sm:$0xff]
        %v2275 = vld [vmem:[#allocation2 + $0x12c] sm:$0xff]
        %v2276 = vld [vmem:[#allocation2 + $0x134] sm:$0xff]
        %v2277 = vld [vmem:[#allocation2 + $0x13c] sm:$0xff]
        %v2278 = vld [vmem:[#allocation2 + $0x144] sm:$0xff]
        %v2279 = vld [vmem:[#allocation2 + $0x14c] sm:$0xff]
        %v2280 = vld [vmem:[#allocation2 + $0x154] sm:$0xff]
        %v2281 = vld [vmem:[#allocation2 + $0x15c] sm:$0xff]
        %v2282 = vld [vmem:[#allocation2 + $0x164] sm:$0xff]
        %v2283 = vld [vmem:[#allocation2 + $0x16c] sm:$0xff]
        %v2284 = vld [vmem:[#allocation2 + $0x174] sm:$0xff]
        %v2285 = vld [vmem:[#allocation2 + $0x17c] sm:$0xff]
        %v2286 = vld [vmem:[#allocation2 + $0x184] sm:$0xff]
        %v2287 = vld [vmem:[#allocation2 + $0x18c] sm:$0xff]
        %v2288 = vld [vmem:[#allocation2 + $0x194] sm:$0xff]
        %v2289 = vld [vmem:[#allocation2 + $0x19c] sm:$0xff]
        %v2290 = vld [vmem:[#allocation2 + $0x1a4] sm:$0xff]
        %v2291 = vld [vmem:[#allocation2 + $0x1ac] sm:$0xff]
        %v2292 = vld [vmem:[#allocation2 + $0x1b4] sm:$0xff]
        %v2293 = vld [vmem:[#allocation2 + $0x1bc] sm:$0xff]
        %v2294 = vld [vmem:[#allocation2 + $0x1c4] sm:$0xff]
        %v2295 = vld [vmem:[#allocation2 + $0x1cc] sm:$0xff]
        %v2296 = vld [vmem:[#allocation2 + $0x1d4] sm:$0xff]
        %v2297 = vld [vmem:[#allocation2 + $0x1dc] sm:$0xff]
        %v2298 = vld [vmem:[#allocation2 + $0x1e4] sm:$0xff]
        %v2299 = vld [vmem:[#allocation2 + $0x1ec] sm:$0xff]
        %v2300 = vld [vmem:[#allocation2 + $0x1f4] sm:$0xff]
        %v2301 = vld [vmem:[#allocation2 + $0x1fc] sm:$0xff]
        %v2302 = vld [vmem:[#allocation2 + $0x204] sm:$0xff]
        %v2303 = vld [vmem:[#allocation2 + $0x20c] sm:$0xff]
        %2368 = vrot.lane.b32.xlu0 %v2240, 40
        %v2369 = vpop.permute.xlu0 %2368
        %2370 = vrot.lane.b32.xlu0 %v2241, 40
        %v2371 = vpop.permute.xlu0 %2370
        %2372 = vrot.lane.b32.xlu0 %v2242, 40
        %v2373 = vpop.permute.xlu0 %2372
        %2374 = vrot.lane.b32.xlu0 %v2243, 40
        %v2375 = vpop.permute.xlu0 %2374
        %2376 = vrot.lane.b32.xlu0 %v2244, 40
        %v2377 = vpop.permute.xlu0 %2376
        %2378 = vrot.lane.b32.xlu0 %v2245, 40
        %v2379 = vpop.permute.xlu0 %2378
        %2380 = vrot.lane.b32.xlu0 %v2246, 40
        %v2381 = vpop.permute.xlu0 %2380
        %2382 = vrot.lane.b32.xlu0 %v2247, 40
        %v2383 = vpop.permute.xlu0 %2382
        %2384 = vrot.lane.b32.xlu0 %v2248, 40
        %v2385 = vpop.permute.xlu0 %2384
        %2386 = vrot.lane.b32.xlu0 %v2249, 40
        %v2387 = vpop.permute.xlu0 %2386
        %2388 = vrot.lane.b32.xlu0 %v2250, 40
        %v2389 = vpop.permute.xlu0 %2388
        %2390 = vrot.lane.b32.xlu0 %v2251, 40
        %v2391 = vpop.permute.xlu0 %2390
        %2392 = vrot.lane.b32.xlu0 %v2252, 40
        %v2393 = vpop.permute.xlu0 %2392
        %2394 = vrot.lane.b32.xlu0 %v2253, 40
        %v2395 = vpop.permute.xlu0 %2394
        %2396 = vrot.lane.b32.xlu0 %v2254, 40
        %v2397 = vpop.permute.xlu0 %2396
        %2398 = vrot.lane.b32.xlu0 %v2255, 40
        %v2399 = vpop.permute.xlu0 %2398
        %2400 = vrot.lane.b32.xlu0 %v2256, 40
        %v2401 = vpop.permute.xlu0 %2400
        %2402 = vrot.lane.b32.xlu0 %v2257, 40
        %v2403 = vpop.permute.xlu0 %2402
        %2404 = vrot.lane.b32.xlu0 %v2258, 40
        %v2405 = vpop.permute.xlu0 %2404
        %2406 = vrot.lane.b32.xlu0 %v2259, 40
        %v2407 = vpop.permute.xlu0 %2406
        %2408 = vrot.lane.b32.xlu0 %v2260, 40
        %v2409 = vpop.permute.xlu0 %2408
        %2410 = vrot.lane.b32.xlu0 %v2261, 40
        %v2411 = vpop.permute.xlu0 %2410
        %2412 = vrot.lane.b32.xlu0 %v2262, 40
        %v2413 = vpop.permute.xlu0 %2412
        %2414 = vrot.lane.b32.xlu0 %v2263, 40
        %v2415 = vpop.permute.xlu0 %2414
        %2416 = vrot.lane.b32.xlu0 %v2264, 40
        %v2417 = vpop.permute.xlu0 %2416
        %2418 = vrot.lane.b32.xlu0 %v2265, 40
        %v2419 = vpop.permute.xlu0 %2418
        %2420 = vrot.lane.b32.xlu0 %v2266, 40
        %v2421 = vpop.permute.xlu0 %2420
        %2422 = vrot.lane.b32.xlu0 %v2267, 40
        %v2423 = vpop.permute.xlu0 %2422
        %2424 = vrot.lane.b32.xlu0 %v2268, 40
        %v2425 = vpop.permute.xlu0 %2424
        %2426 = vrot.lane.b32.xlu0 %v2269, 40
        %v2427 = vpop.permute.xlu0 %2426
        %2428 = vrot.lane.b32.xlu0 %v2270, 40
        %v2429 = vpop.permute.xlu0 %2428
        %2430 = vrot.lane.b32.xlu0 %v2271, 40
        %v2431 = vpop.permute.xlu0 %2430
        %2432 = vrot.lane.b32.xlu0 %v2272, 40
        %v2433 = vpop.permute.xlu0 %2432
        %2434 = vrot.lane.b32.xlu0 %v2273, 40
        %v2435 = vpop.permute.xlu0 %2434
        %2436 = vrot.lane.b32.xlu0 %v2274, 40
        %v2437 = vpop.permute.xlu0 %2436
        %2438 = vrot.lane.b32.xlu0 %v2275, 40
        %v2439 = vpop.permute.xlu0 %2438
        %2440 = vrot.lane.b32.xlu0 %v2276, 40
        %v2441 = vpop.permute.xlu0 %2440
        %2442 = vrot.lane.b32.xlu0 %v2277, 40
        %v2443 = vpop.permute.xlu0 %2442
        %2444 = vrot.lane.b32.xlu0 %v2278, 40
        %v2445 = vpop.permute.xlu0 %2444
        %2446 = vrot.lane.b32.xlu0 %v2279, 40
        %v2447 = vpop.permute.xlu0 %2446
        %2448 = vrot.lane.b32.xlu0 %v2280, 40
        %v2449 = vpop.permute.xlu0 %2448
        %2450 = vrot.lane.b32.xlu0 %v2281, 40
        %v2451 = vpop.permute.xlu0 %2450
        %2452 = vrot.lane.b32.xlu0 %v2282, 40
        %v2453 = vpop.permute.xlu0 %2452
        %2454 = vrot.lane.b32.xlu0 %v2283, 40
        %v2455 = vpop.permute.xlu0 %2454
        %2456 = vrot.lane.b32.xlu0 %v2284, 40
        %v2457 = vpop.permute.xlu0 %2456
        %2458 = vrot.lane.b32.xlu0 %v2285, 40
        %v2459 = vpop.permute.xlu0 %2458
        %2460 = vrot.lane.b32.xlu0 %v2286, 40
        %v2461 = vpop.permute.xlu0 %2460
        %2462 = vrot.lane.b32.xlu0 %v2287, 40
        %v2463 = vpop.permute.xlu0 %2462
        %2464 = vrot.lane.b32.xlu0 %v2288, 40
        %v2465 = vpop.permute.xlu0 %2464
        %2466 = vrot.lane.b32.xlu0 %v2289, 40
        %v2467 = vpop.permute.xlu0 %2466
        %2468 = vrot.lane.b32.xlu0 %v2290, 40
        %v2469 = vpop.permute.xlu0 %2468
        %2470 = vrot.lane.b32.xlu0 %v2291, 40
        %v2471 = vpop.permute.xlu0 %2470
        %2472 = vrot.lane.b32.xlu0 %v2292, 40
        %v2473 = vpop.permute.xlu0 %2472
        %2474 = vrot.lane.b32.xlu0 %v2293, 40
        %v2475 = vpop.permute.xlu0 %2474
        %2476 = vrot.lane.b32.xlu0 %v2294, 40
        %v2477 = vpop.permute.xlu0 %2476
        %2478 = vrot.lane.b32.xlu0 %v2295, 40
        %v2479 = vpop.permute.xlu0 %2478
        %2480 = vrot.lane.b32.xlu0 %v2296, 40
        %v2481 = vpop.permute.xlu0 %2480
        %2482 = vrot.lane.b32.xlu0 %v2297, 40
        %v2483 = vpop.permute.xlu0 %2482
        %2484 = vrot.lane.b32.xlu0 %v2298, 40
        %v2485 = vpop.permute.xlu0 %2484
        %2486 = vrot.lane.b32.xlu0 %v2299, 40
        %v2487 = vpop.permute.xlu0 %2486
        %2488 = vrot.lane.b32.xlu0 %v2300, 40
        %v2489 = vpop.permute.xlu0 %2488
        %2490 = vrot.lane.b32.xlu0 %v2301, 40
        %v2491 = vpop.permute.xlu0 %2490
        %2492 = vrot.lane.b32.xlu0 %v2302, 40
        %v2493 = vpop.permute.xlu0 %2492
        %2494 = vrot.lane.b32.xlu0 %v2303, 40
        %v2495 = vpop.permute.xlu0 %2494
        %vm2560 = vcmask 392512
        %2561 = vst.msk [vmem:[#allocation3] sm:$0xff] %vm2560, %v2369
        %2562 = vst.msk [vmem:[#allocation3 + $0x8] sm:$0xff] %vm2560, %v2371
        %2563 = vst.msk [vmem:[#allocation3 + $0x10] sm:$0xff] %vm2560, %v2373
        %2564 = vst.msk [vmem:[#allocation3 + $0x18] sm:$0xff] %vm2560, %v2375
        %2565 = vst.msk [vmem:[#allocation3 + $0x20] sm:$0xff] %vm2560, %v2377
        %2566 = vst.msk [vmem:[#allocation3 + $0x28] sm:$0xff] %vm2560, %v2379
        %2567 = vst.msk [vmem:[#allocation3 + $0x30] sm:$0xff] %vm2560, %v2381
        %2568 = vst.msk [vmem:[#allocation3 + $0x38] sm:$0xff] %vm2560, %v2383
        %2569 = vst.msk [vmem:[#allocation3 + $0x40] sm:$0xff] %vm2560, %v2385
        %2570 = vst.msk [vmem:[#allocation3 + $0x48] sm:$0xff] %vm2560, %v2387
        %2571 = vst.msk [vmem:[#allocation3 + $0x50] sm:$0xff] %vm2560, %v2389
        %2572 = vst.msk [vmem:[#allocation3 + $0x58] sm:$0xff] %vm2560, %v2391
        %2573 = vst.msk [vmem:[#allocation3 + $0x60] sm:$0xff] %vm2560, %v2393
        %2574 = vst.msk [vmem:[#allocation3 + $0x68] sm:$0xff] %vm2560, %v2395
        %2575 = vst.msk [vmem:[#allocation3 + $0x70] sm:$0xff] %vm2560, %v2397
        %2576 = vst.msk [vmem:[#allocation3 + $0x78] sm:$0xff] %vm2560, %v2399
        %2577 = vst.msk [vmem:[#allocation3 + $0x80] sm:$0xff] %vm2560, %v2401
        %2578 = vst.msk [vmem:[#allocation3 + $0x88] sm:$0xff] %vm2560, %v2403
        %2579 = vst.msk [vmem:[#allocation3 + $0x90] sm:$0xff] %vm2560, %v2405
        %2580 = vst.msk [vmem:[#allocation3 + $0x98] sm:$0xff] %vm2560, %v2407
        %2581 = vst.msk [vmem:[#allocation3 + $0xa0] sm:$0xff] %vm2560, %v2409
        %2582 = vst.msk [vmem:[#allocation3 + $0xa8] sm:$0xff] %vm2560, %v2411
        %2583 = vst.msk [vmem:[#allocation3 + $0xb0] sm:$0xff] %vm2560, %v2413
        %2584 = vst.msk [vmem:[#allocation3 + $0xb8] sm:$0xff] %vm2560, %v2415
        %2585 = vst.msk [vmem:[#allocation3 + $0xc0] sm:$0xff] %vm2560, %v2417
        %2586 = vst.msk [vmem:[#allocation3 + $0xc8] sm:$0xff] %vm2560, %v2419
        %2587 = vst.msk [vmem:[#allocation3 + $0xd0] sm:$0xff] %vm2560, %v2421
        %2588 = vst.msk [vmem:[#allocation3 + $0xd8] sm:$0xff] %vm2560, %v2423
        %2589 = vst.msk [vmem:[#allocation3 + $0xe0] sm:$0xff] %vm2560, %v2425
        %2590 = vst.msk [vmem:[#allocation3 + $0xe8] sm:$0xff] %vm2560, %v2427
        %2591 = vst.msk [vmem:[#allocation3 + $0xf0] sm:$0xff] %vm2560, %v2429
        %2592 = vst.msk [vmem:[#allocation3 + $0xf8] sm:$0xff] %vm2560, %v2431
        %2593 = vst.msk [vmem:[#allocation3 + $0x100] sm:$0xff] %vm2560, %v2433
        %2594 = vst.msk [vmem:[#allocation3 + $0x108] sm:$0xff] %vm2560, %v2435
        %2595 = vst.msk [vmem:[#allocation3 + $0x110] sm:$0xff] %vm2560, %v2437
        %2596 = vst.msk [vmem:[#allocation3 + $0x118] sm:$0xff] %vm2560, %v2439
        %2597 = vst.msk [vmem:[#allocation3 + $0x120] sm:$0xff] %vm2560, %v2441
        %2598 = vst.msk [vmem:[#allocation3 + $0x128] sm:$0xff] %vm2560, %v2443
        %2599 = vst.msk [vmem:[#allocation3 + $0x130] sm:$0xff] %vm2560, %v2445
        %2600 = vst.msk [vmem:[#allocation3 + $0x138] sm:$0xff] %vm2560, %v2447
        %2601 = vst.msk [vmem:[#allocation3 + $0x140] sm:$0xff] %vm2560, %v2449
        %2602 = vst.msk [vmem:[#allocation3 + $0x148] sm:$0xff] %vm2560, %v2451
        %2603 = vst.msk [vmem:[#allocation3 + $0x150] sm:$0xff] %vm2560, %v2453
        %2604 = vst.msk [vmem:[#allocation3 + $0x158] sm:$0xff] %vm2560, %v2455
        %2605 = vst.msk [vmem:[#allocation3 + $0x160] sm:$0xff] %vm2560, %v2457
        %2606 = vst.msk [vmem:[#allocation3 + $0x168] sm:$0xff] %vm2560, %v2459
        %2607 = vst.msk [vmem:[#allocation3 + $0x170] sm:$0xff] %vm2560, %v2461
        %2608 = vst.msk [vmem:[#allocation3 + $0x178] sm:$0xff] %vm2560, %v2463
        %2609 = vst.msk [vmem:[#allocation3 + $0x180] sm:$0xff] %vm2560, %v2465
        %2610 = vst.msk [vmem:[#allocation3 + $0x188] sm:$0xff] %vm2560, %v2467
        %2611 = vst.msk [vmem:[#allocation3 + $0x190] sm:$0xff] %vm2560, %v2469
        %2612 = vst.msk [vmem:[#allocation3 + $0x198] sm:$0xff] %vm2560, %v2471
        %2613 = vst.msk [vmem:[#allocation3 + $0x1a0] sm:$0xff] %vm2560, %v2473
        %2614 = vst.msk [vmem:[#allocation3 + $0x1a8] sm:$0xff] %vm2560, %v2475
        %2615 = vst.msk [vmem:[#allocation3 + $0x1b0] sm:$0xff] %vm2560, %v2477
        %2616 = vst.msk [vmem:[#allocation3 + $0x1b8] sm:$0xff] %vm2560, %v2479
        %2617 = vst.msk [vmem:[#allocation3 + $0x1c0] sm:$0xff] %vm2560, %v2481
        %2618 = vst.msk [vmem:[#allocation3 + $0x1c8] sm:$0xff] %vm2560, %v2483
        %2619 = vst.msk [vmem:[#allocation3 + $0x1d0] sm:$0xff] %vm2560, %v2485
        %2620 = vst.msk [vmem:[#allocation3 + $0x1d8] sm:$0xff] %vm2560, %v2487
        %2621 = vst.msk [vmem:[#allocation3 + $0x1e0] sm:$0xff] %vm2560, %v2489
        %2622 = vst.msk [vmem:[#allocation3 + $0x1e8] sm:$0xff] %vm2560, %v2491
        %2623 = vst.msk [vmem:[#allocation3 + $0x1f0] sm:$0xff] %vm2560, %v2493
        %2624 = vst.msk [vmem:[#allocation3 + $0x1f8] sm:$0xff] %vm2560, %v2495
        %v2625 = vld [vmem:[#allocation2 + $0x24] sm:$0xff]
        %v2626 = vld [vmem:[#allocation2 + $0x2c] sm:$0xff]
        %v2627 = vld [vmem:[#allocation2 + $0x34] sm:$0xff]
        %v2628 = vld [vmem:[#allocation2 + $0x3c] sm:$0xff]
        %v2629 = vld [vmem:[#allocation2 + $0x44] sm:$0xff]
        %v2630 = vld [vmem:[#allocation2 + $0x4c] sm:$0xff]
        %v2631 = vld [vmem:[#allocation2 + $0x54] sm:$0xff]
        %v2632 = vld [vmem:[#allocation2 + $0x5c] sm:$0xff]
        %v2633 = vld [vmem:[#allocation2 + $0x64] sm:$0xff]
        %v2634 = vld [vmem:[#allocation2 + $0x6c] sm:$0xff]
        %v2635 = vld [vmem:[#allocation2 + $0x74] sm:$0xff]
        %v2636 = vld [vmem:[#allocation2 + $0x7c] sm:$0xff]
        %v2637 = vld [vmem:[#allocation2 + $0x84] sm:$0xff]
        %v2638 = vld [vmem:[#allocation2 + $0x8c] sm:$0xff]
        %v2639 = vld [vmem:[#allocation2 + $0x94] sm:$0xff]
        %v2640 = vld [vmem:[#allocation2 + $0x9c] sm:$0xff]
        %v2641 = vld [vmem:[#allocation2 + $0xa4] sm:$0xff]
        %v2642 = vld [vmem:[#allocation2 + $0xac] sm:$0xff]
        %v2643 = vld [vmem:[#allocation2 + $0xb4] sm:$0xff]
        %v2644 = vld [vmem:[#allocation2 + $0xbc] sm:$0xff]
        %v2645 = vld [vmem:[#allocation2 + $0xc4] sm:$0xff]
        %v2646 = vld [vmem:[#allocation2 + $0xcc] sm:$0xff]
        %v2647 = vld [vmem:[#allocation2 + $0xd4] sm:$0xff]
        %v2648 = vld [vmem:[#allocation2 + $0xdc] sm:$0xff]
        %v2649 = vld [vmem:[#allocation2 + $0xe4] sm:$0xff]
        %v2650 = vld [vmem:[#allocation2 + $0xec] sm:$0xff]
        %v2651 = vld [vmem:[#allocation2 + $0xf4] sm:$0xff]
        %v2652 = vld [vmem:[#allocation2 + $0xfc] sm:$0xff]
        %v2653 = vld [vmem:[#allocation2 + $0x104] sm:$0xff]
        %v2654 = vld [vmem:[#allocation2 + $0x10c] sm:$0xff]
        %v2655 = vld [vmem:[#allocation2 + $0x114] sm:$0xff]
        %v2656 = vld [vmem:[#allocation2 + $0x11c] sm:$0xff]
        %v2657 = vld [vmem:[#allocation2 + $0x124] sm:$0xff]
        %v2658 = vld [vmem:[#allocation2 + $0x12c] sm:$0xff]
        %v2659 = vld [vmem:[#allocation2 + $0x134] sm:$0xff]
        %v2660 = vld [vmem:[#allocation2 + $0x13c] sm:$0xff]
        %v2661 = vld [vmem:[#allocation2 + $0x144] sm:$0xff]
        %v2662 = vld [vmem:[#allocation2 + $0x14c] sm:$0xff]
        %v2663 = vld [vmem:[#allocation2 + $0x154] sm:$0xff]
        %v2664 = vld [vmem:[#allocation2 + $0x15c] sm:$0xff]
        %v2665 = vld [vmem:[#allocation2 + $0x164] sm:$0xff]
        %v2666 = vld [vmem:[#allocation2 + $0x16c] sm:$0xff]
        %v2667 = vld [vmem:[#allocation2 + $0x174] sm:$0xff]
        %v2668 = vld [vmem:[#allocation2 + $0x17c] sm:$0xff]
        %v2669 = vld [vmem:[#allocation2 + $0x184] sm:$0xff]
        %v2670 = vld [vmem:[#allocation2 + $0x18c] sm:$0xff]
        %v2671 = vld [vmem:[#allocation2 + $0x194] sm:$0xff]
        %v2672 = vld [vmem:[#allocation2 + $0x19c] sm:$0xff]
        %v2673 = vld [vmem:[#allocation2 + $0x1a4] sm:$0xff]
        %v2674 = vld [vmem:[#allocation2 + $0x1ac] sm:$0xff]
        %v2675 = vld [vmem:[#allocation2 + $0x1b4] sm:$0xff]
        %v2676 = vld [vmem:[#allocation2 + $0x1bc] sm:$0xff]
        %v2677 = vld [vmem:[#allocation2 + $0x1c4] sm:$0xff]
        %v2678 = vld [vmem:[#allocation2 + $0x1cc] sm:$0xff]
        %v2679 = vld [vmem:[#allocation2 + $0x1d4] sm:$0xff]
        %v2680 = vld [vmem:[#allocation2 + $0x1dc] sm:$0xff]
        %v2681 = vld [vmem:[#allocation2 + $0x1e4] sm:$0xff]
        %v2682 = vld [vmem:[#allocation2 + $0x1ec] sm:$0xff]
        %v2683 = vld [vmem:[#allocation2 + $0x1f4] sm:$0xff]
        %v2684 = vld [vmem:[#allocation2 + $0x1fc] sm:$0xff]
        %v2685 = vld [vmem:[#allocation2 + $0x204] sm:$0xff]
        %v2686 = vld [vmem:[#allocation2 + $0x20c] sm:$0xff]
        %v2687 = vld [vmem:[#allocation2 + $0x214] sm:$0xff]
        %v2688 = vld [vmem:[#allocation2 + $0x21c] sm:$0xff]
        %2753 = vrot.lane.b32.xlu0 %v2625, 48
        %v2754 = vpop.permute.xlu0 %2753
        %2755 = vrot.lane.b32.xlu0 %v2626, 48
        %v2756 = vpop.permute.xlu0 %2755
        %2757 = vrot.lane.b32.xlu0 %v2627, 48
        %v2758 = vpop.permute.xlu0 %2757
        %2759 = vrot.lane.b32.xlu0 %v2628, 48
        %v2760 = vpop.permute.xlu0 %2759
        %2761 = vrot.lane.b32.xlu0 %v2629, 48
        %v2762 = vpop.permute.xlu0 %2761
        %2763 = vrot.lane.b32.xlu0 %v2630, 48
        %v2764 = vpop.permute.xlu0 %2763
        %2765 = vrot.lane.b32.xlu0 %v2631, 48
        %v2766 = vpop.permute.xlu0 %2765
        %2767 = vrot.lane.b32.xlu0 %v2632, 48
        %v2768 = vpop.permute.xlu0 %2767
        %2769 = vrot.lane.b32.xlu0 %v2633, 48
        %v2770 = vpop.permute.xlu0 %2769
        %2771 = vrot.lane.b32.xlu0 %v2634, 48
        %v2772 = vpop.permute.xlu0 %2771
        %2773 = vrot.lane.b32.xlu0 %v2635, 48
        %v2774 = vpop.permute.xlu0 %2773
        %2775 = vrot.lane.b32.xlu0 %v2636, 48
        %v2776 = vpop.permute.xlu0 %2775
        %2777 = vrot.lane.b32.xlu0 %v2637, 48
        %v2778 = vpop.permute.xlu0 %2777
        %2779 = vrot.lane.b32.xlu0 %v2638, 48
        %v2780 = vpop.permute.xlu0 %2779
        %2781 = vrot.lane.b32.xlu0 %v2639, 48
        %v2782 = vpop.permute.xlu0 %2781
        %2783 = vrot.lane.b32.xlu0 %v2640, 48
        %v2784 = vpop.permute.xlu0 %2783
        %2785 = vrot.lane.b32.xlu0 %v2641, 48
        %v2786 = vpop.permute.xlu0 %2785
        %2787 = vrot.lane.b32.xlu0 %v2642, 48
        %v2788 = vpop.permute.xlu0 %2787
        %2789 = vrot.lane.b32.xlu0 %v2643, 48
        %v2790 = vpop.permute.xlu0 %2789
        %2791 = vrot.lane.b32.xlu0 %v2644, 48
        %v2792 = vpop.permute.xlu0 %2791
        %2793 = vrot.lane.b32.xlu0 %v2645, 48
        %v2794 = vpop.permute.xlu0 %2793
        %2795 = vrot.lane.b32.xlu0 %v2646, 48
        %v2796 = vpop.permute.xlu0 %2795
        %2797 = vrot.lane.b32.xlu0 %v2647, 48
        %v2798 = vpop.permute.xlu0 %2797
        %2799 = vrot.lane.b32.xlu0 %v2648, 48
        %v2800 = vpop.permute.xlu0 %2799
        %2801 = vrot.lane.b32.xlu0 %v2649, 48
        %v2802 = vpop.permute.xlu0 %2801
        %2803 = vrot.lane.b32.xlu0 %v2650, 48
        %v2804 = vpop.permute.xlu0 %2803
        %2805 = vrot.lane.b32.xlu0 %v2651, 48
        %v2806 = vpop.permute.xlu0 %2805
        %2807 = vrot.lane.b32.xlu0 %v2652, 48
        %v2808 = vpop.permute.xlu0 %2807
        %2809 = vrot.lane.b32.xlu0 %v2653, 48
        %v2810 = vpop.permute.xlu0 %2809
        %2811 = vrot.lane.b32.xlu0 %v2654, 48
        %v2812 = vpop.permute.xlu0 %2811
        %2813 = vrot.lane.b32.xlu0 %v2655, 48
        %v2814 = vpop.permute.xlu0 %2813
        %2815 = vrot.lane.b32.xlu0 %v2656, 48
        %v2816 = vpop.permute.xlu0 %2815
        %2817 = vrot.lane.b32.xlu0 %v2657, 48
        %v2818 = vpop.permute.xlu0 %2817
        %2819 = vrot.lane.b32.xlu0 %v2658, 48
        %v2820 = vpop.permute.xlu0 %2819
        %2821 = vrot.lane.b32.xlu0 %v2659, 48
        %v2822 = vpop.permute.xlu0 %2821
        %2823 = vrot.lane.b32.xlu0 %v2660, 48
        %v2824 = vpop.permute.xlu0 %2823
        %2825 = vrot.lane.b32.xlu0 %v2661, 48
        %v2826 = vpop.permute.xlu0 %2825
        %2827 = vrot.lane.b32.xlu0 %v2662, 48
        %v2828 = vpop.permute.xlu0 %2827
        %2829 = vrot.lane.b32.xlu0 %v2663, 48
        %v2830 = vpop.permute.xlu0 %2829
        %2831 = vrot.lane.b32.xlu0 %v2664, 48
        %v2832 = vpop.permute.xlu0 %2831
        %2833 = vrot.lane.b32.xlu0 %v2665, 48
        %v2834 = vpop.permute.xlu0 %2833
        %2835 = vrot.lane.b32.xlu0 %v2666, 48
        %v2836 = vpop.permute.xlu0 %2835
        %2837 = vrot.lane.b32.xlu0 %v2667, 48
        %v2838 = vpop.permute.xlu0 %2837
        %2839 = vrot.lane.b32.xlu0 %v2668, 48
        %v2840 = vpop.permute.xlu0 %2839
        %2841 = vrot.lane.b32.xlu0 %v2669, 48
        %v2842 = vpop.permute.xlu0 %2841
        %2843 = vrot.lane.b32.xlu0 %v2670, 48
        %v2844 = vpop.permute.xlu0 %2843
        %2845 = vrot.lane.b32.xlu0 %v2671, 48
        %v2846 = vpop.permute.xlu0 %2845
        %2847 = vrot.lane.b32.xlu0 %v2672, 48
        %v2848 = vpop.permute.xlu0 %2847
        %2849 = vrot.lane.b32.xlu0 %v2673, 48
        %v2850 = vpop.permute.xlu0 %2849
        %2851 = vrot.lane.b32.xlu0 %v2674, 48
        %v2852 = vpop.permute.xlu0 %2851
        %2853 = vrot.lane.b32.xlu0 %v2675, 48
        %v2854 = vpop.permute.xlu0 %2853
        %2855 = vrot.lane.b32.xlu0 %v2676, 48
        %v2856 = vpop.permute.xlu0 %2855
        %2857 = vrot.lane.b32.xlu0 %v2677, 48
        %v2858 = vpop.permute.xlu0 %2857
        %2859 = vrot.lane.b32.xlu0 %v2678, 48
        %v2860 = vpop.permute.xlu0 %2859
        %2861 = vrot.lane.b32.xlu0 %v2679, 48
        %v2862 = vpop.permute.xlu0 %2861
        %2863 = vrot.lane.b32.xlu0 %v2680, 48
        %v2864 = vpop.permute.xlu0 %2863
        %2865 = vrot.lane.b32.xlu0 %v2681, 48
        %v2866 = vpop.permute.xlu0 %2865
        %2867 = vrot.lane.b32.xlu0 %v2682, 48
        %v2868 = vpop.permute.xlu0 %2867
        %2869 = vrot.lane.b32.xlu0 %v2683, 48
        %v2870 = vpop.permute.xlu0 %2869
        %2871 = vrot.lane.b32.xlu0 %v2684, 48
        %v2872 = vpop.permute.xlu0 %2871
        %2873 = vrot.lane.b32.xlu0 %v2685, 48
        %v2874 = vpop.permute.xlu0 %2873
        %2875 = vrot.lane.b32.xlu0 %v2686, 48
        %v2876 = vpop.permute.xlu0 %2875
        %2877 = vrot.lane.b32.xlu0 %v2687, 48
        %v2878 = vpop.permute.xlu0 %2877
        %2879 = vrot.lane.b32.xlu0 %v2688, 48
        %v2880 = vpop.permute.xlu0 %2879
        %vm2945 = vcmask 458112
        %2946 = vst.msk [vmem:[#allocation3] sm:$0xff] %vm2945, %v2754
        %2947 = vst.msk [vmem:[#allocation3 + $0x8] sm:$0xff] %vm2945, %v2756
        %2948 = vst.msk [vmem:[#allocation3 + $0x10] sm:$0xff] %vm2945, %v2758
        %2949 = vst.msk [vmem:[#allocation3 + $0x18] sm:$0xff] %vm2945, %v2760
        %2950 = vst.msk [vmem:[#allocation3 + $0x20] sm:$0xff] %vm2945, %v2762
        %2951 = vst.msk [vmem:[#allocation3 + $0x28] sm:$0xff] %vm2945, %v2764
        %2952 = vst.msk [vmem:[#allocation3 + $0x30] sm:$0xff] %vm2945, %v2766
        %2953 = vst.msk [vmem:[#allocation3 + $0x38] sm:$0xff] %vm2945, %v2768
        %2954 = vst.msk [vmem:[#allocation3 + $0x40] sm:$0xff] %vm2945, %v2770
        %2955 = vst.msk [vmem:[#allocation3 + $0x48] sm:$0xff] %vm2945, %v2772
        %2956 = vst.msk [vmem:[#allocation3 + $0x50] sm:$0xff] %vm2945, %v2774
        %2957 = vst.msk [vmem:[#allocation3 + $0x58] sm:$0xff] %vm2945, %v2776
        %2958 = vst.msk [vmem:[#allocation3 + $0x60] sm:$0xff] %vm2945, %v2778
        %2959 = vst.msk [vmem:[#allocation3 + $0x68] sm:$0xff] %vm2945, %v2780
        %2960 = vst.msk [vmem:[#allocation3 + $0x70] sm:$0xff] %vm2945, %v2782
        %2961 = vst.msk [vmem:[#allocation3 + $0x78] sm:$0xff] %vm2945, %v2784
        %2962 = vst.msk [vmem:[#allocation3 + $0x80] sm:$0xff] %vm2945, %v2786
        %2963 = vst.msk [vmem:[#allocation3 + $0x88] sm:$0xff] %vm2945, %v2788
        %2964 = vst.msk [vmem:[#allocation3 + $0x90] sm:$0xff] %vm2945, %v2790
        %2965 = vst.msk [vmem:[#allocation3 + $0x98] sm:$0xff] %vm2945, %v2792
        %2966 = vst.msk [vmem:[#allocation3 + $0xa0] sm:$0xff] %vm2945, %v2794
        %2967 = vst.msk [vmem:[#allocation3 + $0xa8] sm:$0xff] %vm2945, %v2796
        %2968 = vst.msk [vmem:[#allocation3 + $0xb0] sm:$0xff] %vm2945, %v2798
        %2969 = vst.msk [vmem:[#allocation3 + $0xb8] sm:$0xff] %vm2945, %v2800
        %2970 = vst.msk [vmem:[#allocation3 + $0xc0] sm:$0xff] %vm2945, %v2802
        %2971 = vst.msk [vmem:[#allocation3 + $0xc8] sm:$0xff] %vm2945, %v2804
        %2972 = vst.msk [vmem:[#allocation3 + $0xd0] sm:$0xff] %vm2945, %v2806
        %2973 = vst.msk [vmem:[#allocation3 + $0xd8] sm:$0xff] %vm2945, %v2808
        %2974 = vst.msk [vmem:[#allocation3 + $0xe0] sm:$0xff] %vm2945, %v2810
        %2975 = vst.msk [vmem:[#allocation3 + $0xe8] sm:$0xff] %vm2945, %v2812
        %2976 = vst.msk [vmem:[#allocation3 + $0xf0] sm:$0xff] %vm2945, %v2814
        %2977 = vst.msk [vmem:[#allocation3 + $0xf8] sm:$0xff] %vm2945, %v2816
        %2978 = vst.msk [vmem:[#allocation3 + $0x100] sm:$0xff] %vm2945, %v2818
        %2979 = vst.msk [vmem:[#allocation3 + $0x108] sm:$0xff] %vm2945, %v2820
        %2980 = vst.msk [vmem:[#allocation3 + $0x110] sm:$0xff] %vm2945, %v2822
        %2981 = vst.msk [vmem:[#allocation3 + $0x118] sm:$0xff] %vm2945, %v2824
        %2982 = vst.msk [vmem:[#allocation3 + $0x120] sm:$0xff] %vm2945, %v2826
        %2983 = vst.msk [vmem:[#allocation3 + $0x128] sm:$0xff] %vm2945, %v2828
        %2984 = vst.msk [vmem:[#allocation3 + $0x130] sm:$0xff] %vm2945, %v2830
        %2985 = vst.msk [vmem:[#allocation3 + $0x138] sm:$0xff] %vm2945, %v2832
        %2986 = vst.msk [vmem:[#allocation3 + $0x140] sm:$0xff] %vm2945, %v2834
        %2987 = vst.msk [vmem:[#allocation3 + $0x148] sm:$0xff] %vm2945, %v2836
        %2988 = vst.msk [vmem:[#allocation3 + $0x150] sm:$0xff] %vm2945, %v2838
        %2989 = vst.msk [vmem:[#allocation3 + $0x158] sm:$0xff] %vm2945, %v2840
        %2990 = vst.msk [vmem:[#allocation3 + $0x160] sm:$0xff] %vm2945, %v2842
        %2991 = vst.msk [vmem:[#allocation3 + $0x168] sm:$0xff] %vm2945, %v2844
        %2992 = vst.msk [vmem:[#allocation3 + $0x170] sm:$0xff] %vm2945, %v2846
        %2993 = vst.msk [vmem:[#allocation3 + $0x178] sm:$0xff] %vm2945, %v2848
        %2994 = vst.msk [vmem:[#allocation3 + $0x180] sm:$0xff] %vm2945, %v2850
        %2995 = vst.msk [vmem:[#allocation3 + $0x188] sm:$0xff] %vm2945, %v2852
        %2996 = vst.msk [vmem:[#allocation3 + $0x190] sm:$0xff] %vm2945, %v2854
        %2997 = vst.msk [vmem:[#allocation3 + $0x198] sm:$0xff] %vm2945, %v2856
        %2998 = vst.msk [vmem:[#allocation3 + $0x1a0] sm:$0xff] %vm2945, %v2858
        %2999 = vst.msk [vmem:[#allocation3 + $0x1a8] sm:$0xff] %vm2945, %v2860
        %3000 = vst.msk [vmem:[#allocation3 + $0x1b0] sm:$0xff] %vm2945, %v2862
        %3001 = vst.msk [vmem:[#allocation3 + $0x1b8] sm:$0xff] %vm2945, %v2864
        %3002 = vst.msk [vmem:[#allocation3 + $0x1c0] sm:$0xff] %vm2945, %v2866
        %3003 = vst.msk [vmem:[#allocation3 + $0x1c8] sm:$0xff] %vm2945, %v2868
        %3004 = vst.msk [vmem:[#allocation3 + $0x1d0] sm:$0xff] %vm2945, %v2870
        %3005 = vst.msk [vmem:[#allocation3 + $0x1d8] sm:$0xff] %vm2945, %v2872
        %3006 = vst.msk [vmem:[#allocation3 + $0x1e0] sm:$0xff] %vm2945, %v2874
        %3007 = vst.msk [vmem:[#allocation3 + $0x1e8] sm:$0xff] %vm2945, %v2876
        %3008 = vst.msk [vmem:[#allocation3 + $0x1f0] sm:$0xff] %vm2945, %v2878
        %3009 = vst.msk [vmem:[#allocation3 + $0x1f8] sm:$0xff] %vm2945, %v2880
        %v3010 = vld [vmem:[#allocation2 + $0x25] sm:$0xff]
        %v3011 = vld [vmem:[#allocation2 + $0x2d] sm:$0xff]
        %v3012 = vld [vmem:[#allocation2 + $0x35] sm:$0xff]
        %v3013 = vld [vmem:[#allocation2 + $0x3d] sm:$0xff]
        %v3014 = vld [vmem:[#allocation2 + $0x45] sm:$0xff]
        %v3015 = vld [vmem:[#allocation2 + $0x4d] sm:$0xff]
        %v3016 = vld [vmem:[#allocation2 + $0x55] sm:$0xff]
        %v3017 = vld [vmem:[#allocation2 + $0x5d] sm:$0xff]
        %v3018 = vld [vmem:[#allocation2 + $0x65] sm:$0xff]
        %v3019 = vld [vmem:[#allocation2 + $0x6d] sm:$0xff]
        %v3020 = vld [vmem:[#allocation2 + $0x75] sm:$0xff]
        %v3021 = vld [vmem:[#allocation2 + $0x7d] sm:$0xff]
        %v3022 = vld [vmem:[#allocation2 + $0x85] sm:$0xff]
        %v3023 = vld [vmem:[#allocation2 + $0x8d] sm:$0xff]
        %v3024 = vld [vmem:[#allocation2 + $0x95] sm:$0xff]
        %v3025 = vld [vmem:[#allocation2 + $0x9d] sm:$0xff]
        %v3026 = vld [vmem:[#allocation2 + $0xa5] sm:$0xff]
        %v3027 = vld [vmem:[#allocation2 + $0xad] sm:$0xff]
        %v3028 = vld [vmem:[#allocation2 + $0xb5] sm:$0xff]
        %v3029 = vld [vmem:[#allocation2 + $0xbd] sm:$0xff]
        %v3030 = vld [vmem:[#allocation2 + $0xc5] sm:$0xff]
        %v3031 = vld [vmem:[#allocation2 + $0xcd] sm:$0xff]
        %v3032 = vld [vmem:[#allocation2 + $0xd5] sm:$0xff]
        %v3033 = vld [vmem:[#allocation2 + $0xdd] sm:$0xff]
        %v3034 = vld [vmem:[#allocation2 + $0xe5] sm:$0xff]
        %v3035 = vld [vmem:[#allocation2 + $0xed] sm:$0xff]
        %v3036 = vld [vmem:[#allocation2 + $0xf5] sm:$0xff]
        %v3037 = vld [vmem:[#allocation2 + $0xfd] sm:$0xff]
        %v3038 = vld [vmem:[#allocation2 + $0x105] sm:$0xff]
        %v3039 = vld [vmem:[#allocation2 + $0x10d] sm:$0xff]
        %v3040 = vld [vmem:[#allocation2 + $0x115] sm:$0xff]
        %v3041 = vld [vmem:[#allocation2 + $0x11d] sm:$0xff]
        %v3042 = vld [vmem:[#allocation2 + $0x125] sm:$0xff]
        %v3043 = vld [vmem:[#allocation2 + $0x12d] sm:$0xff]
        %v3044 = vld [vmem:[#allocation2 + $0x135] sm:$0xff]
        %v3045 = vld [vmem:[#allocation2 + $0x13d] sm:$0xff]
        %v3046 = vld [vmem:[#allocation2 + $0x145] sm:$0xff]
        %v3047 = vld [vmem:[#allocation2 + $0x14d] sm:$0xff]
        %v3048 = vld [vmem:[#allocation2 + $0x155] sm:$0xff]
        %v3049 = vld [vmem:[#allocation2 + $0x15d] sm:$0xff]
        %v3050 = vld [vmem:[#allocation2 + $0x165] sm:$0xff]
        %v3051 = vld [vmem:[#allocation2 + $0x16d] sm:$0xff]
        %v3052 = vld [vmem:[#allocation2 + $0x175] sm:$0xff]
        %v3053 = vld [vmem:[#allocation2 + $0x17d] sm:$0xff]
        %v3054 = vld [vmem:[#allocation2 + $0x185] sm:$0xff]
        %v3055 = vld [vmem:[#allocation2 + $0x18d] sm:$0xff]
        %v3056 = vld [vmem:[#allocation2 + $0x195] sm:$0xff]
        %v3057 = vld [vmem:[#allocation2 + $0x19d] sm:$0xff]
        %v3058 = vld [vmem:[#allocation2 + $0x1a5] sm:$0xff]
        %v3059 = vld [vmem:[#allocation2 + $0x1ad] sm:$0xff]
        %v3060 = vld [vmem:[#allocation2 + $0x1b5] sm:$0xff]
        %v3061 = vld [vmem:[#allocation2 + $0x1bd] sm:$0xff]
        %v3062 = vld [vmem:[#allocation2 + $0x1c5] sm:$0xff]
        %v3063 = vld [vmem:[#allocation2 + $0x1cd] sm:$0xff]
        %v3064 = vld [vmem:[#allocation2 + $0x1d5] sm:$0xff]
        %v3065 = vld [vmem:[#allocation2 + $0x1dd] sm:$0xff]
        %v3066 = vld [vmem:[#allocation2 + $0x1e5] sm:$0xff]
        %v3067 = vld [vmem:[#allocation2 + $0x1ed] sm:$0xff]
        %v3068 = vld [vmem:[#allocation2 + $0x1f5] sm:$0xff]
        %v3069 = vld [vmem:[#allocation2 + $0x1fd] sm:$0xff]
        %v3070 = vld [vmem:[#allocation2 + $0x205] sm:$0xff]
        %v3071 = vld [vmem:[#allocation2 + $0x20d] sm:$0xff]
        %v3072 = vld [vmem:[#allocation2 + $0x215] sm:$0xff]
        %v3073 = vld [vmem:[#allocation2 + $0x21d] sm:$0xff]
        %3138 = vrot.lane.b32.xlu0 %v3010, 56
        %v3139 = vpop.permute.xlu0 %3138
        %3140 = vrot.lane.b32.xlu0 %v3011, 56
        %v3141 = vpop.permute.xlu0 %3140
        %3142 = vrot.lane.b32.xlu0 %v3012, 56
        %v3143 = vpop.permute.xlu0 %3142
        %3144 = vrot.lane.b32.xlu0 %v3013, 56
        %v3145 = vpop.permute.xlu0 %3144
        %3146 = vrot.lane.b32.xlu0 %v3014, 56
        %v3147 = vpop.permute.xlu0 %3146
        %3148 = vrot.lane.b32.xlu0 %v3015, 56
        %v3149 = vpop.permute.xlu0 %3148
        %3150 = vrot.lane.b32.xlu0 %v3016, 56
        %v3151 = vpop.permute.xlu0 %3150
        %3152 = vrot.lane.b32.xlu0 %v3017, 56
        %v3153 = vpop.permute.xlu0 %3152
        %3154 = vrot.lane.b32.xlu0 %v3018, 56
        %v3155 = vpop.permute.xlu0 %3154
        %3156 = vrot.lane.b32.xlu0 %v3019, 56
        %v3157 = vpop.permute.xlu0 %3156
        %3158 = vrot.lane.b32.xlu0 %v3020, 56
        %v3159 = vpop.permute.xlu0 %3158
        %3160 = vrot.lane.b32.xlu0 %v3021, 56
        %v3161 = vpop.permute.xlu0 %3160
        %3162 = vrot.lane.b32.xlu0 %v3022, 56
        %v3163 = vpop.permute.xlu0 %3162
        %3164 = vrot.lane.b32.xlu0 %v3023, 56
        %v3165 = vpop.permute.xlu0 %3164
        %3166 = vrot.lane.b32.xlu0 %v3024, 56
        %v3167 = vpop.permute.xlu0 %3166
        %3168 = vrot.lane.b32.xlu0 %v3025, 56
        %v3169 = vpop.permute.xlu0 %3168
        %3170 = vrot.lane.b32.xlu0 %v3026, 56
        %v3171 = vpop.permute.xlu0 %3170
        %3172 = vrot.lane.b32.xlu0 %v3027, 56
        %v3173 = vpop.permute.xlu0 %3172
        %3174 = vrot.lane.b32.xlu0 %v3028, 56
        %v3175 = vpop.permute.xlu0 %3174
        %3176 = vrot.lane.b32.xlu0 %v3029, 56
        %v3177 = vpop.permute.xlu0 %3176
        %3178 = vrot.lane.b32.xlu0 %v3030, 56
        %v3179 = vpop.permute.xlu0 %3178
        %3180 = vrot.lane.b32.xlu0 %v3031, 56
        %v3181 = vpop.permute.xlu0 %3180
        %3182 = vrot.lane.b32.xlu0 %v3032, 56
        %v3183 = vpop.permute.xlu0 %3182
        %3184 = vrot.lane.b32.xlu0 %v3033, 56
        %v3185 = vpop.permute.xlu0 %3184
        %3186 = vrot.lane.b32.xlu0 %v3034, 56
        %v3187 = vpop.permute.xlu0 %3186
        %3188 = vrot.lane.b32.xlu0 %v3035, 56
        %v3189 = vpop.permute.xlu0 %3188
        %3190 = vrot.lane.b32.xlu0 %v3036, 56
        %v3191 = vpop.permute.xlu0 %3190
        %3192 = vrot.lane.b32.xlu0 %v3037, 56
        %v3193 = vpop.permute.xlu0 %3192
        %3194 = vrot.lane.b32.xlu0 %v3038, 56
        %v3195 = vpop.permute.xlu0 %3194
        %3196 = vrot.lane.b32.xlu0 %v3039, 56
        %v3197 = vpop.permute.xlu0 %3196
        %3198 = vrot.lane.b32.xlu0 %v3040, 56
        %v3199 = vpop.permute.xlu0 %3198
        %3200 = vrot.lane.b32.xlu0 %v3041, 56
        %v3201 = vpop.permute.xlu0 %3200
        %3202 = vrot.lane.b32.xlu0 %v3042, 56
        %v3203 = vpop.permute.xlu0 %3202
        %3204 = vrot.lane.b32.xlu0 %v3043, 56
        %v3205 = vpop.permute.xlu0 %3204
        %3206 = vrot.lane.b32.xlu0 %v3044, 56
        %v3207 = vpop.permute.xlu0 %3206
        %3208 = vrot.lane.b32.xlu0 %v3045, 56
        %v3209 = vpop.permute.xlu0 %3208
        %3210 = vrot.lane.b32.xlu0 %v3046, 56
        %v3211 = vpop.permute.xlu0 %3210
        %3212 = vrot.lane.b32.xlu0 %v3047, 56
        %v3213 = vpop.permute.xlu0 %3212
        %3214 = vrot.lane.b32.xlu0 %v3048, 56
        %v3215 = vpop.permute.xlu0 %3214
        %3216 = vrot.lane.b32.xlu0 %v3049, 56
        %v3217 = vpop.permute.xlu0 %3216
        %3218 = vrot.lane.b32.xlu0 %v3050, 56
        %v3219 = vpop.permute.xlu0 %3218
        %3220 = vrot.lane.b32.xlu0 %v3051, 56
        %v3221 = vpop.permute.xlu0 %3220
        %3222 = vrot.lane.b32.xlu0 %v3052, 56
        %v3223 = vpop.permute.xlu0 %3222
        %3224 = vrot.lane.b32.xlu0 %v3053, 56
        %v3225 = vpop.permute.xlu0 %3224
        %3226 = vrot.lane.b32.xlu0 %v3054, 56
        %v3227 = vpop.permute.xlu0 %3226
        %3228 = vrot.lane.b32.xlu0 %v3055, 56
        %v3229 = vpop.permute.xlu0 %3228
        %3230 = vrot.lane.b32.xlu0 %v3056, 56
        %v3231 = vpop.permute.xlu0 %3230
        %3232 = vrot.lane.b32.xlu0 %v3057, 56
        %v3233 = vpop.permute.xlu0 %3232
        %3234 = vrot.lane.b32.xlu0 %v3058, 56
        %v3235 = vpop.permute.xlu0 %3234
        %3236 = vrot.lane.b32.xlu0 %v3059, 56
        %v3237 = vpop.permute.xlu0 %3236
        %3238 = vrot.lane.b32.xlu0 %v3060, 56
        %v3239 = vpop.permute.xlu0 %3238
        %3240 = vrot.lane.b32.xlu0 %v3061, 56
        %v3241 = vpop.permute.xlu0 %3240
        %3242 = vrot.lane.b32.xlu0 %v3062, 56
        %v3243 = vpop.permute.xlu0 %3242
        %3244 = vrot.lane.b32.xlu0 %v3063, 56
        %v3245 = vpop.permute.xlu0 %3244
        %3246 = vrot.lane.b32.xlu0 %v3064, 56
        %v3247 = vpop.permute.xlu0 %3246
        %3248 = vrot.lane.b32.xlu0 %v3065, 56
        %v3249 = vpop.permute.xlu0 %3248
        %3250 = vrot.lane.b32.xlu0 %v3066, 56
        %v3251 = vpop.permute.xlu0 %3250
        %3252 = vrot.lane.b32.xlu0 %v3067, 56
        %v3253 = vpop.permute.xlu0 %3252
        %3254 = vrot.lane.b32.xlu0 %v3068, 56
        %v3255 = vpop.permute.xlu0 %3254
        %3256 = vrot.lane.b32.xlu0 %v3069, 56
        %v3257 = vpop.permute.xlu0 %3256
        %3258 = vrot.lane.b32.xlu0 %v3070, 56
        %v3259 = vpop.permute.xlu0 %3258
        %3260 = vrot.lane.b32.xlu0 %v3071, 56
        %v3261 = vpop.permute.xlu0 %3260
        %3262 = vrot.lane.b32.xlu0 %v3072, 56
        %v3263 = vpop.permute.xlu0 %3262
        %3264 = vrot.lane.b32.xlu0 %v3073, 56
        %v3265 = vpop.permute.xlu0 %3264
        %vm3330 = vcmask 523712
        %3331 = vst.msk [vmem:[#allocation3] sm:$0xff] %vm3330, %v3139
        %3332 = vst.msk [vmem:[#allocation3 + $0x8] sm:$0xff] %vm3330, %v3141
        %3333 = vst.msk [vmem:[#allocation3 + $0x10] sm:$0xff] %vm3330, %v3143
        %3334 = vst.msk [vmem:[#allocation3 + $0x18] sm:$0xff] %vm3330, %v3145
        %3335 = vst.msk [vmem:[#allocation3 + $0x20] sm:$0xff] %vm3330, %v3147
        %3336 = vst.msk [vmem:[#allocation3 + $0x28] sm:$0xff] %vm3330, %v3149
        %3337 = vst.msk [vmem:[#allocation3 + $0x30] sm:$0xff] %vm3330, %v3151
        %3338 = vst.msk [vmem:[#allocation3 + $0x38] sm:$0xff] %vm3330, %v3153
        %3339 = vst.msk [vmem:[#allocation3 + $0x40] sm:$0xff] %vm3330, %v3155
        %3340 = vst.msk [vmem:[#allocation3 + $0x48] sm:$0xff] %vm3330, %v3157
        %3341 = vst.msk [vmem:[#allocation3 + $0x50] sm:$0xff] %vm3330, %v3159
        %3342 = vst.msk [vmem:[#allocation3 + $0x58] sm:$0xff] %vm3330, %v3161
        %3343 = vst.msk [vmem:[#allocation3 + $0x60] sm:$0xff] %vm3330, %v3163
        %3344 = vst.msk [vmem:[#allocation3 + $0x68] sm:$0xff] %vm3330, %v3165
        %3345 = vst.msk [vmem:[#allocation3 + $0x70] sm:$0xff] %vm3330, %v3167
        %3346 = vst.msk [vmem:[#allocation3 + $0x78] sm:$0xff] %vm3330, %v3169
        %3347 = vst.msk [vmem:[#allocation3 + $0x80] sm:$0xff] %vm3330, %v3171
        %3348 = vst.msk [vmem:[#allocation3 + $0x88] sm:$0xff] %vm3330, %v3173
        %3349 = vst.msk [vmem:[#allocation3 + $0x90] sm:$0xff] %vm3330, %v3175
        %3350 = vst.msk [vmem:[#allocation3 + $0x98] sm:$0xff] %vm3330, %v3177
        %3351 = vst.msk [vmem:[#allocation3 + $0xa0] sm:$0xff] %vm3330, %v3179
        %3352 = vst.msk [vmem:[#allocation3 + $0xa8] sm:$0xff] %vm3330, %v3181
        %3353 = vst.msk [vmem:[#allocation3 + $0xb0] sm:$0xff] %vm3330, %v3183
        %3354 = vst.msk [vmem:[#allocation3 + $0xb8] sm:$0xff] %vm3330, %v3185
        %3355 = vst.msk [vmem:[#allocation3 + $0xc0] sm:$0xff] %vm3330, %v3187
        %3356 = vst.msk [vmem:[#allocation3 + $0xc8] sm:$0xff] %vm3330, %v3189
        %3357 = vst.msk [vmem:[#allocation3 + $0xd0] sm:$0xff] %vm3330, %v3191
        %3358 = vst.msk [vmem:[#allocation3 + $0xd8] sm:$0xff] %vm3330, %v3193
        %3359 = vst.msk [vmem:[#allocation3 + $0xe0] sm:$0xff] %vm3330, %v3195
        %3360 = vst.msk [vmem:[#allocation3 + $0xe8] sm:$0xff] %vm3330, %v3197
        %3361 = vst.msk [vmem:[#allocation3 + $0xf0] sm:$0xff] %vm3330, %v3199
        %3362 = vst.msk [vmem:[#allocation3 + $0xf8] sm:$0xff] %vm3330, %v3201
        %3363 = vst.msk [vmem:[#allocation3 + $0x100] sm:$0xff] %vm3330, %v3203
        %3364 = vst.msk [vmem:[#allocation3 + $0x108] sm:$0xff] %vm3330, %v3205
        %3365 = vst.msk [vmem:[#allocation3 + $0x110] sm:$0xff] %vm3330, %v3207
        %3366 = vst.msk [vmem:[#allocation3 + $0x118] sm:$0xff] %vm3330, %v3209
        %3367 = vst.msk [vmem:[#allocation3 + $0x120] sm:$0xff] %vm3330, %v3211
        %3368 = vst.msk [vmem:[#allocation3 + $0x128] sm:$0xff] %vm3330, %v3213
        %3369 = vst.msk [vmem:[#allocation3 + $0x130] sm:$0xff] %vm3330, %v3215
        %3370 = vst.msk [vmem:[#allocation3 + $0x138] sm:$0xff] %vm3330, %v3217
        %3371 = vst.msk [vmem:[#allocation3 + $0x140] sm:$0xff] %vm3330, %v3219
        %3372 = vst.msk [vmem:[#allocation3 + $0x148] sm:$0xff] %vm3330, %v3221
        %3373 = vst.msk [vmem:[#allocation3 + $0x150] sm:$0xff] %vm3330, %v3223
        %3374 = vst.msk [vmem:[#allocation3 + $0x158] sm:$0xff] %vm3330, %v3225
        %3375 = vst.msk [vmem:[#allocation3 + $0x160] sm:$0xff] %vm3330, %v3227
        %3376 = vst.msk [vmem:[#allocation3 + $0x168] sm:$0xff] %vm3330, %v3229
        %3377 = vst.msk [vmem:[#allocation3 + $0x170] sm:$0xff] %vm3330, %v3231
        %3378 = vst.msk [vmem:[#allocation3 + $0x178] sm:$0xff] %vm3330, %v3233
        %3379 = vst.msk [vmem:[#allocation3 + $0x180] sm:$0xff] %vm3330, %v3235
        %3380 = vst.msk [vmem:[#allocation3 + $0x188] sm:$0xff] %vm3330, %v3237
        %3381 = vst.msk [vmem:[#allocation3 + $0x190] sm:$0xff] %vm3330, %v3239
        %3382 = vst.msk [vmem:[#allocation3 + $0x198] sm:$0xff] %vm3330, %v3241
        %3383 = vst.msk [vmem:[#allocation3 + $0x1a0] sm:$0xff] %vm3330, %v3243
        %3384 = vst.msk [vmem:[#allocation3 + $0x1a8] sm:$0xff] %vm3330, %v3245
        %3385 = vst.msk [vmem:[#allocation3 + $0x1b0] sm:$0xff] %vm3330, %v3247
        %3386 = vst.msk [vmem:[#allocation3 + $0x1b8] sm:$0xff] %vm3330, %v3249
        %3387 = vst.msk [vmem:[#allocation3 + $0x1c0] sm:$0xff] %vm3330, %v3251
        %3388 = vst.msk [vmem:[#allocation3 + $0x1c8] sm:$0xff] %vm3330, %v3253
        %3389 = vst.msk [vmem:[#allocation3 + $0x1d0] sm:$0xff] %vm3330, %v3255
        %3390 = vst.msk [vmem:[#allocation3 + $0x1d8] sm:$0xff] %vm3330, %v3257
        %3391 = vst.msk [vmem:[#allocation3 + $0x1e0] sm:$0xff] %vm3330, %v3259
        %3392 = vst.msk [vmem:[#allocation3 + $0x1e8] sm:$0xff] %vm3330, %v3261
        %3393 = vst.msk [vmem:[#allocation3 + $0x1f0] sm:$0xff] %vm3330, %v3263
        %3394 = vst.msk [vmem:[#allocation3 + $0x1f8] sm:$0xff] %vm3330, %v3265
        %v3395 = vld [vmem:[#allocation2 + $0x26] sm:$0xff]
        %v3396 = vld [vmem:[#allocation2 + $0x2e] sm:$0xff]
        %v3397 = vld [vmem:[#allocation2 + $0x36] sm:$0xff]
        %v3398 = vld [vmem:[#allocation2 + $0x3e] sm:$0xff]
        %v3399 = vld [vmem:[#allocation2 + $0x46] sm:$0xff]
        %v3400 = vld [vmem:[#allocation2 + $0x4e] sm:$0xff]
        %v3401 = vld [vmem:[#allocation2 + $0x56] sm:$0xff]
        %v3402 = vld [vmem:[#allocation2 + $0x5e] sm:$0xff]
        %v3403 = vld [vmem:[#allocation2 + $0x66] sm:$0xff]
        %v3404 = vld [vmem:[#allocation2 + $0x6e] sm:$0xff]
        %v3405 = vld [vmem:[#allocation2 + $0x76] sm:$0xff]
        %v3406 = vld [vmem:[#allocation2 + $0x7e] sm:$0xff]
        %v3407 = vld [vmem:[#allocation2 + $0x86] sm:$0xff]
        %v3408 = vld [vmem:[#allocation2 + $0x8e] sm:$0xff]
        %v3409 = vld [vmem:[#allocation2 + $0x96] sm:$0xff]
        %v3410 = vld [vmem:[#allocation2 + $0x9e] sm:$0xff]
        %v3411 = vld [vmem:[#allocation2 + $0xa6] sm:$0xff]
        %v3412 = vld [vmem:[#allocation2 + $0xae] sm:$0xff]
        %v3413 = vld [vmem:[#allocation2 + $0xb6] sm:$0xff]
        %v3414 = vld [vmem:[#allocation2 + $0xbe] sm:$0xff]
        %v3415 = vld [vmem:[#allocation2 + $0xc6] sm:$0xff]
        %v3416 = vld [vmem:[#allocation2 + $0xce] sm:$0xff]
        %v3417 = vld [vmem:[#allocation2 + $0xd6] sm:$0xff]
        %v3418 = vld [vmem:[#allocation2 + $0xde] sm:$0xff]
        %v3419 = vld [vmem:[#allocation2 + $0xe6] sm:$0xff]
        %v3420 = vld [vmem:[#allocation2 + $0xee] sm:$0xff]
        %v3421 = vld [vmem:[#allocation2 + $0xf6] sm:$0xff]
        %v3422 = vld [vmem:[#allocation2 + $0xfe] sm:$0xff]
        %v3423 = vld [vmem:[#allocation2 + $0x106] sm:$0xff]
        %v3424 = vld [vmem:[#allocation2 + $0x10e] sm:$0xff]
        %v3425 = vld [vmem:[#allocation2 + $0x116] sm:$0xff]
        %v3426 = vld [vmem:[#allocation2 + $0x11e] sm:$0xff]
        %v3427 = vld [vmem:[#allocation2 + $0x126] sm:$0xff]
        %v3428 = vld [vmem:[#allocation2 + $0x12e] sm:$0xff]
        %v3429 = vld [vmem:[#allocation2 + $0x136] sm:$0xff]
        %v3430 = vld [vmem:[#allocation2 + $0x13e] sm:$0xff]
        %v3431 = vld [vmem:[#allocation2 + $0x146] sm:$0xff]
        %v3432 = vld [vmem:[#allocation2 + $0x14e] sm:$0xff]
        %v3433 = vld [vmem:[#allocation2 + $0x156] sm:$0xff]
        %v3434 = vld [vmem:[#allocation2 + $0x15e] sm:$0xff]
        %v3435 = vld [vmem:[#allocation2 + $0x166] sm:$0xff]
        %v3436 = vld [vmem:[#allocation2 + $0x16e] sm:$0xff]
        %v3437 = vld [vmem:[#allocation2 + $0x176] sm:$0xff]
        %v3438 = vld [vmem:[#allocation2 + $0x17e] sm:$0xff]
        %v3439 = vld [vmem:[#allocation2 + $0x186] sm:$0xff]
        %v3440 = vld [vmem:[#allocation2 + $0x18e] sm:$0xff]
        %v3441 = vld [vmem:[#allocation2 + $0x196] sm:$0xff]
        %v3442 = vld [vmem:[#allocation2 + $0x19e] sm:$0xff]
        %v3443 = vld [vmem:[#allocation2 + $0x1a6] sm:$0xff]
        %v3444 = vld [vmem:[#allocation2 + $0x1ae] sm:$0xff]
        %v3445 = vld [vmem:[#allocation2 + $0x1b6] sm:$0xff]
        %v3446 = vld [vmem:[#allocation2 + $0x1be] sm:$0xff]
        %v3447 = vld [vmem:[#allocation2 + $0x1c6] sm:$0xff]
        %v3448 = vld [vmem:[#allocation2 + $0x1ce] sm:$0xff]
        %v3449 = vld [vmem:[#allocation2 + $0x1d6] sm:$0xff]
        %v3450 = vld [vmem:[#allocation2 + $0x1de] sm:$0xff]
        %v3451 = vld [vmem:[#allocation2 + $0x1e6] sm:$0xff]
        %v3452 = vld [vmem:[#allocation2 + $0x1ee] sm:$0xff]
        %v3453 = vld [vmem:[#allocation2 + $0x1f6] sm:$0xff]
        %v3454 = vld [vmem:[#allocation2 + $0x1fe] sm:$0xff]
        %v3455 = vld [vmem:[#allocation2 + $0x206] sm:$0xff]
        %v3456 = vld [vmem:[#allocation2 + $0x20e] sm:$0xff]
        %v3457 = vld [vmem:[#allocation2 + $0x216] sm:$0xff]
        %v3458 = vld [vmem:[#allocation2 + $0x21e] sm:$0xff]
        %3523 = vrot.lane.b32.xlu0 %v3395, 64
        %v3524 = vpop.permute.xlu0 %3523
        %3525 = vrot.lane.b32.xlu0 %v3396, 64
        %v3526 = vpop.permute.xlu0 %3525
        %3527 = vrot.lane.b32.xlu0 %v3397, 64
        %v3528 = vpop.permute.xlu0 %3527
        %3529 = vrot.lane.b32.xlu0 %v3398, 64
        %v3530 = vpop.permute.xlu0 %3529
        %3531 = vrot.lane.b32.xlu0 %v3399, 64
        %v3532 = vpop.permute.xlu0 %3531
        %3533 = vrot.lane.b32.xlu0 %v3400, 64
        %v3534 = vpop.permute.xlu0 %3533
        %3535 = vrot.lane.b32.xlu0 %v3401, 64
        %v3536 = vpop.permute.xlu0 %3535
        %3537 = vrot.lane.b32.xlu0 %v3402, 64
        %v3538 = vpop.permute.xlu0 %3537
        %3539 = vrot.lane.b32.xlu0 %v3403, 64
        %v3540 = vpop.permute.xlu0 %3539
        %3541 = vrot.lane.b32.xlu0 %v3404, 64
        %v3542 = vpop.permute.xlu0 %3541
        %3543 = vrot.lane.b32.xlu0 %v3405, 64
        %v3544 = vpop.permute.xlu0 %3543
        %3545 = vrot.lane.b32.xlu0 %v3406, 64
        %v3546 = vpop.permute.xlu0 %3545
        %3547 = vrot.lane.b32.xlu0 %v3407, 64
        %v3548 = vpop.permute.xlu0 %3547
        %3549 = vrot.lane.b32.xlu0 %v3408, 64
        %v3550 = vpop.permute.xlu0 %3549
        %3551 = vrot.lane.b32.xlu0 %v3409, 64
        %v3552 = vpop.permute.xlu0 %3551
        %3553 = vrot.lane.b32.xlu0 %v3410, 64
        %v3554 = vpop.permute.xlu0 %3553
        %3555 = vrot.lane.b32.xlu0 %v3411, 64
        %v3556 = vpop.permute.xlu0 %3555
        %3557 = vrot.lane.b32.xlu0 %v3412, 64
        %v3558 = vpop.permute.xlu0 %3557
        %3559 = vrot.lane.b32.xlu0 %v3413, 64
        %v3560 = vpop.permute.xlu0 %3559
        %3561 = vrot.lane.b32.xlu0 %v3414, 64
        %v3562 = vpop.permute.xlu0 %3561
        %3563 = vrot.lane.b32.xlu0 %v3415, 64
        %v3564 = vpop.permute.xlu0 %3563
        %3565 = vrot.lane.b32.xlu0 %v3416, 64
        %v3566 = vpop.permute.xlu0 %3565
        %3567 = vrot.lane.b32.xlu0 %v3417, 64
        %v3568 = vpop.permute.xlu0 %3567
        %3569 = vrot.lane.b32.xlu0 %v3418, 64
        %v3570 = vpop.permute.xlu0 %3569
        %3571 = vrot.lane.b32.xlu0 %v3419, 64
        %v3572 = vpop.permute.xlu0 %3571
        %3573 = vrot.lane.b32.xlu0 %v3420, 64
        %v3574 = vpop.permute.xlu0 %3573
        %3575 = vrot.lane.b32.xlu0 %v3421, 64
        %v3576 = vpop.permute.xlu0 %3575
        %3577 = vrot.lane.b32.xlu0 %v3422, 64
        %v3578 = vpop.permute.xlu0 %3577
        %3579 = vrot.lane.b32.xlu0 %v3423, 64
        %v3580 = vpop.permute.xlu0 %3579
        %3581 = vrot.lane.b32.xlu0 %v3424, 64
        %v3582 = vpop.permute.xlu0 %3581
        %3583 = vrot.lane.b32.xlu0 %v3425, 64
        %v3584 = vpop.permute.xlu0 %3583
        %3585 = vrot.lane.b32.xlu0 %v3426, 64
        %v3586 = vpop.permute.xlu0 %3585
        %3587 = vrot.lane.b32.xlu0 %v3427, 64
        %v3588 = vpop.permute.xlu0 %3587
        %3589 = vrot.lane.b32.xlu0 %v3428, 64
        %v3590 = vpop.permute.xlu0 %3589
        %3591 = vrot.lane.b32.xlu0 %v3429, 64
        %v3592 = vpop.permute.xlu0 %3591
        %3593 = vrot.lane.b32.xlu0 %v3430, 64
        %v3594 = vpop.permute.xlu0 %3593
        %3595 = vrot.lane.b32.xlu0 %v3431, 64
        %v3596 = vpop.permute.xlu0 %3595
        %3597 = vrot.lane.b32.xlu0 %v3432, 64
        %v3598 = vpop.permute.xlu0 %3597
        %3599 = vrot.lane.b32.xlu0 %v3433, 64
        %v3600 = vpop.permute.xlu0 %3599
        %3601 = vrot.lane.b32.xlu0 %v3434, 64
        %v3602 = vpop.permute.xlu0 %3601
        %3603 = vrot.lane.b32.xlu0 %v3435, 64
        %v3604 = vpop.permute.xlu0 %3603
        %3605 = vrot.lane.b32.xlu0 %v3436, 64
        %v3606 = vpop.permute.xlu0 %3605
        %3607 = vrot.lane.b32.xlu0 %v3437, 64
        %v3608 = vpop.permute.xlu0 %3607
        %3609 = vrot.lane.b32.xlu0 %v3438, 64
        %v3610 = vpop.permute.xlu0 %3609
        %3611 = vrot.lane.b32.xlu0 %v3439, 64
        %v3612 = vpop.permute.xlu0 %3611
        %3613 = vrot.lane.b32.xlu0 %v3440, 64
        %v3614 = vpop.permute.xlu0 %3613
        %3615 = vrot.lane.b32.xlu0 %v3441, 64
        %v3616 = vpop.permute.xlu0 %3615
        %3617 = vrot.lane.b32.xlu0 %v3442, 64
        %v3618 = vpop.permute.xlu0 %3617
        %3619 = vrot.lane.b32.xlu0 %v3443, 64
        %v3620 = vpop.permute.xlu0 %3619
        %3621 = vrot.lane.b32.xlu0 %v3444, 64
        %v3622 = vpop.permute.xlu0 %3621
        %3623 = vrot.lane.b32.xlu0 %v3445, 64
        %v3624 = vpop.permute.xlu0 %3623
        %3625 = vrot.lane.b32.xlu0 %v3446, 64
        %v3626 = vpop.permute.xlu0 %3625
        %3627 = vrot.lane.b32.xlu0 %v3447, 64
        %v3628 = vpop.permute.xlu0 %3627
        %3629 = vrot.lane.b32.xlu0 %v3448, 64
        %v3630 = vpop.permute.xlu0 %3629
        %3631 = vrot.lane.b32.xlu0 %v3449, 64
        %v3632 = vpop.permute.xlu0 %3631
        %3633 = vrot.lane.b32.xlu0 %v3450, 64
        %v3634 = vpop.permute.xlu0 %3633
        %3635 = vrot.lane.b32.xlu0 %v3451, 64
        %v3636 = vpop.permute.xlu0 %3635
        %3637 = vrot.lane.b32.xlu0 %v3452, 64
        %v3638 = vpop.permute.xlu0 %3637
        %3639 = vrot.lane.b32.xlu0 %v3453, 64
        %v3640 = vpop.permute.xlu0 %3639
        %3641 = vrot.lane.b32.xlu0 %v3454, 64
        %v3642 = vpop.permute.xlu0 %3641
        %3643 = vrot.lane.b32.xlu0 %v3455, 64
        %v3644 = vpop.permute.xlu0 %3643
        %3645 = vrot.lane.b32.xlu0 %v3456, 64
        %v3646 = vpop.permute.xlu0 %3645
        %3647 = vrot.lane.b32.xlu0 %v3457, 64
        %v3648 = vpop.permute.xlu0 %3647
        %3649 = vrot.lane.b32.xlu0 %v3458, 64
        %v3650 = vpop.permute.xlu0 %3649
        %vm3715 = vcmask 589312
        %3716 = vst.msk [vmem:[#allocation3] sm:$0xff] %vm3715, %v3524
        %3717 = vst.msk [vmem:[#allocation3 + $0x8] sm:$0xff] %vm3715, %v3526
        %3718 = vst.msk [vmem:[#allocation3 + $0x10] sm:$0xff] %vm3715, %v3528
        %3719 = vst.msk [vmem:[#allocation3 + $0x18] sm:$0xff] %vm3715, %v3530
        %3720 = vst.msk [vmem:[#allocation3 + $0x20] sm:$0xff] %vm3715, %v3532
        %3721 = vst.msk [vmem:[#allocation3 + $0x28] sm:$0xff] %vm3715, %v3534
        %3722 = vst.msk [vmem:[#allocation3 + $0x30] sm:$0xff] %vm3715, %v3536
        %3723 = vst.msk [vmem:[#allocation3 + $0x38] sm:$0xff] %vm3715, %v3538
        %3724 = vst.msk [vmem:[#allocation3 + $0x40] sm:$0xff] %vm3715, %v3540
        %3725 = vst.msk [vmem:[#allocation3 + $0x48] sm:$0xff] %vm3715, %v3542
        %3726 = vst.msk [vmem:[#allocation3 + $0x50] sm:$0xff] %vm3715, %v3544
        %3727 = vst.msk [vmem:[#allocation3 + $0x58] sm:$0xff] %vm3715, %v3546
        %3728 = vst.msk [vmem:[#allocation3 + $0x60] sm:$0xff] %vm3715, %v3548
        %3729 = vst.msk [vmem:[#allocation3 + $0x68] sm:$0xff] %vm3715, %v3550
        %3730 = vst.msk [vmem:[#allocation3 + $0x70] sm:$0xff] %vm3715, %v3552
        %3731 = vst.msk [vmem:[#allocation3 + $0x78] sm:$0xff] %vm3715, %v3554
        %3732 = vst.msk [vmem:[#allocation3 + $0x80] sm:$0xff] %vm3715, %v3556
        %3733 = vst.msk [vmem:[#allocation3 + $0x88] sm:$0xff] %vm3715, %v3558
        %3734 = vst.msk [vmem:[#allocation3 + $0x90] sm:$0xff] %vm3715, %v3560
        %3735 = vst.msk [vmem:[#allocation3 + $0x98] sm:$0xff] %vm3715, %v3562
        %3736 = vst.msk [vmem:[#allocation3 + $0xa0] sm:$0xff] %vm3715, %v3564
        %3737 = vst.msk [vmem:[#allocation3 + $0xa8] sm:$0xff] %vm3715, %v3566
        %3738 = vst.msk [vmem:[#allocation3 + $0xb0] sm:$0xff] %vm3715, %v3568
        %3739 = vst.msk [vmem:[#allocation3 + $0xb8] sm:$0xff] %vm3715, %v3570
        %3740 = vst.msk [vmem:[#allocation3 + $0xc0] sm:$0xff] %vm3715, %v3572
        %3741 = vst.msk [vmem:[#allocation3 + $0xc8] sm:$0xff] %vm3715, %v3574
        %3742 = vst.msk [vmem:[#allocation3 + $0xd0] sm:$0xff] %vm3715, %v3576
        %3743 = vst.msk [vmem:[#allocation3 + $0xd8] sm:$0xff] %vm3715, %v3578
        %3744 = vst.msk [vmem:[#allocation3 + $0xe0] sm:$0xff] %vm3715, %v3580
        %3745 = vst.msk [vmem:[#allocation3 + $0xe8] sm:$0xff] %vm3715, %v3582
        %3746 = vst.msk [vmem:[#allocation3 + $0xf0] sm:$0xff] %vm3715, %v3584
        %3747 = vst.msk [vmem:[#allocation3 + $0xf8] sm:$0xff] %vm3715, %v3586
        %3748 = vst.msk [vmem:[#allocation3 + $0x100] sm:$0xff] %vm3715, %v3588
        %3749 = vst.msk [vmem:[#allocation3 + $0x108] sm:$0xff] %vm3715, %v3590
        %3750 = vst.msk [vmem:[#allocation3 + $0x110] sm:$0xff] %vm3715, %v3592
        %3751 = vst.msk [vmem:[#allocation3 + $0x118] sm:$0xff] %vm3715, %v3594
        %3752 = vst.msk [vmem:[#allocation3 + $0x120] sm:$0xff] %vm3715, %v3596
        %3753 = vst.msk [vmem:[#allocation3 + $0x128] sm:$0xff] %vm3715, %v3598
        %3754 = vst.msk [vmem:[#allocation3 + $0x130] sm:$0xff] %vm3715, %v3600
        %3755 = vst.msk [vmem:[#allocation3 + $0x138] sm:$0xff] %vm3715, %v3602
        %3756 = vst.msk [vmem:[#allocation3 + $0x140] sm:$0xff] %vm3715, %v3604
        %3757 = vst.msk [vmem:[#allocation3 + $0x148] sm:$0xff] %vm3715, %v3606
        %3758 = vst.msk [vmem:[#allocation3 + $0x150] sm:$0xff] %vm3715, %v3608
        %3759 = vst.msk [vmem:[#allocation3 + $0x158] sm:$0xff] %vm3715, %v3610
        %3760 = vst.msk [vmem:[#allocation3 + $0x160] sm:$0xff] %vm3715, %v3612
        %3761 = vst.msk [vmem:[#allocation3 + $0x168] sm:$0xff] %vm3715, %v3614
        %3762 = vst.msk [vmem:[#allocation3 + $0x170] sm:$0xff] %vm3715, %v3616
        %3763 = vst.msk [vmem:[#allocation3 + $0x178] sm:$0xff] %vm3715, %v3618
        %3764 = vst.msk [vmem:[#allocation3 + $0x180] sm:$0xff] %vm3715, %v3620
        %3765 = vst.msk [vmem:[#allocation3 + $0x188] sm:$0xff] %vm3715, %v3622
        %3766 = vst.msk [vmem:[#allocation3 + $0x190] sm:$0xff] %vm3715, %v3624
        %3767 = vst.msk [vmem:[#allocation3 + $0x198] sm:$0xff] %vm3715, %v3626
        %3768 = vst.msk [vmem:[#allocation3 + $0x1a0] sm:$0xff] %vm3715, %v3628
        %3769 = vst.msk [vmem:[#allocation3 + $0x1a8] sm:$0xff] %vm3715, %v3630
        %3770 = vst.msk [vmem:[#allocation3 + $0x1b0] sm:$0xff] %vm3715, %v3632
        %3771 = vst.msk [vmem:[#allocation3 + $0x1b8] sm:$0xff] %vm3715, %v3634
        %3772 = vst.msk [vmem:[#allocation3 + $0x1c0] sm:$0xff] %vm3715, %v3636
        %3773 = vst.msk [vmem:[#allocation3 + $0x1c8] sm:$0xff] %vm3715, %v3638
        %3774 = vst.msk [vmem:[#allocation3 + $0x1d0] sm:$0xff] %vm3715, %v3640
        %3775 = vst.msk [vmem:[#allocation3 + $0x1d8] sm:$0xff] %vm3715, %v3642
        %3776 = vst.msk [vmem:[#allocation3 + $0x1e0] sm:$0xff] %vm3715, %v3644
        %3777 = vst.msk [vmem:[#allocation3 + $0x1e8] sm:$0xff] %vm3715, %v3646
        %3778 = vst.msk [vmem:[#allocation3 + $0x1f0] sm:$0xff] %vm3715, %v3648
        %3779 = vst.msk [vmem:[#allocation3 + $0x1f8] sm:$0xff] %vm3715, %v3650
        %v3780 = vld [vmem:[#allocation3] sm:$0xff]
        %v3781 = vld [vmem:[#allocation3 + $0x8] sm:$0xff]
        %v3782 = vld [vmem:[#allocation3 + $0x10] sm:$0xff]
        %v3783 = vld [vmem:[#allocation3 + $0x18] sm:$0xff]
        %v3784 = vld [vmem:[#allocation3 + $0x20] sm:$0xff]
        %v3785 = vld [vmem:[#allocation3 + $0x28] sm:$0xff]
        %v3786 = vld [vmem:[#allocation3 + $0x30] sm:$0xff]
        %v3787 = vld [vmem:[#allocation3 + $0x38] sm:$0xff]
        %v3788 = vld [vmem:[#allocation3 + $0x40] sm:$0xff]
        %v3789 = vld [vmem:[#allocation3 + $0x48] sm:$0xff]
        %v3790 = vld [vmem:[#allocation3 + $0x50] sm:$0xff]
        %v3791 = vld [vmem:[#allocation3 + $0x58] sm:$0xff]
        %v3792 = vld [vmem:[#allocation3 + $0x60] sm:$0xff]
        %v3793 = vld [vmem:[#allocation3 + $0x68] sm:$0xff]
        %v3794 = vld [vmem:[#allocation3 + $0x70] sm:$0xff]
        %v3795 = vld [vmem:[#allocation3 + $0x78] sm:$0xff]
        %v3796 = vld [vmem:[#allocation3 + $0x80] sm:$0xff]
        %v3797 = vld [vmem:[#allocation3 + $0x88] sm:$0xff]
        %v3798 = vld [vmem:[#allocation3 + $0x90] sm:$0xff]
        %v3799 = vld [vmem:[#allocation3 + $0x98] sm:$0xff]
        %v3800 = vld [vmem:[#allocation3 + $0xa0] sm:$0xff]
        %v3801 = vld [vmem:[#allocation3 + $0xa8] sm:$0xff]
        %v3802 = vld [vmem:[#allocation3 + $0xb0] sm:$0xff]
        %v3803 = vld [vmem:[#allocation3 + $0xb8] sm:$0xff]
        %v3804 = vld [vmem:[#allocation3 + $0xc0] sm:$0xff]
        %v3805 = vld [vmem:[#allocation3 + $0xc8] sm:$0xff]
        %v3806 = vld [vmem:[#allocation3 + $0xd0] sm:$0xff]
        %v3807 = vld [vmem:[#allocation3 + $0xd8] sm:$0xff]
        %v3808 = vld [vmem:[#allocation3 + $0xe0] sm:$0xff]
        %v3809 = vld [vmem:[#allocation3 + $0xe8] sm:$0xff]
        %v3810 = vld [vmem:[#allocation3 + $0xf0] sm:$0xff]
        %v3811 = vld [vmem:[#allocation3 + $0xf8] sm:$0xff]
        %v3812 = vld [vmem:[#allocation3 + $0x100] sm:$0xff]
        %v3813 = vld [vmem:[#allocation3 + $0x108] sm:$0xff]
        %v3814 = vld [vmem:[#allocation3 + $0x110] sm:$0xff]
        %v3815 = vld [vmem:[#allocation3 + $0x118] sm:$0xff]
        %v3816 = vld [vmem:[#allocation3 + $0x120] sm:$0xff]
        %v3817 = vld [vmem:[#allocation3 + $0x128] sm:$0xff]
        %v3818 = vld [vmem:[#allocation3 + $0x130] sm:$0xff]
        %v3819 = vld [vmem:[#allocation3 + $0x138] sm:$0xff]
        %v3820 = vld [vmem:[#allocation3 + $0x140] sm:$0xff]
        %v3821 = vld [vmem:[#allocation3 + $0x148] sm:$0xff]
        %v3822 = vld [vmem:[#allocation3 + $0x150] sm:$0xff]
        %v3823 = vld [vmem:[#allocation3 + $0x158] sm:$0xff]
        %v3824 = vld [vmem:[#allocation3 + $0x160] sm:$0xff]
        %v3825 = vld [vmem:[#allocation3 + $0x168] sm:$0xff]
        %v3826 = vld [vmem:[#allocation3 + $0x170] sm:$0xff]
        %v3827 = vld [vmem:[#allocation3 + $0x178] sm:$0xff]
        %v3828 = vld [vmem:[#allocation3 + $0x180] sm:$0xff]
        %v3829 = vld [vmem:[#allocation3 + $0x188] sm:$0xff]
        %v3830 = vld [vmem:[#allocation3 + $0x190] sm:$0xff]
        %v3831 = vld [vmem:[#allocation3 + $0x198] sm:$0xff]
        %v3832 = vld [vmem:[#allocation3 + $0x1a0] sm:$0xff]
        %v3833 = vld [vmem:[#allocation3 + $0x1a8] sm:$0xff]
        %v3834 = vld [vmem:[#allocation3 + $0x1b0] sm:$0xff]
        %v3835 = vld [vmem:[#allocation3 + $0x1b8] sm:$0xff]
        %v3836 = vld [vmem:[#allocation3 + $0x1c0] sm:$0xff]
        %v3837 = vld [vmem:[#allocation3 + $0x1c8] sm:$0xff]
        %v3838 = vld [vmem:[#allocation3 + $0x1d0] sm:$0xff]
        %v3839 = vld [vmem:[#allocation3 + $0x1d8] sm:$0xff]
        %v3840 = vld [vmem:[#allocation3 + $0x1e0] sm:$0xff]
        %v3841 = vld [vmem:[#allocation3 + $0x1e8] sm:$0xff]
        %v3842 = vld [vmem:[#allocation3 + $0x1f0] sm:$0xff]
        %v3843 = vld [vmem:[#allocation3 + $0x1f8] sm:$0xff]
        %v3844 = vpack.c.bf16 %v3781, %v3780
        %v3845 = vpack.c.bf16 %v3783, %v3782
        %v3846 = vpack.c.bf16 %v3785, %v3784
        %v3847 = vpack.c.bf16 %v3787, %v3786
        %v3848 = vpack.c.bf16 %v3789, %v3788
        %v3849 = vpack.c.bf16 %v3791, %v3790
        %v3850 = vpack.c.bf16 %v3793, %v3792
        %v3851 = vpack.c.bf16 %v3795, %v3794
        %v3852 = vpack.c.bf16 %v3797, %v3796
        %v3853 = vpack.c.bf16 %v3799, %v3798
        %v3854 = vpack.c.bf16 %v3801, %v3800
        %v3855 = vpack.c.bf16 %v3803, %v3802
        %v3856 = vpack.c.bf16 %v3805, %v3804
        %v3857 = vpack.c.bf16 %v3807, %v3806
        %v3858 = vpack.c.bf16 %v3809, %v3808
        %v3859 = vpack.c.bf16 %v3811, %v3810
        %v3860 = vpack.c.bf16 %v3813, %v3812
        %v3861 = vpack.c.bf16 %v3815, %v3814
        %v3862 = vpack.c.bf16 %v3817, %v3816
        %v3863 = vpack.c.bf16 %v3819, %v3818
        %v3864 = vpack.c.bf16 %v3821, %v3820
        %v3865 = vpack.c.bf16 %v3823, %v3822
        %v3866 = vpack.c.bf16 %v3825, %v3824
        %v3867 = vpack.c.bf16 %v3827, %v3826
        %v3868 = vpack.c.bf16 %v3829, %v3828
        %v3869 = vpack.c.bf16 %v3831, %v3830
        %v3870 = vpack.c.bf16 %v3833, %v3832
        %v3871 = vpack.c.bf16 %v3835, %v3834
        %v3872 = vpack.c.bf16 %v3837, %v3836
        %v3873 = vpack.c.bf16 %v3839, %v3838
        %v3874 = vpack.c.bf16 %v3841, %v3840
        %v3875 = vpack.c.bf16 %v3843, %v3842
        %v3876 = vld [vmem:[%s3] sm:$0xf]
        %v3877 = vld [vmem:[%s3 + $0x4] sm:$0xf]
        %v3878 = vld [vmem:[%s3 + $0x8] sm:$0xf]
        %v3879 = vld [vmem:[%s3 + $0xc] sm:$0xf]
        %v3880 = vld [vmem:[%s3 + $0x10] sm:$0xf]
        %v3881 = vld [vmem:[%s3 + $0x14] sm:$0xf]
        %v3882 = vld [vmem:[%s3 + $0x18] sm:$0xf]
        %v3883 = vld [vmem:[%s3 + $0x1c] sm:$0xf]
        %v3884 = vld [vmem:[%s3 + $0x20] sm:$0xf]
        %v3894 = vunpack.c.l.b16 %v3876
        %v3895 = vunpack.c.l.b16 %v3877
        %v3896 = vunpack.c.l.b16 %v3878
        %v3897 = vunpack.c.l.b16 %v3879
        %v3898 = vunpack.c.l.b16 %v3880
        %v3899 = vunpack.c.l.b16 %v3881
        %v3900 = vunpack.c.l.b16 %v3882
        %v3901 = vunpack.c.l.b16 %v3883
        %v3902 = vunpack.c.l.b16 %v3884
        %v3903 = vpack.c.b16 %v3895, %v3894
        %v3904 = vpack.c.b16 %v3897, %v3896
        %v3905 = vpack.c.b16 %v3899, %v3898
        %v3906 = vpack.c.b16 %v3901, %v3900
        %v3907 = vpack.c.b16 %v3902, %v3902
        %vm3912 = vcmask 588800
        %v3914 = vsel %vm3912, %v3844, 0
        %v3917 = vsel %vm3912, %v3845, 0
        %v3920 = vsel %vm3912, %v3846, 0
        %v3923 = vsel %vm3912, %v3847, 0
        %v3926 = vsel %vm3912, %v3848, 0
        %v3929 = vsel %vm3912, %v3849, 0
        %v3932 = vsel %vm3912, %v3850, 0
        %v3935 = vsel %vm3912, %v3851, 0
        %v3938 = vsel %vm3912, %v3852, 0
        %v3941 = vsel %vm3912, %v3853, 0
        %v3944 = vsel %vm3912, %v3854, 0
        %v3947 = vsel %vm3912, %v3855, 0
        %v3950 = vsel %vm3912, %v3856, 0
        %v3953 = vsel %vm3912, %v3857, 0
        %v3956 = vsel %vm3912, %v3858, 0
        %v3959 = vsel %vm3912, %v3859, 0
        %v3962 = vsel %vm3912, %v3860, 0
        %v3965 = vsel %vm3912, %v3861, 0
        %v3968 = vsel %vm3912, %v3862, 0
        %v3971 = vsel %vm3912, %v3863, 0
        %v3974 = vsel %vm3912, %v3864, 0
        %v3977 = vsel %vm3912, %v3865, 0
        %v3980 = vsel %vm3912, %v3866, 0
        %v3983 = vsel %vm3912, %v3867, 0
        %v3986 = vsel %vm3912, %v3868, 0
        %v3989 = vsel %vm3912, %v3869, 0
        %v3992 = vsel %vm3912, %v3870, 0
        %v3995 = vsel %vm3912, %v3871, 0
        %v3998 = vsel %vm3912, %v3872, 0
        %v4001 = vsel %vm3912, %v3873, 0
        %v4004 = vsel %vm3912, %v3874, 0
        %v4007 = vsel %vm3912, %v3875, 0
        %vm4009 = vcmask 1043456
        %v4011 = vsel %vm4009, %v3907, 0
        %4013 = vmatprep.subr.bf16.mxu0 0
        %4014 = vmatpush1.bf16.msra.mxu0 %v3903
        %4015 = vmatprep.subr.bf16.mxu0 0
        %4016 = vmatpush1.bf16.msra.mxu0 %v3904
        %4017 = vmatprep.subr.bf16.mxu0 0
        %4018 = vmatpush1.bf16.msra.mxu0 %v3905
        %4019 = vmatprep.subr.bf16.mxu0 0
        %4020 = vmatpush1.bf16.msra.mxu0 %v3906
        %4021 = vmatprep.subr.bf16.mxu0 0
        %4022 = vmatpush1.bf16.msra.mxu0 %v4011
        %4023 = vmatprep.subr.bf16.mxu0 0
        %4024 = vmatpush1.bf16.msra.mxu0 0
        %4025 = vmatprep.subr.bf16.mxu0 0
        %4026 = vmatpush1.bf16.msra.mxu0 0
        %4027 = vmatprep.subr.bf16.mxu0 0
        %4028 = vmatpush1.bf16.msra.mxu0 0
        %4029 = vmatprep.subr.bf16.mxu0 0
        %4030 = vmatpush1.bf16.msra.mxu0 0
        %4031 = vmatprep.subr.bf16.mxu0 0
        %4032 = vmatpush1.bf16.msra.mxu0 0
        %4033 = vmatprep.subr.bf16.mxu0 0
        %4034 = vmatpush1.bf16.msra.mxu0 0
        %4035 = vmatprep.subr.bf16.mxu0 0
        %4036 = vmatpush1.bf16.msra.mxu0 0
        %4037 = vmatprep.subr.bf16.mxu0 0
        %4038 = vmatpush1.bf16.msra.mxu0 0
        %4039 = vmatprep.subr.bf16.mxu0 0
        %4040 = vmatpush1.bf16.msra.mxu0 0
        %4041 = vmatprep.subr.bf16.mxu0 0
        %4042 = vmatpush1.bf16.msra.mxu0 0
        %4043 = vmatprep.subr.bf16.mxu0 0
        %4044 = vmatpush1.bf16.msra.mxu0 0
        %4045 = vmatprep.mubr.bf16.mxu0 0
        %4046 = vmatmul.mubr.bf16.gmra.mrb[0].mxu0 %v3914
        %v4047 = vpop.f32.mrb[0].mxu0
        %v4048 = vadd.f32 0.0, %v4047
        %v4049 = vpop.f32.mrb[0].mxu0
        %v4050 = vpop.f32.mrb[0].mxu0
        %v4051 = vadd.f32 0.0, %v4050
        %v4052 = vpop.f32.mrb[0].mxu0
        %4053 = vmatprep.mubr.bf16.mxu0 0
        %4054 = vmatmul.mubr.bf16.gmra.mrb[0].mxu0 %v3917
        %v4055 = vpop.f32.mrb[0].mxu0
        %v4056 = vadd.f32 0.0, %v4055
        %v4057 = vpop.f32.mrb[0].mxu0
        %v4058 = vpop.f32.mrb[0].mxu0
        %v4059 = vadd.f32 0.0, %v4058
        %v4060 = vpop.f32.mrb[0].mxu0
        %4061 = vmatprep.mubr.bf16.mxu0 0
        %4062 = vmatmul.mubr.bf16.gmra.mrb[0].mxu0 %v3920
        %v4063 = vpop.f32.mrb[0].mxu0
        %v4064 = vadd.f32 0.0, %v4063
        %v4065 = vpop.f32.mrb[0].mxu0
        %v4066 = vpop.f32.mrb[0].mxu0
        %v4067 = vadd.f32 0.0, %v4066
        %v4068 = vpop.f32.mrb[0].mxu0
        %4069 = vmatprep.mubr.bf16.mxu0 0
        %4070 = vmatmul.mubr.bf16.gmra.mrb[0].mxu0 %v3923
        %v4071 = vpop.f32.mrb[0].mxu0
        %v4072 = vadd.f32 0.0, %v4071
        %v4073 = vpop.f32.mrb[0].mxu0
        %v4074 = vpop.f32.mrb[0].mxu0
        %v4075 = vadd.f32 0.0, %v4074
        %v4076 = vpop.f32.mrb[0].mxu0
        %4077 = vmatprep.mubr.bf16.mxu0 0
        %4078 = vmatmul.mubr.bf16.gmra.mrb[0].mxu0 %v3926
        %v4079 = vpop.f32.mrb[0].mxu0
        %v4080 = vadd.f32 0.0, %v4079
        %v4081 = vpop.f32.mrb[0].mxu0
        %v4082 = vpop.f32.mrb[0].mxu0
        %v4083 = vadd.f32 0.0, %v4082
        %v4084 = vpop.f32.mrb[0].mxu0
        %4085 = vmatprep.mubr.bf16.mxu0 0
        %4086 = vmatmul.mubr.bf16.gmra.mrb[0].mxu0 %v3929
        %v4087 = vpop.f32.mrb[0].mxu0
        %v4088 = vadd.f32 0.0, %v4087
        %v4089 = vpop.f32.mrb[0].mxu0
        %v4090 = vpop.f32.mrb[0].mxu0
        %v4091 = vadd.f32 0.0, %v4090
        %v4092 = vpop.f32.mrb[0].mxu0
        %4093 = vmatprep.mubr.bf16.mxu0 0
        %4094 = vmatmul.mubr.bf16.gmra.mrb[0].mxu0 %v3932
        %v4095 = vpop.f32.mrb[0].mxu0
        %v4096 = vadd.f32 0.0, %v4095
        %v4097 = vpop.f32.mrb[0].mxu0
        %v4098 = vpop.f32.mrb[0].mxu0
        %v4099 = vadd.f32 0.0, %v4098
        %v4100 = vpop.f32.mrb[0].mxu0
        %4101 = vmatprep.mubr.bf16.mxu0 0
        %4102 = vmatmul.mubr.bf16.gmra.mrb[0].mxu0 %v3935
        %v4103 = vpop.f32.mrb[0].mxu0
        %v4104 = vadd.f32 0.0, %v4103
        %v4105 = vpop.f32.mrb[0].mxu0
        %v4106 = vpop.f32.mrb[0].mxu0
        %v4107 = vadd.f32 0.0, %v4106
        %v4108 = vpop.f32.mrb[0].mxu0
        %4109 = vmatprep.mubr.bf16.mxu0 0
        %4110 = vmatmul.mubr.bf16.gmra.mrb[0].mxu0 %v3938
        %v4111 = vpop.f32.mrb[0].mxu0
        %v4112 = vadd.f32 0.0, %v4111
        %v4113 = vpop.f32.mrb[0].mxu0
        %v4114 = vpop.f32.mrb[0].mxu0
        %v4115 = vadd.f32 0.0, %v4114
        %v4116 = vpop.f32.mrb[0].mxu0
        %4117 = vmatprep.mubr.bf16.mxu0 0
        %4118 = vmatmul.mubr.bf16.gmra.mrb[0].mxu0 %v3941
        %v4119 = vpop.f32.mrb[0].mxu0
        %v4120 = vadd.f32 0.0, %v4119
        %v4121 = vpop.f32.mrb[0].mxu0
        %v4122 = vpop.f32.mrb[0].mxu0
        %v4123 = vadd.f32 0.0, %v4122
        %v4124 = vpop.f32.mrb[0].mxu0
        %4125 = vmatprep.mubr.bf16.mxu0 0
        %4126 = vmatmul.mubr.bf16.gmra.mrb[0].mxu0 %v3944
        %v4127 = vpop.f32.mrb[0].mxu0
        %v4128 = vadd.f32 0.0, %v4127
        %v4129 = vpop.f32.mrb[0].mxu0
        %v4130 = vpop.f32.mrb[0].mxu0
        %v4131 = vadd.f32 0.0, %v4130
        %v4132 = vpop.f32.mrb[0].mxu0
        %4133 = vmatprep.mubr.bf16.mxu0 0
        %4134 = vmatmul.mubr.bf16.gmra.mrb[0].mxu0 %v3947
        %v4135 = vpop.f32.mrb[0].mxu0
        %v4136 = vadd.f32 0.0, %v4135
        %v4137 = vpop.f32.mrb[0].mxu0
        %v4138 = vpop.f32.mrb[0].mxu0
        %v4139 = vadd.f32 0.0, %v4138
        %v4140 = vpop.f32.mrb[0].mxu0
        %4141 = vmatprep.mubr.bf16.mxu0 0
        %4142 = vmatmul.mubr.bf16.gmra.mrb[0].mxu0 %v3950
        %v4143 = vpop.f32.mrb[0].mxu0
        %v4144 = vadd.f32 0.0, %v4143
        %v4145 = vpop.f32.mrb[0].mxu0
        %v4146 = vpop.f32.mrb[0].mxu0
        %v4147 = vadd.f32 0.0, %v4146
        %v4148 = vpop.f32.mrb[0].mxu0
        %4149 = vmatprep.mubr.bf16.mxu0 0
        %4150 = vmatmul.mubr.bf16.gmra.mrb[0].mxu0 %v3953
        %v4151 = vpop.f32.mrb[0].mxu0
        %v4152 = vadd.f32 0.0, %v4151
        %v4153 = vpop.f32.mrb[0].mxu0
        %v4154 = vpop.f32.mrb[0].mxu0
        %v4155 = vadd.f32 0.0, %v4154
        %v4156 = vpop.f32.mrb[0].mxu0
        %4157 = vmatprep.mubr.bf16.mxu0 0
        %4158 = vmatmul.mubr.bf16.gmra.mrb[0].mxu0 %v3956
        %v4159 = vpop.f32.mrb[0].mxu0
        %v4160 = vadd.f32 0.0, %v4159
        %v4161 = vpop.f32.mrb[0].mxu0
        %v4162 = vpop.f32.mrb[0].mxu0
        %v4163 = vadd.f32 0.0, %v4162
        %v4164 = vpop.f32.mrb[0].mxu0
        %4165 = vmatprep.mubr.bf16.mxu0 0
        %4166 = vmatmul.mubr.bf16.gmra.mrb[0].mxu0 %v3959
        %v4167 = vpop.f32.mrb[0].mxu0
        %v4168 = vadd.f32 0.0, %v4167
        %v4169 = vpop.f32.mrb[0].mxu0
        %v4170 = vpop.f32.mrb[0].mxu0
        %v4171 = vadd.f32 0.0, %v4170
        %v4172 = vpop.f32.mrb[0].mxu0
        %4173 = vmatprep.mubr.bf16.mxu0 0
        %4174 = vmatmul.mubr.bf16.gmra.mrb[0].mxu0 %v3962
        %v4175 = vpop.f32.mrb[0].mxu0
        %v4176 = vadd.f32 0.0, %v4175
        %v4177 = vpop.f32.mrb[0].mxu0
        %v4178 = vpop.f32.mrb[0].mxu0
        %v4179 = vadd.f32 0.0, %v4178
        %v4180 = vpop.f32.mrb[0].mxu0
        %4181 = vmatprep.mubr.bf16.mxu0 0
        %4182 = vmatmul.mubr.bf16.gmra.mrb[0].mxu0 %v3965
        %v4183 = vpop.f32.mrb[0].mxu0
        %v4184 = vadd.f32 0.0, %v4183
        %v4185 = vpop.f32.mrb[0].mxu0
        %v4186 = vpop.f32.mrb[0].mxu0
        %v4187 = vadd.f32 0.0, %v4186
        %v4188 = vpop.f32.mrb[0].mxu0
        %4189 = vmatprep.mubr.bf16.mxu0 0
        %4190 = vmatmul.mubr.bf16.gmra.mrb[0].mxu0 %v3968
        %v4191 = vpop.f32.mrb[0].mxu0
        %v4192 = vadd.f32 0.0, %v4191
        %v4193 = vpop.f32.mrb[0].mxu0
        %v4194 = vpop.f32.mrb[0].mxu0
        %v4195 = vadd.f32 0.0, %v4194
        %v4196 = vpop.f32.mrb[0].mxu0
        %4197 = vmatprep.mubr.bf16.mxu0 0
        %4198 = vmatmul.mubr.bf16.gmra.mrb[0].mxu0 %v3971
        %v4199 = vpop.f32.mrb[0].mxu0
        %v4200 = vadd.f32 0.0, %v4199
        %v4201 = vpop.f32.mrb[0].mxu0
        %v4202 = vpop.f32.mrb[0].mxu0
        %v4203 = vadd.f32 0.0, %v4202
        %v4204 = vpop.f32.mrb[0].mxu0
        %4205 = vmatprep.mubr.bf16.mxu0 0
        %4206 = vmatmul.mubr.bf16.gmra.mrb[0].mxu0 %v3974
        %v4207 = vpop.f32.mrb[0].mxu0
        %v4208 = vadd.f32 0.0, %v4207
        %v4209 = vpop.f32.mrb[0].mxu0
        %v4210 = vpop.f32.mrb[0].mxu0
        %v4211 = vadd.f32 0.0, %v4210
        %v4212 = vpop.f32.mrb[0].mxu0
        %4213 = vmatprep.mubr.bf16.mxu0 0
        %4214 = vmatmul.mubr.bf16.gmra.mrb[0].mxu0 %v3977
        %v4215 = vpop.f32.mrb[0].mxu0
        %v4216 = vadd.f32 0.0, %v4215
        %v4217 = vpop.f32.mrb[0].mxu0
        %v4218 = vpop.f32.mrb[0].mxu0
        %v4219 = vadd.f32 0.0, %v4218
        %v4220 = vpop.f32.mrb[0].mxu0
        %4221 = vmatprep.mubr.bf16.mxu0 0
        %4222 = vmatmul.mubr.bf16.gmra.mrb[0].mxu0 %v3980
        %v4223 = vpop.f32.mrb[0].mxu0
        %v4224 = vadd.f32 0.0, %v4223
        %v4225 = vpop.f32.mrb[0].mxu0
        %v4226 = vpop.f32.mrb[0].mxu0
        %v4227 = vadd.f32 0.0, %v4226
        %v4228 = vpop.f32.mrb[0].mxu0
        %4229 = vmatprep.mubr.bf16.mxu0 0
        %4230 = vmatmul.mubr.bf16.gmra.mrb[0].mxu0 %v3983
        %v4231 = vpop.f32.mrb[0].mxu0
        %v4232 = vadd.f32 0.0, %v4231
        %v4233 = vpop.f32.mrb[0].mxu0
        %v4234 = vpop.f32.mrb[0].mxu0
        %v4235 = vadd.f32 0.0, %v4234
        %v4236 = vpop.f32.mrb[0].mxu0
        %4237 = vmatprep.mubr.bf16.mxu0 0
        %4238 = vmatmul.mubr.bf16.gmra.mrb[0].mxu0 %v3986
        %v4239 = vpop.f32.mrb[0].mxu0
        %v4240 = vadd.f32 0.0, %v4239
        %v4241 = vpop.f32.mrb[0].mxu0
        %v4242 = vpop.f32.mrb[0].mxu0
        %v4243 = vadd.f32 0.0, %v4242
        %v4244 = vpop.f32.mrb[0].mxu0
        %4245 = vmatprep.mubr.bf16.mxu0 0
        %4246 = vmatmul.mubr.bf16.gmra.mrb[0].mxu0 %v3989
        %v4247 = vpop.f32.mrb[0].mxu0
        %v4248 = vadd.f32 0.0, %v4247
        %v4249 = vpop.f32.mrb[0].mxu0
        %v4250 = vpop.f32.mrb[0].mxu0
        %v4251 = vadd.f32 0.0, %v4250
        %v4252 = vpop.f32.mrb[0].mxu0
        %4253 = vmatprep.mubr.bf16.mxu0 0
        %4254 = vmatmul.mubr.bf16.gmra.mrb[0].mxu0 %v3992
        %v4255 = vpop.f32.mrb[0].mxu0
        %v4256 = vadd.f32 0.0, %v4255
        %v4257 = vpop.f32.mrb[0].mxu0
        %v4258 = vpop.f32.mrb[0].mxu0
        %v4259 = vadd.f32 0.0, %v4258
        %v4260 = vpop.f32.mrb[0].mxu0
        %4261 = vmatprep.mubr.bf16.mxu0 0
        %4262 = vmatmul.mubr.bf16.gmra.mrb[0].mxu0 %v3995
        %v4263 = vpop.f32.mrb[0].mxu0
        %v4264 = vadd.f32 0.0, %v4263
        %v4265 = vpop.f32.mrb[0].mxu0
        %v4266 = vpop.f32.mrb[0].mxu0
        %v4267 = vadd.f32 0.0, %v4266
        %v4268 = vpop.f32.mrb[0].mxu0
        %4269 = vmatprep.mubr.bf16.mxu0 0
        %4270 = vmatmul.mubr.bf16.gmra.mrb[0].mxu0 %v3998
        %v4271 = vpop.f32.mrb[0].mxu0
        %v4272 = vadd.f32 0.0, %v4271
        %v4273 = vpop.f32.mrb[0].mxu0
        %v4274 = vpop.f32.mrb[0].mxu0
        %v4275 = vadd.f32 0.0, %v4274
        %v4276 = vpop.f32.mrb[0].mxu0
        %4277 = vmatprep.mubr.bf16.mxu0 0
        %4278 = vmatmul.mubr.bf16.gmra.mrb[0].mxu0 %v4001
        %v4279 = vpop.f32.mrb[0].mxu0
        %v4280 = vadd.f32 0.0, %v4279
        %v4281 = vpop.f32.mrb[0].mxu0
        %v4282 = vpop.f32.mrb[0].mxu0
        %v4283 = vadd.f32 0.0, %v4282
        %v4284 = vpop.f32.mrb[0].mxu0
        %4285 = vmatprep.mubr.bf16.mxu0 0
        %4286 = vmatmul.mubr.bf16.gmra.mrb[0].mxu0 %v4004
        %v4287 = vpop.f32.mrb[0].mxu0
        %v4288 = vadd.f32 0.0, %v4287
        %v4289 = vpop.f32.mrb[0].mxu0
        %v4290 = vpop.f32.mrb[0].mxu0
        %v4291 = vadd.f32 0.0, %v4290
        %v4292 = vpop.f32.mrb[0].mxu0
        %4293 = vmatprep.mubr.bf16.mxu0 0
        %4294 = vmatmul.mubr.bf16.gmra.mrb[0].mxu0 %v4007
        %v4295 = vpop.f32.mrb[0].mxu0
        %v4296 = vadd.f32 0.0, %v4295
        %v4297 = vpop.f32.mrb[0].mxu0
        %v4298 = vpop.f32.mrb[0].mxu0
        %v4299 = vadd.f32 0.0, %v4298
        %v4300 = vpop.f32.mrb[0].mxu0
        %4301 = vdwg.mxu0
        %v4302 = vpack.c.bf16 %v4051, %v4048
        %v4303 = vpack.c.bf16 %v4059, %v4056
        %v4304 = vpack.c.bf16 %v4067, %v4064
        %v4305 = vpack.c.bf16 %v4075, %v4072
        %v4306 = vpack.c.bf16 %v4083, %v4080
        %v4307 = vpack.c.bf16 %v4091, %v4088
        %v4308 = vpack.c.bf16 %v4099, %v4096
        %v4309 = vpack.c.bf16 %v4107, %v4104
        %v4310 = vpack.c.bf16 %v4115, %v4112
        %v4311 = vpack.c.bf16 %v4123, %v4120
        %v4312 = vpack.c.bf16 %v4131, %v4128
        %v4313 = vpack.c.bf16 %v4139, %v4136
        %v4314 = vpack.c.bf16 %v4147, %v4144
        %v4315 = vpack.c.bf16 %v4155, %v4152
        %v4316 = vpack.c.bf16 %v4163, %v4160
        %v4317 = vpack.c.bf16 %v4171, %v4168
        %v4318 = vpack.c.bf16 %v4179, %v4176
        %v4319 = vpack.c.bf16 %v4187, %v4184
        %v4320 = vpack.c.bf16 %v4195, %v4192
        %v4321 = vpack.c.bf16 %v4203, %v4200
        %v4322 = vpack.c.bf16 %v4211, %v4208
        %v4323 = vpack.c.bf16 %v4219, %v4216
        %v4324 = vpack.c.bf16 %v4227, %v4224
        %v4325 = vpack.c.bf16 %v4235, %v4232
        %v4326 = vpack.c.bf16 %v4243, %v4240
        %v4327 = vpack.c.bf16 %v4251, %v4248
        %v4328 = vpack.c.bf16 %v4259, %v4256
        %v4329 = vpack.c.bf16 %v4267, %v4264
        %v4330 = vpack.c.bf16 %v4275, %v4272
        %v4331 = vpack.c.bf16 %v4283, %v4280
        %v4332 = vpack.c.bf16 %v4291, %v4288
        %v4333 = vpack.c.bf16 %v4299, %v4296
        %v4366 = vunpack.c.l.b16 %v4302
        %v4367 = vunpack.c.h.b16 %v4302
        %v4368 = vunpack.c.l.b16 %v4303
        %v4369 = vunpack.c.h.b16 %v4303
        %v4370 = vunpack.c.l.b16 %v4304
        %v4371 = vunpack.c.h.b16 %v4304
        %v4372 = vunpack.c.l.b16 %v4305
        %v4373 = vunpack.c.h.b16 %v4305
        %v4374 = vunpack.c.l.b16 %v4306
        %v4375 = vunpack.c.h.b16 %v4306
        %v4376 = vunpack.c.l.b16 %v4307
        %v4377 = vunpack.c.h.b16 %v4307
        %v4378 = vunpack.c.l.b16 %v4308
        %v4379 = vunpack.c.h.b16 %v4308
        %v4380 = vunpack.c.l.b16 %v4309
        %v4381 = vunpack.c.h.b16 %v4309
        %v4382 = vunpack.c.l.b16 %v4310
        %v4383 = vunpack.c.h.b16 %v4310
        %v4384 = vunpack.c.l.b16 %v4311
        %v4385 = vunpack.c.h.b16 %v4311
        %v4386 = vunpack.c.l.b16 %v4312
        %v4387 = vunpack.c.h.b16 %v4312
        %v4388 = vunpack.c.l.b16 %v4313
        %v4389 = vunpack.c.h.b16 %v4313
        %v4390 = vunpack.c.l.b16 %v4314
        %v4391 = vunpack.c.h.b16 %v4314
        %v4392 = vunpack.c.l.b16 %v4315
        %v4393 = vunpack.c.h.b16 %v4315
        %v4394 = vunpack.c.l.b16 %v4316
        %v4395 = vunpack.c.h.b16 %v4316
        %v4396 = vunpack.c.l.b16 %v4317
        %v4397 = vunpack.c.h.b16 %v4317
        %v4398 = vunpack.c.l.b16 %v4318
        %v4399 = vunpack.c.h.b16 %v4318
        %v4400 = vunpack.c.l.b16 %v4319
        %v4401 = vunpack.c.h.b16 %v4319
        %v4402 = vunpack.c.l.b16 %v4320
        %v4403 = vunpack.c.h.b16 %v4320
        %v4404 = vunpack.c.l.b16 %v4321
        %v4405 = vunpack.c.h.b16 %v4321
        %v4406 = vunpack.c.l.b16 %v4322
        %v4407 = vunpack.c.h.b16 %v4322
        %v4408 = vunpack.c.l.b16 %v4323
        %v4409 = vunpack.c.h.b16 %v4323
        %v4410 = vunpack.c.l.b16 %v4324
        %v4411 = vunpack.c.h.b16 %v4324
        %v4412 = vunpack.c.l.b16 %v4325
        %v4413 = vunpack.c.h.b16 %v4325
        %v4414 = vunpack.c.l.b16 %v4326
        %v4415 = vunpack.c.h.b16 %v4326
        %v4416 = vunpack.c.l.b16 %v4327
        %v4417 = vunpack.c.h.b16 %v4327
        %v4418 = vunpack.c.l.b16 %v4328
        %v4419 = vunpack.c.h.b16 %v4328
        %v4420 = vunpack.c.l.b16 %v4329
        %v4421 = vunpack.c.h.b16 %v4329
        %v4422 = vunpack.c.l.b16 %v4330
        %v4423 = vunpack.c.h.b16 %v4330
        %v4424 = vunpack.c.l.b16 %v4331
        %v4425 = vunpack.c.h.b16 %v4331
        %v4426 = vunpack.c.l.b16 %v4332
        %v4427 = vunpack.c.h.b16 %v4332
        %v4428 = vunpack.c.l.b16 %v4333
        %v4429 = vunpack.c.h.b16 %v4333
        %v4430 = vpack.c.b16 %v4366, %v4366
        %v4431 = vpack.c.b16 %v4367, %v4367
        %v4432 = vpack.c.b16 %v4368, %v4368
        %v4433 = vpack.c.b16 %v4369, %v4369
        %v4434 = vpack.c.b16 %v4370, %v4370
        %v4435 = vpack.c.b16 %v4371, %v4371
        %v4436 = vpack.c.b16 %v4372, %v4372
        %v4437 = vpack.c.b16 %v4373, %v4373
        %v4438 = vpack.c.b16 %v4374, %v4374
        %v4439 = vpack.c.b16 %v4375, %v4375
        %v4440 = vpack.c.b16 %v4376, %v4376
        %v4441 = vpack.c.b16 %v4377, %v4377
        %v4442 = vpack.c.b16 %v4378, %v4378
        %v4443 = vpack.c.b16 %v4379, %v4379
        %v4444 = vpack.c.b16 %v4380, %v4380
        %v4445 = vpack.c.b16 %v4381, %v4381
        %v4446 = vpack.c.b16 %v4382, %v4382
        %v4447 = vpack.c.b16 %v4383, %v4383
        %v4448 = vpack.c.b16 %v4384, %v4384
        %v4449 = vpack.c.b16 %v4385, %v4385
        %v4450 = vpack.c.b16 %v4386, %v4386
        %v4451 = vpack.c.b16 %v4387, %v4387
        %v4452 = vpack.c.b16 %v4388, %v4388
        %v4453 = vpack.c.b16 %v4389, %v4389
        %v4454 = vpack.c.b16 %v4390, %v4390
        %v4455 = vpack.c.b16 %v4391, %v4391
        %v4456 = vpack.c.b16 %v4392, %v4392
        %v4457 = vpack.c.b16 %v4393, %v4393
        %v4458 = vpack.c.b16 %v4394, %v4394
        %v4459 = vpack.c.b16 %v4395, %v4395
        %v4460 = vpack.c.b16 %v4396, %v4396
        %v4461 = vpack.c.b16 %v4397, %v4397
        %v4462 = vpack.c.b16 %v4398, %v4398
        %v4463 = vpack.c.b16 %v4399, %v4399
        %v4464 = vpack.c.b16 %v4400, %v4400
        %v4465 = vpack.c.b16 %v4401, %v4401
        %v4466 = vpack.c.b16 %v4402, %v4402
        %v4467 = vpack.c.b16 %v4403, %v4403
        %v4468 = vpack.c.b16 %v4404, %v4404
        %v4469 = vpack.c.b16 %v4405, %v4405
        %v4470 = vpack.c.b16 %v4406, %v4406
        %v4471 = vpack.c.b16 %v4407, %v4407
        %v4472 = vpack.c.b16 %v4408, %v4408
        %v4473 = vpack.c.b16 %v4409, %v4409
        %v4474 = vpack.c.b16 %v4410, %v4410
        %v4475 = vpack.c.b16 %v4411, %v4411
        %v4476 = vpack.c.b16 %v4412, %v4412
        %v4477 = vpack.c.b16 %v4413, %v4413
        %v4478 = vpack.c.b16 %v4414, %v4414
        %v4479 = vpack.c.b16 %v4415, %v4415
        %v4480 = vpack.c.b16 %v4416, %v4416
        %v4481 = vpack.c.b16 %v4417, %v4417
        %v4482 = vpack.c.b16 %v4418, %v4418
        %v4483 = vpack.c.b16 %v4419, %v4419
        %v4484 = vpack.c.b16 %v4420, %v4420
        %v4485 = vpack.c.b16 %v4421, %v4421
        %v4486 = vpack.c.b16 %v4422, %v4422
        %v4487 = vpack.c.b16 %v4423, %v4423
        %v4488 = vpack.c.b16 %v4424, %v4424
        %v4489 = vpack.c.b16 %v4425, %v4425
        %v4490 = vpack.c.b16 %v4426, %v4426
        %v4491 = vpack.c.b16 %v4427, %v4427
        %v4492 = vpack.c.b16 %v4428, %v4428
        %v4493 = vpack.c.b16 %v4429, %v4429
        %vm4558 = vcmask 60416
        %4559 = vst.msk [vmem:[%s353] sm:$0xf] %vm4558, %v4430
        %4560 = vst.msk [vmem:[%s353 + $0x4] sm:$0xf] %vm4558, %v4431
        %4561 = vst.msk [vmem:[%s353 + $0x8] sm:$0xf] %vm4558, %v4432
        %4562 = vst.msk [vmem:[%s353 + $0xc] sm:$0xf] %vm4558, %v4433
        %4563 = vst.msk [vmem:[%s353 + $0x10] sm:$0xf] %vm4558, %v4434
        %4564 = vst.msk [vmem:[%s353 + $0x14] sm:$0xf] %vm4558, %v4435
        %4565 = vst.msk [vmem:[%s353 + $0x18] sm:$0xf] %vm4558, %v4436
        %4566 = vst.msk [vmem:[%s353 + $0x1c] sm:$0xf] %vm4558, %v4437
        %4567 = vst.msk [vmem:[%s353 + $0x20] sm:$0xf] %vm4558, %v4438
        %4568 = vst.msk [vmem:[%s353 + $0x24] sm:$0xf] %vm4558, %v4439
        %4569 = vst.msk [vmem:[%s353 + $0x28] sm:$0xf] %vm4558, %v4440
        %4570 = vst.msk [vmem:[%s353 + $0x2c] sm:$0xf] %vm4558, %v4441
        %4571 = vst.msk [vmem:[%s353 + $0x30] sm:$0xf] %vm4558, %v4442
        %4572 = vst.msk [vmem:[%s353 + $0x34] sm:$0xf] %vm4558, %v4443
        %4573 = vst.msk [vmem:[%s353 + $0x38] sm:$0xf] %vm4558, %v4444
        %4574 = vst.msk [vmem:[%s353 + $0x3c] sm:$0xf] %vm4558, %v4445
        %4575 = vst.msk [vmem:[%s353 + $0x40] sm:$0xf] %vm4558, %v4446
        %4576 = vst.msk [vmem:[%s353 + $0x44] sm:$0xf] %vm4558, %v4447
        %4577 = vst.msk [vmem:[%s353 + $0x48] sm:$0xf] %vm4558, %v4448
        %4578 = vst.msk [vmem:[%s353 + $0x4c] sm:$0xf] %vm4558, %v4449
        %4579 = vst.msk [vmem:[%s353 + $0x50] sm:$0xf] %vm4558, %v4450
        %4580 = vst.msk [vmem:[%s353 + $0x54] sm:$0xf] %vm4558, %v4451
        %4581 = vst.msk [vmem:[%s353 + $0x58] sm:$0xf] %vm4558, %v4452
        %4582 = vst.msk [vmem:[%s353 + $0x5c] sm:$0xf] %vm4558, %v4453
        %4583 = vst.msk [vmem:[%s353 + $0x60] sm:$0xf] %vm4558, %v4454
        %4584 = vst.msk [vmem:[%s353 + $0x64] sm:$0xf] %vm4558, %v4455
        %4585 = vst.msk [vmem:[%s353 + $0x68] sm:$0xf] %vm4558, %v4456
        %4586 = vst.msk [vmem:[%s353 + $0x6c] sm:$0xf] %vm4558, %v4457
        %4587 = vst.msk [vmem:[%s353 + $0x70] sm:$0xf] %vm4558, %v4458
        %4588 = vst.msk [vmem:[%s353 + $0x74] sm:$0xf] %vm4558, %v4459
        %4589 = vst.msk [vmem:[%s353 + $0x78] sm:$0xf] %vm4558, %v4460
        %4590 = vst.msk [vmem:[%s353 + $0x7c] sm:$0xf] %vm4558, %v4461
        %4591 = vst.msk [vmem:[%s353 + $0x80] sm:$0xf] %vm4558, %v4462
        %4592 = vst.msk [vmem:[%s353 + $0x84] sm:$0xf] %vm4558, %v4463
        %4593 = vst.msk [vmem:[%s353 + $0x88] sm:$0xf] %vm4558, %v4464
        %4594 = vst.msk [vmem:[%s353 + $0x8c] sm:$0xf] %vm4558, %v4465
        %4595 = vst.msk [vmem:[%s353 + $0x90] sm:$0xf] %vm4558, %v4466
        %4596 = vst.msk [vmem:[%s353 + $0x94] sm:$0xf] %vm4558, %v4467
        %4597 = vst.msk [vmem:[%s353 + $0x98] sm:$0xf] %vm4558, %v4468
        %4598 = vst.msk [vmem:[%s353 + $0x9c] sm:$0xf] %vm4558, %v4469
        %4599 = vst.msk [vmem:[%s353 + $0xa0] sm:$0xf] %vm4558, %v4470
        %4600 = vst.msk [vmem:[%s353 + $0xa4] sm:$0xf] %vm4558, %v4471
        %4601 = vst.msk [vmem:[%s353 + $0xa8] sm:$0xf] %vm4558, %v4472
        %4602 = vst.msk [vmem:[%s353 + $0xac] sm:$0xf] %vm4558, %v4473
        %4603 = vst.msk [vmem:[%s353 + $0xb0] sm:$0xf] %vm4558, %v4474
        %4604 = vst.msk [vmem:[%s353 + $0xb4] sm:$0xf] %vm4558, %v4475
        %4605 = vst.msk [vmem:[%s353 + $0xb8] sm:$0xf] %vm4558, %v4476
        %4606 = vst.msk [vmem:[%s353 + $0xbc] sm:$0xf] %vm4558, %v4477
        %4607 = vst.msk [vmem:[%s353 + $0xc0] sm:$0xf] %vm4558, %v4478
        %4608 = vst.msk [vmem:[%s353 + $0xc4] sm:$0xf] %vm4558, %v4479
        %4609 = vst.msk [vmem:[%s353 + $0xc8] sm:$0xf] %vm4558, %v4480
        %4610 = vst.msk [vmem:[%s353 + $0xcc] sm:$0xf] %vm4558, %v4481
        %4611 = vst.msk [vmem:[%s353 + $0xd0] sm:$0xf] %vm4558, %v4482
        %4612 = vst.msk [vmem:[%s353 + $0xd4] sm:$0xf] %vm4558, %v4483
        %4613 = vst.msk [vmem:[%s353 + $0xd8] sm:$0xf] %vm4558, %v4484
        %4614 = vst.msk [vmem:[%s353 + $0xdc] sm:$0xf] %vm4558, %v4485
        %4615 = vst.msk [vmem:[%s353 + $0xe0] sm:$0xf] %vm4558, %v4486
        %4616 = vst.msk [vmem:[%s353 + $0xe4] sm:$0xf] %vm4558, %v4487
        %4617 = vst.msk [vmem:[%s353 + $0xe8] sm:$0xf] %vm4558, %v4488
        %4618 = vst.msk [vmem:[%s353 + $0xec] sm:$0xf] %vm4558, %v4489
        %4619 = vst.msk [vmem:[%s353 + $0xf0] sm:$0xf] %vm4558, %v4490
        %4620 = vst.msk [vmem:[%s353 + $0xf4] sm:$0xf] %vm4558, %v4491
        %4621 = vst.msk [vmem:[%s353 + $0xf8] sm:$0xf] %vm4558, %v4492
        %4622 = vst.msk [vmem:[%s353 + $0xfc] sm:$0xf] %vm4558, %v4493
        %v4623 = vunpack.c.l.bf16 %v4302
        %v4624 = vunpack.c.h.bf16 %v4302
        %v4625 = vunpack.c.l.bf16 %v4303
        %v4626 = vunpack.c.h.bf16 %v4303
        %v4627 = vunpack.c.l.bf16 %v4304
        %v4628 = vunpack.c.h.bf16 %v4304
        %v4629 = vunpack.c.l.bf16 %v4305
        %v4630 = vunpack.c.h.bf16 %v4305
        %v4631 = vunpack.c.l.bf16 %v4306
        %v4632 = vunpack.c.h.bf16 %v4306
        %v4633 = vunpack.c.l.bf16 %v4307
        %v4634 = vunpack.c.h.bf16 %v4307
        %v4635 = vunpack.c.l.bf16 %v4308
        %v4636 = vunpack.c.h.bf16 %v4308
        %v4637 = vunpack.c.l.bf16 %v4309
        %v4638 = vunpack.c.h.bf16 %v4309
        %v4639 = vunpack.c.l.bf16 %v4310
        %v4640 = vunpack.c.h.bf16 %v4310
        %v4641 = vunpack.c.l.bf16 %v4311
        %v4642 = vunpack.c.h.bf16 %v4311
        %v4643 = vunpack.c.l.bf16 %v4312
        %v4644 = vunpack.c.h.bf16 %v4312
        %v4645 = vunpack.c.l.bf16 %v4313
        %v4646 = vunpack.c.h.bf16 %v4313
        %v4647 = vunpack.c.l.bf16 %v4314
        %v4648 = vunpack.c.h.bf16 %v4314
        %v4649 = vunpack.c.l.bf16 %v4315
        %v4650 = vunpack.c.h.bf16 %v4315
        %v4651 = vunpack.c.l.bf16 %v4316
        %v4652 = vunpack.c.h.bf16 %v4316
        %v4653 = vunpack.c.l.bf16 %v4317
        %v4654 = vunpack.c.h.bf16 %v4317
        %v4655 = vunpack.c.l.bf16 %v4318
        %v4656 = vunpack.c.h.bf16 %v4318
        %v4657 = vunpack.c.l.bf16 %v4319
        %v4658 = vunpack.c.h.bf16 %v4319
        %v4659 = vunpack.c.l.bf16 %v4320
        %v4660 = vunpack.c.h.bf16 %v4320
        %v4661 = vunpack.c.l.bf16 %v4321
        %v4662 = vunpack.c.h.bf16 %v4321
        %v4663 = vunpack.c.l.bf16 %v4322
        %v4664 = vunpack.c.h.bf16 %v4322
        %v4665 = vunpack.c.l.bf16 %v4323
        %v4666 = vunpack.c.h.bf16 %v4323
        %v4667 = vunpack.c.l.bf16 %v4324
        %v4668 = vunpack.c.h.bf16 %v4324
        %v4669 = vunpack.c.l.bf16 %v4325
        %v4670 = vunpack.c.h.bf16 %v4325
        %v4671 = vunpack.c.l.bf16 %v4326
        %v4672 = vunpack.c.h.bf16 %v4326
        %v4673 = vunpack.c.l.bf16 %v4327
        %v4674 = vunpack.c.h.bf16 %v4327
        %v4675 = vunpack.c.l.bf16 %v4328
        %v4676 = vunpack.c.h.bf16 %v4328
        %v4677 = vunpack.c.l.bf16 %v4329
        %v4678 = vunpack.c.h.bf16 %v4329
        %v4679 = vunpack.c.l.bf16 %v4330
        %v4680 = vunpack.c.h.bf16 %v4330
        %v4681 = vunpack.c.l.bf16 %v4331
        %v4682 = vunpack.c.h.bf16 %v4331
        %v4683 = vunpack.c.l.bf16 %v4332
        %v4684 = vunpack.c.h.bf16 %v4332
        %v4685 = vunpack.c.l.bf16 %v4333
        %v4686 = vunpack.c.h.bf16 %v4333
        %v4687 = vld [vmem:[%s345] sm:$0xff]
        %v4688 = vld [vmem:[%s345 + $0x8] sm:$0xff]
        %v4689 = vld [vmem:[%s345 + $0x10] sm:$0xff]
        %v4690 = vld [vmem:[%s345 + $0x18] sm:$0xff]
        %v4691 = vld [vmem:[%s345 + $0x20] sm:$0xff]
        %v4692 = vld [vmem:[%s345 + $0x28] sm:$0xff]
        %v4693 = vld [vmem:[%s345 + $0x30] sm:$0xff]
        %v4694 = vld [vmem:[%s345 + $0x38] sm:$0xff]
        %v4695 = vld [vmem:[%s345 + $0x40] sm:$0xff]
        %v4696 = vld [vmem:[%s345 + $0x48] sm:$0xff]
        %v4697 = vld [vmem:[%s345 + $0x50] sm:$0xff]
        %v4698 = vld [vmem:[%s345 + $0x58] sm:$0xff]
        %v4699 = vld [vmem:[%s345 + $0x60] sm:$0xff]
        %v4700 = vld [vmem:[%s345 + $0x68] sm:$0xff]
        %v4701 = vld [vmem:[%s345 + $0x70] sm:$0xff]
        %v4702 = vld [vmem:[%s345 + $0x78] sm:$0xff]
        %v4703 = vld [vmem:[%s345 + $0x80] sm:$0xff]
        %v4704 = vld [vmem:[%s345 + $0x88] sm:$0xff]
        %v4705 = vld [vmem:[%s345 + $0x90] sm:$0xff]
        %v4706 = vld [vmem:[%s345 + $0x98] sm:$0xff]
        %v4707 = vld [vmem:[%s345 + $0xa0] sm:$0xff]
        %v4708 = vld [vmem:[%s345 + $0xa8] sm:$0xff]
        %v4709 = vld [vmem:[%s345 + $0xb0] sm:$0xff]
        %v4710 = vld [vmem:[%s345 + $0xb8] sm:$0xff]
        %v4711 = vld [vmem:[%s345 + $0xc0] sm:$0xff]
        %v4712 = vld [vmem:[%s345 + $0xc8] sm:$0xff]
        %v4713 = vld [vmem:[%s345 + $0xd0] sm:$0xff]
        %v4714 = vld [vmem:[%s345 + $0xd8] sm:$0xff]
        %v4715 = vld [vmem:[%s345 + $0xe0] sm:$0xff]
        %v4716 = vld [vmem:[%s345 + $0xe8] sm:$0xff]
        %v4717 = vld [vmem:[%s345 + $0xf0] sm:$0xff]
        %v4718 = vld [vmem:[%s345 + $0xf8] sm:$0xff]
        %v4719 = vld [vmem:[%s345 + $0x100] sm:$0xff]
        %v4720 = vld [vmem:[%s345 + $0x108] sm:$0xff]
        %v4721 = vld [vmem:[%s345 + $0x110] sm:$0xff]
        %v4722 = vld [vmem:[%s345 + $0x118] sm:$0xff]
        %v4723 = vld [vmem:[%s345 + $0x120] sm:$0xff]
        %v4724 = vld [vmem:[%s345 + $0x128] sm:$0xff]
        %v4725 = vld [vmem:[%s345 + $0x130] sm:$0xff]
        %v4726 = vld [vmem:[%s345 + $0x138] sm:$0xff]
        %v4727 = vld [vmem:[%s345 + $0x140] sm:$0xff]
        %v4728 = vld [vmem:[%s345 + $0x148] sm:$0xff]
        %v4729 = vld [vmem:[%s345 + $0x150] sm:$0xff]
        %v4730 = vld [vmem:[%s345 + $0x158] sm:$0xff]
        %v4731 = vld [vmem:[%s345 + $0x160] sm:$0xff]
        %v4732 = vld [vmem:[%s345 + $0x168] sm:$0xff]
        %v4733 = vld [vmem:[%s345 + $0x170] sm:$0xff]
        %v4734 = vld [vmem:[%s345 + $0x178] sm:$0xff]
        %v4735 = vld [vmem:[%s345 + $0x180] sm:$0xff]
        %v4736 = vld [vmem:[%s345 + $0x188] sm:$0xff]
        %v4737 = vld [vmem:[%s345 + $0x190] sm:$0xff]
        %v4738 = vld [vmem:[%s345 + $0x198] sm:$0xff]
        %v4739 = vld [vmem:[%s345 + $0x1a0] sm:$0xff]
        %v4740 = vld [vmem:[%s345 + $0x1a8] sm:$0xff]
        %v4741 = vld [vmem:[%s345 + $0x1b0] sm:$0xff]
        %v4742 = vld [vmem:[%s345 + $0x1b8] sm:$0xff]
        %v4743 = vld [vmem:[%s345 + $0x1c0] sm:$0xff]
        %v4744 = vld [vmem:[%s345 + $0x1c8] sm:$0xff]
        %v4745 = vld [vmem:[%s345 + $0x1d0] sm:$0xff]
        %v4746 = vld [vmem:[%s345 + $0x1d8] sm:$0xff]
        %v4747 = vld [vmem:[%s345 + $0x1e0] sm:$0xff]
        %v4748 = vld [vmem:[%s345 + $0x1e8] sm:$0xff]
        %v4749 = vld [vmem:[%s345 + $0x1f0] sm:$0xff]
        %v4750 = vld [vmem:[%s345 + $0x1f8] sm:$0xff]
        %4752 = vset.pattern.permute.xlu0 0
        %4753 = vperm.xlu0 %4752, %v4687
        %v4754 = vpop.permute.xlu0 %4753
        %4757 = vset.pattern.permute.xlu0 0
        %4758 = vperm.xlu0 %4757, %v4688
        %v4759 = vpop.permute.xlu0 %4758
        %4762 = vset.pattern.permute.xlu0 0
        %4763 = vperm.xlu0 %4762, %v4689
        %v4764 = vpop.permute.xlu0 %4763
        %4767 = vset.pattern.permute.xlu0 0
        %4768 = vperm.xlu0 %4767, %v4690
        %v4769 = vpop.permute.xlu0 %4768
        %4772 = vset.pattern.permute.xlu0 0
        %4773 = vperm.xlu0 %4772, %v4691
        %v4774 = vpop.permute.xlu0 %4773
        %4777 = vset.pattern.permute.xlu0 0
        %4778 = vperm.xlu0 %4777, %v4692
        %v4779 = vpop.permute.xlu0 %4778
        %4782 = vset.pattern.permute.xlu0 0
        %4783 = vperm.xlu0 %4782, %v4693
        %v4784 = vpop.permute.xlu0 %4783
        %4787 = vset.pattern.permute.xlu0 0
        %4788 = vperm.xlu0 %4787, %v4694
        %v4789 = vpop.permute.xlu0 %4788
        %4792 = vset.pattern.permute.xlu0 0
        %4793 = vperm.xlu0 %4792, %v4695
        %v4794 = vpop.permute.xlu0 %4793
        %4797 = vset.pattern.permute.xlu0 0
        %4798 = vperm.xlu0 %4797, %v4696
        %v4799 = vpop.permute.xlu0 %4798
        %4802 = vset.pattern.permute.xlu0 0
        %4803 = vperm.xlu0 %4802, %v4697
        %v4804 = vpop.permute.xlu0 %4803
        %4807 = vset.pattern.permute.xlu0 0
        %4808 = vperm.xlu0 %4807, %v4698
        %v4809 = vpop.permute.xlu0 %4808
        %4812 = vset.pattern.permute.xlu0 0
        %4813 = vperm.xlu0 %4812, %v4699
        %v4814 = vpop.permute.xlu0 %4813
        %4817 = vset.pattern.permute.xlu0 0
        %4818 = vperm.xlu0 %4817, %v4700
        %v4819 = vpop.permute.xlu0 %4818
        %4822 = vset.pattern.permute.xlu0 0
        %4823 = vperm.xlu0 %4822, %v4701
        %v4824 = vpop.permute.xlu0 %4823
        %4827 = vset.pattern.permute.xlu0 0
        %4828 = vperm.xlu0 %4827, %v4702
        %v4829 = vpop.permute.xlu0 %4828
        %4832 = vset.pattern.permute.xlu0 0
        %4833 = vperm.xlu0 %4832, %v4703
        %v4834 = vpop.permute.xlu0 %4833
        %4837 = vset.pattern.permute.xlu0 0
        %4838 = vperm.xlu0 %4837, %v4704
        %v4839 = vpop.permute.xlu0 %4838
        %4842 = vset.pattern.permute.xlu0 0
        %4843 = vperm.xlu0 %4842, %v4705
        %v4844 = vpop.permute.xlu0 %4843
        %4847 = vset.pattern.permute.xlu0 0
        %4848 = vperm.xlu0 %4847, %v4706
        %v4849 = vpop.permute.xlu0 %4848
        %4852 = vset.pattern.permute.xlu0 0
        %4853 = vperm.xlu0 %4852, %v4707
        %v4854 = vpop.permute.xlu0 %4853
        %4857 = vset.pattern.permute.xlu0 0
        %4858 = vperm.xlu0 %4857, %v4708
        %v4859 = vpop.permute.xlu0 %4858
        %4862 = vset.pattern.permute.xlu0 0
        %4863 = vperm.xlu0 %4862, %v4709
        %v4864 = vpop.permute.xlu0 %4863
        %4867 = vset.pattern.permute.xlu0 0
        %4868 = vperm.xlu0 %4867, %v4710
        %v4869 = vpop.permute.xlu0 %4868
        %4872 = vset.pattern.permute.xlu0 0
        %4873 = vperm.xlu0 %4872, %v4711
        %v4874 = vpop.permute.xlu0 %4873
        %4877 = vset.pattern.permute.xlu0 0
        %4878 = vperm.xlu0 %4877, %v4712
        %v4879 = vpop.permute.xlu0 %4878
        %4882 = vset.pattern.permute.xlu0 0
        %4883 = vperm.xlu0 %4882, %v4713
        %v4884 = vpop.permute.xlu0 %4883
        %4887 = vset.pattern.permute.xlu0 0
        %4888 = vperm.xlu0 %4887, %v4714
        %v4889 = vpop.permute.xlu0 %4888
        %4892 = vset.pattern.permute.xlu0 0
        %4893 = vperm.xlu0 %4892, %v4715
        %v4894 = vpop.permute.xlu0 %4893
        %4897 = vset.pattern.permute.xlu0 0
        %4898 = vperm.xlu0 %4897, %v4716
        %v4899 = vpop.permute.xlu0 %4898
        %4902 = vset.pattern.permute.xlu0 0
        %4903 = vperm.xlu0 %4902, %v4717
        %v4904 = vpop.permute.xlu0 %4903
        %4907 = vset.pattern.permute.xlu0 0
        %4908 = vperm.xlu0 %4907, %v4718
        %v4909 = vpop.permute.xlu0 %4908
        %4912 = vset.pattern.permute.xlu0 0
        %4913 = vperm.xlu0 %4912, %v4719
        %v4914 = vpop.permute.xlu0 %4913
        %4917 = vset.pattern.permute.xlu0 0
        %4918 = vperm.xlu0 %4917, %v4720
        %v4919 = vpop.permute.xlu0 %4918
        %4922 = vset.pattern.permute.xlu0 0
        %4923 = vperm.xlu0 %4922, %v4721
        %v4924 = vpop.permute.xlu0 %4923
        %4927 = vset.pattern.permute.xlu0 0
        %4928 = vperm.xlu0 %4927, %v4722
        %v4929 = vpop.permute.xlu0 %4928
        %4932 = vset.pattern.permute.xlu0 0
        %4933 = vperm.xlu0 %4932, %v4723
        %v4934 = vpop.permute.xlu0 %4933
        %4937 = vset.pattern.permute.xlu0 0
        %4938 = vperm.xlu0 %4937, %v4724
        %v4939 = vpop.permute.xlu0 %4938
        %4942 = vset.pattern.permute.xlu0 0
        %4943 = vperm.xlu0 %4942, %v4725
        %v4944 = vpop.permute.xlu0 %4943
        %4947 = vset.pattern.permute.xlu0 0
        %4948 = vperm.xlu0 %4947, %v4726
        %v4949 = vpop.permute.xlu0 %4948
        %4952 = vset.pattern.permute.xlu0 0
        %4953 = vperm.xlu0 %4952, %v4727
        %v4954 = vpop.permute.xlu0 %4953
        %4957 = vset.pattern.permute.xlu0 0
        %4958 = vperm.xlu0 %4957, %v4728
        %v4959 = vpop.permute.xlu0 %4958
        %4962 = vset.pattern.permute.xlu0 0
        %4963 = vperm.xlu0 %4962, %v4729
        %v4964 = vpop.permute.xlu0 %4963
        %4967 = vset.pattern.permute.xlu0 0
        %4968 = vperm.xlu0 %4967, %v4730
        %v4969 = vpop.permute.xlu0 %4968
        %4972 = vset.pattern.permute.xlu0 0
        %4973 = vperm.xlu0 %4972, %v4731
        %v4974 = vpop.permute.xlu0 %4973
        %4977 = vset.pattern.permute.xlu0 0
        %4978 = vperm.xlu0 %4977, %v4732
        %v4979 = vpop.permute.xlu0 %4978
        %4982 = vset.pattern.permute.xlu0 0
        %4983 = vperm.xlu0 %4982, %v4733
        %v4984 = vpop.permute.xlu0 %4983
        %4987 = vset.pattern.permute.xlu0 0
        %4988 = vperm.xlu0 %4987, %v4734
        %v4989 = vpop.permute.xlu0 %4988
        %4992 = vset.pattern.permute.xlu0 0
        %4993 = vperm.xlu0 %4992, %v4735
        %v4994 = vpop.permute.xlu0 %4993
        %4997 = vset.pattern.permute.xlu0 0
        %4998 = vperm.xlu0 %4997, %v4736
        %v4999 = vpop.permute.xlu0 %4998
        %5002 = vset.pattern.permute.xlu0 0
        %5003 = vperm.xlu0 %5002, %v4737
        %v5004 = vpop.permute.xlu0 %5003
        %5007 = vset.pattern.permute.xlu0 0
        %5008 = vperm.xlu0 %5007, %v4738
        %v5009 = vpop.permute.xlu0 %5008
        %5012 = vset.pattern.permute.xlu0 0
        %5013 = vperm.xlu0 %5012, %v4739
        %v5014 = vpop.permute.xlu0 %5013
        %5017 = vset.pattern.permute.xlu0 0
        %5018 = vperm.xlu0 %5017, %v4740
        %v5019 = vpop.permute.xlu0 %5018
        %5022 = vset.pattern.permute.xlu0 0
        %5023 = vperm.xlu0 %5022, %v4741
        %v5024 = vpop.permute.xlu0 %5023
        %5027 = vset.pattern.permute.xlu0 0
        %5028 = vperm.xlu0 %5027, %v4742
        %v5029 = vpop.permute.xlu0 %5028
        %5032 = vset.pattern.permute.xlu0 0
        %5033 = vperm.xlu0 %5032, %v4743
        %v5034 = vpop.permute.xlu0 %5033
        %5037 = vset.pattern.permute.xlu0 0
        %5038 = vperm.xlu0 %5037, %v4744
        %v5039 = vpop.permute.xlu0 %5038
        %5042 = vset.pattern.permute.xlu0 0
        %5043 = vperm.xlu0 %5042, %v4745
        %v5044 = vpop.permute.xlu0 %5043
        %5047 = vset.pattern.permute.xlu0 0
        %5048 = vperm.xlu0 %5047, %v4746
        %v5049 = vpop.permute.xlu0 %5048
        %5052 = vset.pattern.permute.xlu0 0
        %5053 = vperm.xlu0 %5052, %v4747
        %v5054 = vpop.permute.xlu0 %5053
        %5057 = vset.pattern.permute.xlu0 0
        %5058 = vperm.xlu0 %5057, %v4748
        %v5059 = vpop.permute.xlu0 %5058
        %5062 = vset.pattern.permute.xlu0 0
        %5063 = vperm.xlu0 %5062, %v4749
        %v5064 = vpop.permute.xlu0 %5063
        %5067 = vset.pattern.permute.xlu0 0
        %5068 = vperm.xlu0 %5067, %v4750
        %v5069 = vpop.permute.xlu0 %5068
        %v5071 = vmul.f32 %v4623, %v4754
        %v5072 = vmul.f32 %v4624, %v4759
        %v5073 = vmul.f32 %v4625, %v4764
        %v5074 = vmul.f32 %v4626, %v4769
        %v5075 = vmul.f32 %v4627, %v4774
        %v5076 = vmul.f32 %v4628, %v4779
        %v5077 = vmul.f32 %v4629, %v4784
        %v5078 = vmul.f32 %v4630, %v4789
        %v5079 = vmul.f32 %v4631, %v4794
        %v5080 = vmul.f32 %v4632, %v4799
        %v5081 = vmul.f32 %v4633, %v4804
        %v5082 = vmul.f32 %v4634, %v4809
        %v5083 = vmul.f32 %v4635, %v4814
        %v5084 = vmul.f32 %v4636, %v4819
        %v5085 = vmul.f32 %v4637, %v4824
        %v5086 = vmul.f32 %v4638, %v4829
        %v5087 = vmul.f32 %v4639, %v4834
        %v5088 = vmul.f32 %v4640, %v4839
        %v5089 = vmul.f32 %v4641, %v4844
        %v5090 = vmul.f32 %v4642, %v4849
        %v5091 = vmul.f32 %v4643, %v4854
        %v5092 = vmul.f32 %v4644, %v4859
        %v5093 = vmul.f32 %v4645, %v4864
        %v5094 = vmul.f32 %v4646, %v4869
        %v5095 = vmul.f32 %v4647, %v4874
        %v5096 = vmul.f32 %v4648, %v4879
        %v5097 = vmul.f32 %v4649, %v4884
        %v5098 = vmul.f32 %v4650, %v4889
        %v5099 = vmul.f32 %v4651, %v4894
        %v5100 = vmul.f32 %v4652, %v4899
        %v5101 = vmul.f32 %v4653, %v4904
        %v5102 = vmul.f32 %v4654, %v4909
        %v5103 = vmul.f32 %v4655, %v4914
        %v5104 = vmul.f32 %v4656, %v4919
        %v5105 = vmul.f32 %v4657, %v4924
        %v5106 = vmul.f32 %v4658, %v4929
        %v5107 = vmul.f32 %v4659, %v4934
        %v5108 = vmul.f32 %v4660, %v4939
        %v5109 = vmul.f32 %v4661, %v4944
        %v5110 = vmul.f32 %v4662, %v4949
        %v5111 = vmul.f32 %v4663, %v4954
        %v5112 = vmul.f32 %v4664, %v4959
        %v5113 = vmul.f32 %v4665, %v4964
        %v5114 = vmul.f32 %v4666, %v4969
        %v5115 = vmul.f32 %v4667, %v4974
        %v5116 = vmul.f32 %v4668, %v4979
        %v5117 = vmul.f32 %v4669, %v4984
        %v5118 = vmul.f32 %v4670, %v4989
        %v5119 = vmul.f32 %v4671, %v4994
        %v5120 = vmul.f32 %v4672, %v4999
        %v5121 = vmul.f32 %v4673, %v5004
        %v5122 = vmul.f32 %v4674, %v5009
        %v5123 = vmul.f32 %v4675, %v5014
        %v5124 = vmul.f32 %v4676, %v5019
        %v5125 = vmul.f32 %v4677, %v5024
        %v5126 = vmul.f32 %v4678, %v5029
        %v5127 = vmul.f32 %v4679, %v5034
        %v5128 = vmul.f32 %v4680, %v5039
        %v5129 = vmul.f32 %v4681, %v5044
        %v5130 = vmul.f32 %v4682, %v5049
        %v5131 = vmul.f32 %v4683, %v5054
        %v5132 = vmul.f32 %v4684, %v5059
        %v5133 = vmul.f32 %v4685, %v5064
        %v5134 = vmul.f32 %v4686, %v5069
        %v5135 = vld [vmem:[%s317] sm:$0x1]
        %v5136 = vsel %vm492, %v5071, 0.0
        %v5137 = vsel %vm492, %v5072, 0.0
        %v5138 = vadd.f32 %v5136, %v5137
        %v5139 = vsel %vm492, %v5073, 0.0
        %v5140 = vadd.f32 %v5138, %v5139
        %v5141 = vsel %vm492, %v5074, 0.0
        %v5142 = vadd.f32 %v5140, %v5141
        %v5143 = vsel %vm492, %v5075, 0.0
        %v5144 = vadd.f32 %v5142, %v5143
        %v5145 = vsel %vm492, %v5076, 0.0
        %v5146 = vadd.f32 %v5144, %v5145
        %v5147 = vsel %vm492, %v5077, 0.0
        %v5148 = vadd.f32 %v5146, %v5147
        %v5149 = vsel %vm492, %v5078, 0.0
        %v5150 = vadd.f32 %v5148, %v5149
        %v5151 = vsel %vm492, %v5079, 0.0
        %v5152 = vadd.f32 %v5150, %v5151
        %v5153 = vsel %vm492, %v5080, 0.0
        %v5154 = vadd.f32 %v5152, %v5153
        %v5155 = vsel %vm492, %v5081, 0.0
        %v5156 = vadd.f32 %v5154, %v5155
        %v5157 = vsel %vm492, %v5082, 0.0
        %v5158 = vadd.f32 %v5156, %v5157
        %v5159 = vsel %vm492, %v5083, 0.0
        %v5160 = vadd.f32 %v5158, %v5159
        %v5161 = vsel %vm492, %v5084, 0.0
        %v5162 = vadd.f32 %v5160, %v5161
        %v5163 = vsel %vm492, %v5085, 0.0
        %v5164 = vadd.f32 %v5162, %v5163
        %v5165 = vsel %vm492, %v5086, 0.0
        %v5166 = vadd.f32 %v5164, %v5165
        %v5167 = vsel %vm492, %v5087, 0.0
        %v5168 = vadd.f32 %v5166, %v5167
        %v5169 = vsel %vm492, %v5088, 0.0
        %v5170 = vadd.f32 %v5168, %v5169
        %v5171 = vsel %vm492, %v5089, 0.0
        %v5172 = vadd.f32 %v5170, %v5171
        %v5173 = vsel %vm492, %v5090, 0.0
        %v5174 = vadd.f32 %v5172, %v5173
        %v5175 = vsel %vm492, %v5091, 0.0
        %v5176 = vadd.f32 %v5174, %v5175
        %v5177 = vsel %vm492, %v5092, 0.0
        %v5178 = vadd.f32 %v5176, %v5177
        %v5179 = vsel %vm492, %v5093, 0.0
        %v5180 = vadd.f32 %v5178, %v5179
        %v5181 = vsel %vm492, %v5094, 0.0
        %v5182 = vadd.f32 %v5180, %v5181
        %v5183 = vsel %vm492, %v5095, 0.0
        %v5184 = vadd.f32 %v5182, %v5183
        %v5185 = vsel %vm492, %v5096, 0.0
        %v5186 = vadd.f32 %v5184, %v5185
        %v5187 = vsel %vm492, %v5097, 0.0
        %v5188 = vadd.f32 %v5186, %v5187
        %v5189 = vsel %vm492, %v5098, 0.0
        %v5190 = vadd.f32 %v5188, %v5189
        %v5191 = vsel %vm492, %v5099, 0.0
        %v5192 = vadd.f32 %v5190, %v5191
        %v5193 = vsel %vm492, %v5100, 0.0
        %v5194 = vadd.f32 %v5192, %v5193
        %v5195 = vsel %vm492, %v5101, 0.0
        %v5196 = vadd.f32 %v5194, %v5195
        %v5197 = vsel %vm492, %v5102, 0.0
        %v5198 = vadd.f32 %v5196, %v5197
        %v5199 = vsel %vm492, %v5103, 0.0
        %v5200 = vadd.f32 %v5198, %v5199
        %v5201 = vsel %vm492, %v5104, 0.0
        %v5202 = vadd.f32 %v5200, %v5201
        %v5203 = vsel %vm492, %v5105, 0.0
        %v5204 = vadd.f32 %v5202, %v5203
        %v5205 = vsel %vm492, %v5106, 0.0
        %v5206 = vadd.f32 %v5204, %v5205
        %v5207 = vsel %vm492, %v5107, 0.0
        %v5208 = vadd.f32 %v5206, %v5207
        %v5209 = vsel %vm492, %v5108, 0.0
        %v5210 = vadd.f32 %v5208, %v5209
        %v5211 = vsel %vm492, %v5109, 0.0
        %v5212 = vadd.f32 %v5210, %v5211
        %v5213 = vsel %vm492, %v5110, 0.0
        %v5214 = vadd.f32 %v5212, %v5213
        %v5215 = vsel %vm492, %v5111, 0.0
        %v5216 = vadd.f32 %v5214, %v5215
        %v5217 = vsel %vm492, %v5112, 0.0
        %v5218 = vadd.f32 %v5216, %v5217
        %v5219 = vsel %vm492, %v5113, 0.0
        %v5220 = vadd.f32 %v5218, %v5219
        %v5221 = vsel %vm492, %v5114, 0.0
        %v5222 = vadd.f32 %v5220, %v5221
        %v5223 = vsel %vm492, %v5115, 0.0
        %v5224 = vadd.f32 %v5222, %v5223
        %v5225 = vsel %vm492, %v5116, 0.0
        %v5226 = vadd.f32 %v5224, %v5225
        %v5227 = vsel %vm492, %v5117, 0.0
        %v5228 = vadd.f32 %v5226, %v5227
        %v5229 = vsel %vm492, %v5118, 0.0
        %v5230 = vadd.f32 %v5228, %v5229
        %v5231 = vsel %vm492, %v5119, 0.0
        %v5232 = vadd.f32 %v5230, %v5231
        %v5233 = vsel %vm492, %v5120, 0.0
        %v5234 = vadd.f32 %v5232, %v5233
        %v5235 = vsel %vm492, %v5121, 0.0
        %v5236 = vadd.f32 %v5234, %v5235
        %v5237 = vsel %vm492, %v5122, 0.0
        %v5238 = vadd.f32 %v5236, %v5237
        %v5239 = vsel %vm492, %v5123, 0.0
        %v5240 = vadd.f32 %v5238, %v5239
        %v5241 = vsel %vm492, %v5124, 0.0
        %v5242 = vadd.f32 %v5240, %v5241
        %v5243 = vsel %vm492, %v5125, 0.0
        %v5244 = vadd.f32 %v5242, %v5243
        %v5245 = vsel %vm492, %v5126, 0.0
        %v5246 = vadd.f32 %v5244, %v5245
        %v5247 = vsel %vm492, %v5127, 0.0
        %v5248 = vadd.f32 %v5246, %v5247
        %v5249 = vsel %vm492, %v5128, 0.0
        %v5250 = vadd.f32 %v5248, %v5249
        %v5251 = vsel %vm492, %v5129, 0.0
        %v5252 = vadd.f32 %v5250, %v5251
        %v5253 = vsel %vm492, %v5130, 0.0
        %v5254 = vadd.f32 %v5252, %v5253
        %v5255 = vsel %vm492, %v5131, 0.0
        %v5256 = vadd.f32 %v5254, %v5255
        %v5257 = vsel %vm492, %v5132, 0.0
        %v5258 = vadd.f32 %v5256, %v5257
        %v5259 = vsel %vm492, %v5133, 0.0
        %v5260 = vadd.f32 %v5258, %v5259
        %v5261 = vsel %vm492, %v5134, 0.0
        %v5262 = vadd.f32 %v5260, %v5261
        %v5263 = vrot.slane %v5262, 4
        %v5264 = vadd.f32 %v5262, %v5263
        %v5265 = vrot.slane %v5264, 2
        %v5266 = vadd.f32 %v5264, %v5265
        %v5267 = vrot.slane %v5266, 1
        %v5268 = vadd.f32 %v5266, %v5267
        %v5269 = vadd.f32 %v5135, %v5268
        %vm5270 = vcmask 57344
        %5271 = vst.msk [vmem:[%s317] sm:$0x1] %vm5270, %v5269
        %v5272 = vld [vmem:[%s323] sm:$0x1]
        %v5273 = vmul.f32 %v5071, %v4623
        %v5274 = vmul.f32 %v5072, %v4624
        %v5275 = vmul.f32 %v5073, %v4625
        %v5276 = vmul.f32 %v5074, %v4626
        %v5277 = vmul.f32 %v5075, %v4627
        %v5278 = vmul.f32 %v5076, %v4628
        %v5279 = vmul.f32 %v5077, %v4629
        %v5280 = vmul.f32 %v5078, %v4630
        %v5281 = vmul.f32 %v5079, %v4631
        %v5282 = vmul.f32 %v5080, %v4632
        %v5283 = vmul.f32 %v5081, %v4633
        %v5284 = vmul.f32 %v5082, %v4634
        %v5285 = vmul.f32 %v5083, %v4635
        %v5286 = vmul.f32 %v5084, %v4636
        %v5287 = vmul.f32 %v5085, %v4637
        %v5288 = vmul.f32 %v5086, %v4638
        %v5289 = vmul.f32 %v5087, %v4639
        %v5290 = vmul.f32 %v5088, %v4640
        %v5291 = vmul.f32 %v5089, %v4641
        %v5292 = vmul.f32 %v5090, %v4642
        %v5293 = vmul.f32 %v5091, %v4643
        %v5294 = vmul.f32 %v5092, %v4644
        %v5295 = vmul.f32 %v5093, %v4645
        %v5296 = vmul.f32 %v5094, %v4646
        %v5297 = vmul.f32 %v5095, %v4647
        %v5298 = vmul.f32 %v5096, %v4648
        %v5299 = vmul.f32 %v5097, %v4649
        %v5300 = vmul.f32 %v5098, %v4650
        %v5301 = vmul.f32 %v5099, %v4651
        %v5302 = vmul.f32 %v5100, %v4652
        %v5303 = vmul.f32 %v5101, %v4653
        %v5304 = vmul.f32 %v5102, %v4654
        %v5305 = vmul.f32 %v5103, %v4655
        %v5306 = vmul.f32 %v5104, %v4656
        %v5307 = vmul.f32 %v5105, %v4657
        %v5308 = vmul.f32 %v5106, %v4658
        %v5309 = vmul.f32 %v5107, %v4659
        %v5310 = vmul.f32 %v5108, %v4660
        %v5311 = vmul.f32 %v5109, %v4661
        %v5312 = vmul.f32 %v5110, %v4662
        %v5313 = vmul.f32 %v5111, %v4663
        %v5314 = vmul.f32 %v5112, %v4664
        %v5315 = vmul.f32 %v5113, %v4665
        %v5316 = vmul.f32 %v5114, %v4666
        %v5317 = vmul.f32 %v5115, %v4667
        %v5318 = vmul.f32 %v5116, %v4668
        %v5319 = vmul.f32 %v5117, %v4669
        %v5320 = vmul.f32 %v5118, %v4670
        %v5321 = vmul.f32 %v5119, %v4671
        %v5322 = vmul.f32 %v5120, %v4672
        %v5323 = vmul.f32 %v5121, %v4673
        %v5324 = vmul.f32 %v5122, %v4674
        %v5325 = vmul.f32 %v5123, %v4675
        %v5326 = vmul.f32 %v5124, %v4676
        %v5327 = vmul.f32 %v5125, %v4677
        %v5328 = vmul.f32 %v5126, %v4678
        %v5329 = vmul.f32 %v5127, %v4679
        %v5330 = vmul.f32 %v5128, %v4680
        %v5331 = vmul.f32 %v5129, %v4681
        %v5332 = vmul.f32 %v5130, %v4682
        %v5333 = vmul.f32 %v5131, %v4683
        %v5334 = vmul.f32 %v5132, %v4684
        %v5335 = vmul.f32 %v5133, %v4685
        %v5336 = vmul.f32 %v5134, %v4686
        %v5337 = vsel %vm492, %v5273, 0.0
        %v5338 = vsel %vm492, %v5274, 0.0
        %v5339 = vadd.f32 %v5337, %v5338
        %v5340 = vsel %vm492, %v5275, 0.0
        %v5341 = vadd.f32 %v5339, %v5340
        %v5342 = vsel %vm492, %v5276, 0.0
        %v5343 = vadd.f32 %v5341, %v5342
        %v5344 = vsel %vm492, %v5277, 0.0
        %v5345 = vadd.f32 %v5343, %v5344
        %v5346 = vsel %vm492, %v5278, 0.0
        %v5347 = vadd.f32 %v5345, %v5346
        %v5348 = vsel %vm492, %v5279, 0.0
        %v5349 = vadd.f32 %v5347, %v5348
        %v5350 = vsel %vm492, %v5280, 0.0
        %v5351 = vadd.f32 %v5349, %v5350
        %v5352 = vsel %vm492, %v5281, 0.0
        %v5353 = vadd.f32 %v5351, %v5352
        %v5354 = vsel %vm492, %v5282, 0.0
        %v5355 = vadd.f32 %v5353, %v5354
        %v5356 = vsel %vm492, %v5283, 0.0
        %v5357 = vadd.f32 %v5355, %v5356
        %v5358 = vsel %vm492, %v5284, 0.0
        %v5359 = vadd.f32 %v5357, %v5358
        %v5360 = vsel %vm492, %v5285, 0.0
        %v5361 = vadd.f32 %v5359, %v5360
        %v5362 = vsel %vm492, %v5286, 0.0
        %v5363 = vadd.f32 %v5361, %v5362
        %v5364 = vsel %vm492, %v5287, 0.0
        %v5365 = vadd.f32 %v5363, %v5364
        %v5366 = vsel %vm492, %v5288, 0.0
        %v5367 = vadd.f32 %v5365, %v5366
        %v5368 = vsel %vm492, %v5289, 0.0
        %v5369 = vadd.f32 %v5367, %v5368
        %v5370 = vsel %vm492, %v5290, 0.0
        %v5371 = vadd.f32 %v5369, %v5370
        %v5372 = vsel %vm492, %v5291, 0.0
        %v5373 = vadd.f32 %v5371, %v5372
        %v5374 = vsel %vm492, %v5292, 0.0
        %v5375 = vadd.f32 %v5373, %v5374
        %v5376 = vsel %vm492, %v5293, 0.0
        %v5377 = vadd.f32 %v5375, %v5376
        %v5378 = vsel %vm492, %v5294, 0.0
        %v5379 = vadd.f32 %v5377, %v5378
        %v5380 = vsel %vm492, %v5295, 0.0
        %v5381 = vadd.f32 %v5379, %v5380
        %v5382 = vsel %vm492, %v5296, 0.0
        %v5383 = vadd.f32 %v5381, %v5382
        %v5384 = vsel %vm492, %v5297, 0.0
        %v5385 = vadd.f32 %v5383, %v5384
        %v5386 = vsel %vm492, %v5298, 0.0
        %v5387 = vadd.f32 %v5385, %v5386
        %v5388 = vsel %vm492, %v5299, 0.0
        %v5389 = vadd.f32 %v5387, %v5388
        %v5390 = vsel %vm492, %v5300, 0.0
        %v5391 = vadd.f32 %v5389, %v5390
        %v5392 = vsel %vm492, %v5301, 0.0
        %v5393 = vadd.f32 %v5391, %v5392
        %v5394 = vsel %vm492, %v5302, 0.0
        %v5395 = vadd.f32 %v5393, %v5394
        %v5396 = vsel %vm492, %v5303, 0.0
        %v5397 = vadd.f32 %v5395, %v5396
        %v5398 = vsel %vm492, %v5304, 0.0
        %v5399 = vadd.f32 %v5397, %v5398
        %v5400 = vsel %vm492, %v5305, 0.0
        %v5401 = vadd.f32 %v5399, %v5400
        %v5402 = vsel %vm492, %v5306, 0.0
        %v5403 = vadd.f32 %v5401, %v5402
        %v5404 = vsel %vm492, %v5307, 0.0
        %v5405 = vadd.f32 %v5403, %v5404
        %v5406 = vsel %vm492, %v5308, 0.0
        %v5407 = vadd.f32 %v5405, %v5406
        %v5408 = vsel %vm492, %v5309, 0.0
        %v5409 = vadd.f32 %v5407, %v5408
        %v5410 = vsel %vm492, %v5310, 0.0
        %v5411 = vadd.f32 %v5409, %v5410
        %v5412 = vsel %vm492, %v5311, 0.0
        %v5413 = vadd.f32 %v5411, %v5412
        %v5414 = vsel %vm492, %v5312, 0.0
        %v5415 = vadd.f32 %v5413, %v5414
        %v5416 = vsel %vm492, %v5313, 0.0
        %v5417 = vadd.f32 %v5415, %v5416
        %v5418 = vsel %vm492, %v5314, 0.0
        %v5419 = vadd.f32 %v5417, %v5418
        %v5420 = vsel %vm492, %v5315, 0.0
        %v5421 = vadd.f32 %v5419, %v5420
        %v5422 = vsel %vm492, %v5316, 0.0
        %v5423 = vadd.f32 %v5421, %v5422
        %v5424 = vsel %vm492, %v5317, 0.0
        %v5425 = vadd.f32 %v5423, %v5424
        %v5426 = vsel %vm492, %v5318, 0.0
        %v5427 = vadd.f32 %v5425, %v5426
        %v5428 = vsel %vm492, %v5319, 0.0
        %v5429 = vadd.f32 %v5427, %v5428
        %v5430 = vsel %vm492, %v5320, 0.0
        %v5431 = vadd.f32 %v5429, %v5430
        %v5432 = vsel %vm492, %v5321, 0.0
        %v5433 = vadd.f32 %v5431, %v5432
        %v5434 = vsel %vm492, %v5322, 0.0
        %v5435 = vadd.f32 %v5433, %v5434
        %v5436 = vsel %vm492, %v5323, 0.0
        %v5437 = vadd.f32 %v5435, %v5436
        %v5438 = vsel %vm492, %v5324, 0.0
        %v5439 = vadd.f32 %v5437, %v5438
        %v5440 = vsel %vm492, %v5325, 0.0
        %v5441 = vadd.f32 %v5439, %v5440
        %v5442 = vsel %vm492, %v5326, 0.0
        %v5443 = vadd.f32 %v5441, %v5442
        %v5444 = vsel %vm492, %v5327, 0.0
        %v5445 = vadd.f32 %v5443, %v5444
        %v5446 = vsel %vm492, %v5328, 0.0
        %v5447 = vadd.f32 %v5445, %v5446
        %v5448 = vsel %vm492, %v5329, 0.0
        %v5449 = vadd.f32 %v5447, %v5448
        %v5450 = vsel %vm492, %v5330, 0.0
        %v5451 = vadd.f32 %v5449, %v5450
        %v5452 = vsel %vm492, %v5331, 0.0
        %v5453 = vadd.f32 %v5451, %v5452
        %v5454 = vsel %vm492, %v5332, 0.0
        %v5455 = vadd.f32 %v5453, %v5454
        %v5456 = vsel %vm492, %v5333, 0.0
        %v5457 = vadd.f32 %v5455, %v5456
        %v5458 = vsel %vm492, %v5334, 0.0
        %v5459 = vadd.f32 %v5457, %v5458
        %v5460 = vsel %vm492, %v5335, 0.0
        %v5461 = vadd.f32 %v5459, %v5460
        %v5462 = vsel %vm492, %v5336, 0.0
        %v5463 = vadd.f32 %v5461, %v5462
        %v5464 = vrot.slane %v5463, 4
        %v5465 = vadd.f32 %v5463, %v5464
        %v5466 = vrot.slane %v5465, 2
        %v5467 = vadd.f32 %v5465, %v5466
        %v5468 = vrot.slane %v5467, 1
        %v5469 = vadd.f32 %v5467, %v5468
        %v5470 = vadd.f32 %v5272, %v5469
        %5471 = vst.msk [vmem:[%s323] sm:$0x1] %vm5270, %v5470
        %s5472 = sadd.s32 %s28, %s29
        %s5473 = smul.u32 64, %s5472
        %p5474 = scmp.lt.s32.totalorder %s5473, 127
        %s5475 = scalar_select %p5474, %s5473, 127
        %s5476 = smul.addr %s5475, 4
        %s5477 = scalar_lea.vmem %s4, %s5476
        %s5478 = sand.u32 %s177, 1
        %s5479 = scalar_lea.sflag [#allocation5], %s5478
        %s5480 = sand.u32 %s177, 1
        %s5481 = scalar_lea.vmem [#allocation4], %s5480
        %s5482 = sand.u32 %s203, 1
        %s5483 = scalar_lea.sflag [#allocation7], %s5482
        %s5484 = sand.u32 %s203, 1
        %s5485 = scalar_lea.vmem [#allocation6], %s5484
        // Predicated region
        $region41: #{tpu_custom_call.1} parent=35 // pred_check
          %p5486 = pneg %p161
        $region42: #{tpu_custom_call.1} parent=35 // pred_check_branch
          %5488 = sbr.rel (%p5486) target = $region44
        $region43: #{tpu_custom_call.1} parent=35 // pred_region
          %s5489 = sadd.s32 %s28, %s29
          %s5490 = smul.u32 64, %s5489
        $region44: #{tpu_custom_call.1} parent=35 // pred_fallthru
          _
        // Predicated region
        $region45: #{tpu_custom_call.1} parent=35 // pred_check
          %p5491 = pneg %p187
        $region46: #{tpu_custom_call.1} parent=35 // pred_check_branch
          %5493 = sbr.rel (%p5491) target = $region48
        $region47: #{tpu_custom_call.1} parent=35 // pred_region
          %s5495 = ssub.s32 16, 16
          %5496 = vsyncadd %s5479, %s5495
          %s5497 = smul.addr %s28, 16
          %s5498 = scalar_lea.hbm %s5, %s5497
          %s5500 = sshll.u32 %s5481, 4
          %s5501 = int_to_ptr.vmem [resolvable:$true] %s5500
          %5503 = dma.vmem_to_hbm [thread:$0]  %s5501, 16, %s5498, %s5479
        $region48: #{tpu_custom_call.1} parent=35 // pred_fallthru
          _
        // Predicated region
        $region49: #{tpu_custom_call.1} parent=35 // pred_check
          %p5504 = pneg %p213
        $region50: #{tpu_custom_call.1} parent=35 // pred_check_branch
          %5506 = sbr.rel (%p5504) target = $region52
        $region51: #{tpu_custom_call.1} parent=35 // pred_region
          %s5508 = ssub.s32 16, 16
          %5509 = vsyncadd %s5483, %s5508
          %s5510 = smul.addr %s28, 16
          %s5511 = scalar_lea.hbm %s6, %s5510
          %s5513 = sshll.u32 %s5485, 4
          %s5514 = int_to_ptr.vmem [resolvable:$true] %s5513
          %5516 = dma.vmem_to_hbm [thread:$0]  %s5514, 16, %s5511, %s5483
        $region52: #{tpu_custom_call.1} parent=35 // pred_fallthru
          _
      $region36: #{tpu_custom_call.1} parent=5 // pred_fallthru
        _
      %p5517 = scmp.le.s32.totalorder 2, %s19
      // Predicated region
      $region53: #{tpu_custom_call.1} parent=5 // pred_check
        %p5518 = pneg %p5517
      $region54: #{tpu_custom_call.1} parent=5 // pred_check_branch
        %5520 = sbr.rel (%p5518) target = $region56
      $region55: #{tpu_custom_call.1} parent=5 // pred_region
        %s5521 = ssub.s32 %s19, 2
        // Predicated region
        $region57: #{tpu_custom_call.1} parent=55 // pred_check
          %p5522 = pneg %p167
        $region58: #{tpu_custom_call.1} parent=55 // pred_check_branch
          %5524 = sbr.rel (%p5522) target = $region60
        $region59: #{tpu_custom_call.1} parent=55 // pred_region
          %s5525 = sadd.s32 %s30, %s31
          %s5526 = smul.u32 64, %s5525
          %p5527 = scmp.lt.s32.totalorder %s5526, 127
          %s5528 = scalar_select %p5527, %s5526, 127
          %s5529 = smul.addr %s5528, 4
          %s5530 = scalar_lea.vmem %s4, %s5529
        $region60: #{tpu_custom_call.1} parent=55 // pred_fallthru
          _
        // Predicated region
        $region61: #{tpu_custom_call.1} parent=55 // pred_check
          %p5531 = pneg %p193
        $region62: #{tpu_custom_call.1} parent=55 // pred_check_branch
          %5533 = sbr.rel (%p5531) target = $region64
        $region63: #{tpu_custom_call.1} parent=55 // pred_region
          %s5534 = sand.u32 %s178, 1
          %s5535 = scalar_lea.sflag [#allocation5], %s5534
          %s5536 = sand.u32 %s178, 1
          %s5537 = scalar_lea.vmem [#allocation4], %s5536
          %5538 = dma.done %s5535, 16
        $region64: #{tpu_custom_call.1} parent=55 // pred_fallthru
          _
        // Predicated region
        $region65: #{tpu_custom_call.1} parent=55 // pred_check
          %p5539 = pneg %p219
        $region66: #{tpu_custom_call.1} parent=55 // pred_check_branch
          %5541 = sbr.rel (%p5539) target = $region68
        $region67: #{tpu_custom_call.1} parent=55 // pred_region
          %s5542 = sand.u32 %s204, 1
          %s5543 = scalar_lea.sflag [#allocation7], %s5542
          %s5544 = sand.u32 %s204, 1
          %s5545 = scalar_lea.vmem [#allocation6], %s5544
          %5546 = dma.done %s5543, 16
        $region68: #{tpu_custom_call.1} parent=55 // pred_fallthru
          _
      $region56: #{tpu_custom_call.1} parent=5 // pred_fallthru
        _
    $region6: #{tpu_custom_call.1} parent=1 // loop_footer
      %s23 = sadd.s32 1, %s19
    $region7: #{tpu_custom_call.1} parent=1 // loop_footer_branch
      %18 = sbr.rel target = $region3
    $region8: #{tpu_custom_call.1} parent=1 // loop_exit
      _
    %5547 = vsyncpa [#allocation5], 1
    %s5548 = scalar_lea.sflag [#allocation5], 1
    %5549 = vsyncpa %s5548, 1
    %5550 = vsyncpa [#allocation7], 1
    %s5551 = scalar_lea.sflag [#allocation7], 1
    %5552 = vsyncpa %s5551, 1

</llo_original>
